<compile_context>
chip_gen: v6e
topology: v6e:2x2x1
jax: 0.10.0
libtpu: 0.0.40
codegen_flags: <defaults>
</compile_context>

<pallas_src>
import jax
import jax.numpy as jnp
from jax.experimental import pallas as pl
from jax.experimental.pallas import tpu as pltpu


def _round_up(a, b):
    return -(-a // b) * b


def _ae_kernel(x_ref,
               w1_ref, b1_ref,
               w2_ref, b2_ref,
               w3_ref, b3_ref,
               w4_ref, b4_ref,
               w5_ref, b5_ref,
               w6_ref, b6_ref,
               o_ref):
    # x_ref: (tm_r, 128) f32 — 128 consecutive positions per sublane row.
    xg = x_ref[...]
    tm_r = xg.shape[0]

    # conv1: Conv1d(1, 128, 1) — Cin == 1, so it is a broadcast scale + bias.
    # Computed in the grouped layout (tm_r, 128pos, 128ch); w1/b1 are (1, 128)
    # and broadcast along the channel (lane) axis.  MaxPool1d(1) == identity.
    h1g = jnp.maximum(xg[:, :, None] * w1_ref[...] + b1_ref[...], 0.0)
    h = h1g.reshape(tm_r * 128, 128)          # free leading-dim collapse -> (tm, 128)

    def dense_relu(h, w_ref, b_ref):
        # bf16 operands on the MXU, f32 accumulation, f32 bias + ReLU.
        y = jnp.dot(h.astype(jnp.bfloat16), w_ref[...],
                    preferred_element_type=jnp.float32) + b_ref[...]
        return jnp.maximum(y, 0.0)

    h = dense_relu(h, w2_ref, b2_ref)         # (tm, 64)
    h = dense_relu(h, w3_ref, b3_ref)         # (tm, 32)
    h = dense_relu(h, w4_ref, b4_ref)         # (tm, 64)
    h = dense_relu(h, w5_ref, b5_ref)         # (tm, 128)

    # t_conv2: ConvTranspose1d(128, 1, 1) + sigmoid.
    # A 128->1 matmul wastes the MXU: do a VPU multiply + lane (channel)
    # reduction instead.  w6_ref is (1, 128) lane-major, so it broadcasts along
    # the channel axis of the free (tm_r, 128pos, 128ch) view of h.  The result
    # is a lane-dense (tm_r, 128) slab -> full-width stores.
    h3 = h.reshape(tm_r, 128, 128)            # free leading-dim split
    z = jnp.sum(h3 * w6_ref[...], axis=-1) + b6_ref[...]        # (tm_r, 128)
    # sigmoid(z) = 0.5 * tanh(0.5 z) + 0.5 — single EUP transcendental/element.
    o_ref[0] = 0.5 * jnp.tanh(0.5 * z) + 0.5


def conv_autoencoder_forward(x_ncl, params, *, tm=4096):
    """x_ncl: (N, 1, L) float32 (PyTorch NCL layout). Returns (N, 1, L) float32."""
    n, c, length = x_ncl.shape
    assert c == 1
    m = n * length

    # C == 1: NCL and NLC are layout-identical, so no transpose is needed.
    x_flat = x_ncl.astype(jnp.float32).reshape(m)

    # Tile selection: prefer one big tile.  If the problem is larger than tm,
    # keep tm a multiple of 1024 rows so the lane-dense input block has a
    # sublane dim that is a multiple of 8.
    m_ceil = _round_up(m, 128)
    tm = max(1024, (tm // 1024) * 1024)
    if tm >= m_ceil:
        tm = m_ceil                       # single tile covers everything
    m_pad = _round_up(m_ceil, tm)
    num_tiles = m_pad // tm
    tm_r = tm // 128

    if m_pad != m:
        x_flat = jnp.pad(x_flat, (0, m_pad - m))
    x_dense = x_flat.reshape(m_pad // 128, 128)   # lane-dense input slab

    (w1, b1, w2, b2, w3, b3, w4, b4, w5, b5, w6, b6) = params
    # bf16 operands for the MXU matmuls (layers 2-5); f32 accumulation in-kernel.
    w2b, w3b, w4b, w5b = (w.astype(jnp.bfloat16) for w in (w2, w3, w4, w5))
    # Lane-major last-layer weight: (128, 1) -> (1, 128).
    w6_t = w6.reshape(1, 128)

    def rep_spec(arr):
        return pl.BlockSpec(arr.shape, lambda i: (0, 0))

    param_bytes = int(sum(int(p.size) * 4 for p in params))
    cost = pl.CostEstimate(
        flops=2 * 20736 * m_pad,            # per-position MLP flops
        transcendentals=m_pad,              # one tanh per output element
        bytes_accessed=8 * m_pad + param_bytes)

    out_ld = pl.pallas_call(
        _ae_kernel,
        out_shape=jax.ShapeDtypeStruct((num_tiles, tm_r, 128), jnp.float32),
        grid_spec=pltpu.PrefetchScalarGridSpec(
            num_scalar_prefetch=0,
            grid=(num_tiles,),
            in_specs=[
                pl.BlockSpec((tm_r, 128), lambda i: (i, 0)),
                rep_spec(w1), rep_spec(b1),
                rep_spec(w2b), rep_spec(b2),
                rep_spec(w3b), rep_spec(b3),
                rep_spec(w4b), rep_spec(b4),
                rep_spec(w5b), rep_spec(b5),
                rep_spec(w6_t), rep_spec(b6),
            ],
            out_specs=pl.BlockSpec((1, tm_r, 128), lambda i: (i, 0, 0)),
        ),
        compiler_params=pltpu.CompilerParams(
            dimension_semantics=("parallel",)),
        cost_estimate=cost,
    )(x_dense, w1, b1, w2b, b2, w3b, b3, w4b, b4, w5b, b5, w6_t, b6)

    # (num_tiles, tm_r, 128) -> flat positions -> (N, 1, L)
    return out_ld.reshape(m_pad)[:m].reshape(n, 1, length)


def init_params(key):
    """Deterministic init ~ PyTorch default uniform(-1/sqrt(fan_in), +).

    Note: PyTorch's ConvTranspose1d derives fan_in from out_channels; here we use
    in_channels for all layers (init-only difference, forward math unaffected).
    """
    dims = [1, 128, 64, 32, 64, 128, 1]
    params = []
    for idx in range(6):
        cin, cout = dims[idx], dims[idx + 1]
        key, kw, kb = jax.random.split(key, 3)
        bound = 1.0 / jnp.sqrt(jnp.float32(cin))
        # Stored as (C_in, C_out) so the math is rows @ W + b.
        w = jax.random.uniform(kw, (cin, cout), jnp.float32, -bound, bound)
        b = jax.random.uniform(kb, (1, cout), jnp.float32, -bound, bound)
        params += [w, b]
    return tuple(params)


def reference_forward(x_ncl, params):
    """Pure-JAX f32 reference matching the PyTorch module's forward."""
    (w1, b1, w2, b2, w3, b3, w4, b4, w5, b5, w6, b6) = params
    n, _, length = x_ncl.shape
    h = x_ncl.reshape(n * length, 1)
    h = jax.nn.relu(h @ w1 + b1)
    h = jax.nn.relu(h @ w2 + b2)
    h = jax.nn.relu(h @ w3 + b3)
    h = jax.nn.relu(h @ w4 + b4)
    h = jax.nn.relu(h @ w5 + b5)
    h = jax.nn.sigmoid(h @ w6 + b6)
    return h.reshape(n, 1, length)


if __name__ == "__main__":
    key = jax.random.PRNGKey(0)
    key_x, key_p = jax.random.split(key)

    # Small example consistent with Conv1d(1, ...): (batch=4, channels=1, seq=256)
    x = jax.random.uniform(key_x, (4, 1, 256), jnp.float32)
    params = init_params(key_p)

    out = conv_autoencoder_forward(x, params)
    out = jax.block_until_ready(out)

    ref = reference_forward(x, params)
    assert out.shape == x.shape == (4, 1, 256)
    max_diff = float(jnp.max(jnp.abs(out - ref)))
    # bf16 matmul operands => loosened tolerance vs the f32 reference.
    assert max_diff < 3e-2, f"mismatch vs reference, max abs diff = {max_diff}"

    print("KERNEL_OK")
</pallas_src>

<mosaic_0001>
module attributes {stable_mosaic.version = 11 : i64} {
  func.func @_ae_kernel(%arg0: i32, %arg1: memref<8x128xf32, #tpu.memory_space<vmem>>, %arg2: memref<1x128xf32, #tpu.memory_space<vmem>>, %arg3: memref<1x128xf32, #tpu.memory_space<vmem>>, %arg4: memref<128x64xbf16, #tpu.memory_space<vmem>>, %arg5: memref<1x64xf32, #tpu.memory_space<vmem>>, %arg6: memref<64x32xbf16, #tpu.memory_space<vmem>>, %arg7: memref<1x32xf32, #tpu.memory_space<vmem>>, %arg8: memref<32x64xbf16, #tpu.memory_space<vmem>>, %arg9: memref<1x64xf32, #tpu.memory_space<vmem>>, %arg10: memref<64x128xbf16, #tpu.memory_space<vmem>>, %arg11: memref<1x128xf32, #tpu.memory_space<vmem>>, %arg12: memref<1x128xf32, #tpu.memory_space<vmem>>, %arg13: memref<1x1xf32, #tpu.memory_space<vmem>>, %arg14: memref<1x8x128xf32, #tpu.memory_space<vmem>>) attributes {dimension_semantics = [#tpu.dimension_semantics<parallel>], iteration_bounds = array<i64: 1>, scalar_prefetch = 0 : i64, scratch_operands = 0 : i64, tpu.core_type = #tpu.core_type<tc>, window_params = [{transform_indices = @transform_0, window_bounds = array<i64: 8, 128>}, {pipeline_mode = #tpu.pipeline_mode<synchronous>, transform_indices = @transform_1, window_bounds = array<i64: 1, 128>}, {pipeline_mode = #tpu.pipeline_mode<synchronous>, transform_indices = @transform_2, window_bounds = array<i64: 1, 128>}, {pipeline_mode = #tpu.pipeline_mode<synchronous>, transform_indices = @transform_3, window_bounds = array<i64: 128, 64>}, {pipeline_mode = #tpu.pipeline_mode<synchronous>, transform_indices = @transform_4, window_bounds = array<i64: 1, 64>}, {pipeline_mode = #tpu.pipeline_mode<synchronous>, transform_indices = @transform_5, window_bounds = array<i64: 64, 32>}, {pipeline_mode = #tpu.pipeline_mode<synchronous>, transform_indices = @transform_6, window_bounds = array<i64: 1, 32>}, {pipeline_mode = #tpu.pipeline_mode<synchronous>, transform_indices = @transform_7, window_bounds = array<i64: 32, 64>}, {pipeline_mode = #tpu.pipeline_mode<synchronous>, transform_indices = @transform_8, window_bounds = array<i64: 1, 64>}, {pipeline_mode = #tpu.pipeline_mode<synchronous>, transform_indices = @transform_9, window_bounds = array<i64: 64, 128>}, {pipeline_mode = #tpu.pipeline_mode<synchronous>, transform_indices = @transform_10, window_bounds = array<i64: 1, 128>}, {pipeline_mode = #tpu.pipeline_mode<synchronous>, transform_indices = @transform_11, window_bounds = array<i64: 1, 128>}, {pipeline_mode = #tpu.pipeline_mode<synchronous>, transform_indices = @transform_12, window_bounds = array<i64: 1, 1>}, {transform_indices = @transform_13, window_bounds = array<i64: 1, 8, 128>}]} {
    %c0 = arith.constant 0 : index
    %c0_0 = arith.constant 0 : index
    %0 = vector.load %arg1[%c0, %c0_0] : memref<8x128xf32, #tpu.memory_space<vmem>>, vector<8x128xf32>
    %1 = vector.shape_cast %0 : vector<8x128xf32> to vector<8x128x1xf32>
    %c0_1 = arith.constant 0 : index
    %c0_2 = arith.constant 0 : index
    %2 = vector.load %arg2[%c0_1, %c0_2] : memref<1x128xf32, #tpu.memory_space<vmem>>, vector<1x128xf32>
    %3 = vector.shape_cast %2 : vector<1x128xf32> to vector<1x1x128xf32>
    %4 = vector.broadcast %1 : vector<8x128x1xf32> to vector<8x128x128xf32>
    %5 = vector.broadcast %3 : vector<1x1x128xf32> to vector<8x128x128xf32>
    %6 = arith.mulf %4, %5 : vector<8x128x128xf32>
    %c0_3 = arith.constant 0 : index
    %c0_4 = arith.constant 0 : index
    %7 = vector.load %arg3[%c0_3, %c0_4] : memref<1x128xf32, #tpu.memory_space<vmem>>, vector<1x128xf32>
    %8 = vector.shape_cast %7 : vector<1x128xf32> to vector<1x1x128xf32>
    %9 = vector.broadcast %8 : vector<1x1x128xf32> to vector<8x128x128xf32>
    %10 = arith.addf %6, %9 : vector<8x128x128xf32>
    %cst = arith.constant 0.000000e+00 : f32
    %11 = vector.broadcast %cst : f32 to vector<8x128x128xf32>
    %12 = arith.maximumf %10, %11 : vector<8x128x128xf32>
    %13 = vector.shape_cast %12 : vector<8x128x128xf32> to vector<1024x128xf32>
    %14 = arith.truncf %13 : vector<1024x128xf32> to vector<1024x128xbf16>
    %c0_5 = arith.constant 0 : index
    %c0_6 = arith.constant 0 : index
    %15 = vector.load %arg4[%c0_5, %c0_6] : memref<128x64xbf16, #tpu.memory_space<vmem>>, vector<128x64xbf16>
    %cst_7 = arith.constant dense<0.000000e+00> : vector<1024x64xf32>
    %16 = tpu.matmul %14, %15, %cst_7 {dimension_numbers = #tpu.dot_dimension_numbers<[1], [0], [0], [1], [0, 0, 1, 1], [], []>} : vector<1024x128xbf16>, vector<128x64xbf16>, vector<1024x64xf32> -> vector<1024x64xf32>
    %c0_8 = arith.constant 0 : index
    %c0_9 = arith.constant 0 : index
    %17 = vector.load %arg5[%c0_8, %c0_9] : memref<1x64xf32, #tpu.memory_space<vmem>>, vector<1x64xf32>
    %18 = vector.broadcast %17 : vector<1x64xf32> to vector<1024x64xf32>
    %19 = arith.addf %16, %18 : vector<1024x64xf32>
    %cst_10 = arith.constant 0.000000e+00 : f32
    %20 = vector.broadcast %cst_10 : f32 to vector<1024x64xf32>
    %21 = arith.maximumf %19, %20 : vector<1024x64xf32>
    %22 = arith.truncf %21 : vector<1024x64xf32> to vector<1024x64xbf16>
    %c0_11 = arith.constant 0 : index
    %c0_12 = arith.constant 0 : index
    %23 = vector.load %arg6[%c0_11, %c0_12] : memref<64x32xbf16, #tpu.memory_space<vmem>>, vector<64x32xbf16>
    %cst_13 = arith.constant dense<0.000000e+00> : vector<1024x32xf32>
    %24 = tpu.matmul %22, %23, %cst_13 {dimension_numbers = #tpu.dot_dimension_numbers<[1], [0], [0], [1], [0, 0, 1, 1], [], []>} : vector<1024x64xbf16>, vector<64x32xbf16>, vector<1024x32xf32> -> vector<1024x32xf32>
    %c0_14 = arith.constant 0 : index
    %c0_15 = arith.constant 0 : index
    %25 = vector.load %arg7[%c0_14, %c0_15] : memref<1x32xf32, #tpu.memory_space<vmem>>, vector<1x32xf32>
    %26 = vector.broadcast %25 : vector<1x32xf32> to vector<1024x32xf32>
    %27 = arith.addf %24, %26 : vector<1024x32xf32>
    %cst_16 = arith.constant 0.000000e+00 : f32
    %28 = vector.broadcast %cst_16 : f32 to vector<1024x32xf32>
    %29 = arith.maximumf %27, %28 : vector<1024x32xf32>
    %30 = arith.truncf %29 : vector<1024x32xf32> to vector<1024x32xbf16>
    %c0_17 = arith.constant 0 : index
    %c0_18 = arith.constant 0 : index
    %31 = vector.load %arg8[%c0_17, %c0_18] : memref<32x64xbf16, #tpu.memory_space<vmem>>, vector<32x64xbf16>
    %cst_19 = arith.constant dense<0.000000e+00> : vector<1024x64xf32>
    %32 = tpu.matmul %30, %31, %cst_19 {dimension_numbers = #tpu.dot_dimension_numbers<[1], [0], [0], [1], [0, 0, 1, 1], [], []>} : vector<1024x32xbf16>, vector<32x64xbf16>, vector<1024x64xf32> -> vector<1024x64xf32>
    %c0_20 = arith.constant 0 : index
    %c0_21 = arith.constant 0 : index
    %33 = vector.load %arg9[%c0_20, %c0_21] : memref<1x64xf32, #tpu.memory_space<vmem>>, vector<1x64xf32>
    %34 = vector.broadcast %33 : vector<1x64xf32> to vector<1024x64xf32>
    %35 = arith.addf %32, %34 : vector<1024x64xf32>
    %cst_22 = arith.constant 0.000000e+00 : f32
    %36 = vector.broadcast %cst_22 : f32 to vector<1024x64xf32>
    %37 = arith.maximumf %35, %36 : vector<1024x64xf32>
    %38 = arith.truncf %37 : vector<1024x64xf32> to vector<1024x64xbf16>
    %c0_23 = arith.constant 0 : index
    %c0_24 = arith.constant 0 : index
    %39 = vector.load %arg10[%c0_23, %c0_24] : memref<64x128xbf16, #tpu.memory_space<vmem>>, vector<64x128xbf16>
    %cst_25 = arith.constant dense<0.000000e+00> : vector<1024x128xf32>
    %40 = tpu.matmul %38, %39, %cst_25 {dimension_numbers = #tpu.dot_dimension_numbers<[1], [0], [0], [1], [0, 0, 1, 1], [], []>} : vector<1024x64xbf16>, vector<64x128xbf16>, vector<1024x128xf32> -> vector<1024x128xf32>
    %c0_26 = arith.constant 0 : index
    %c0_27 = arith.constant 0 : index
    %41 = vector.load %arg11[%c0_26, %c0_27] : memref<1x128xf32, #tpu.memory_space<vmem>>, vector<1x128xf32>
    %42 = vector.broadcast %41 : vector<1x128xf32> to vector<1024x128xf32>
    %43 = arith.addf %40, %42 : vector<1024x128xf32>
    %cst_28 = arith.constant 0.000000e+00 : f32
    %44 = vector.broadcast %cst_28 : f32 to vector<1024x128xf32>
    %45 = arith.maximumf %43, %44 : vector<1024x128xf32>
    %46 = vector.shape_cast %45 : vector<1024x128xf32> to vector<8x128x128xf32>
    %c0_29 = arith.constant 0 : index
    %c0_30 = arith.constant 0 : index
    %47 = vector.load %arg12[%c0_29, %c0_30] : memref<1x128xf32, #tpu.memory_space<vmem>>, vector<1x128xf32>
    %48 = vector.shape_cast %47 : vector<1x128xf32> to vector<1x1x128xf32>
    %49 = vector.broadcast %48 : vector<1x1x128xf32> to vector<8x128x128xf32>
    %50 = arith.mulf %46, %49 : vector<8x128x128xf32>
    %cst_31 = arith.constant dense<0.000000e+00> : vector<8x128xf32>
    %51 = vector.multi_reduction <add>, %50, %cst_31 [2] : vector<8x128x128xf32> to vector<8x128xf32>
    %c0_32 = arith.constant 0 : index
    %c0_33 = arith.constant 0 : index
    %52 = vector.load %arg13[%c0_32, %c0_33] : memref<1x1xf32, #tpu.memory_space<vmem>>, vector<1x1xf32>
    %53 = vector.broadcast %52 : vector<1x1xf32> to vector<8x128xf32>
    %54 = arith.addf %51, %53 : vector<8x128xf32>
    %cst_34 = arith.constant 5.000000e-01 : f32
    %55 = vector.broadcast %cst_34 : f32 to vector<8x128xf32>
    %56 = arith.mulf %55, %54 : vector<8x128xf32>
    %57 = math.tanh %56 : vector<8x128xf32>
    %cst_35 = arith.constant 5.000000e-01 : f32
    %58 = vector.broadcast %cst_35 : f32 to vector<8x128xf32>
    %59 = arith.mulf %58, %57 : vector<8x128xf32>
    %cst_36 = arith.constant 5.000000e-01 : f32
    %60 = vector.broadcast %cst_36 : f32 to vector<8x128xf32>
    %61 = arith.addf %59, %60 : vector<8x128xf32>
    %c0_37 = arith.constant 0 : index
    %c0_38 = arith.constant 0 : index
    %c0_39 = arith.constant 0 : index
    %62 = vector.load %arg14[%c0_37, %c0_38, %c0_39] : memref<1x8x128xf32, #tpu.memory_space<vmem>>, vector<1x8x128xf32>
    %63 = vector.shape_cast %62 : vector<1x8x128xf32> to vector<8x128xf32>
    %64 = vector.shape_cast %61 : vector<8x128xf32> to vector<1x8x128xf32>
    tpu.vector_store %arg14[%c0_37, %c0_38, %c0_39], %64 {strides = array<i32>} : memref<1x8x128xf32, #tpu.memory_space<vmem>>, vector<1x8x128xf32>,
    return
  }
  func.func @transform_0(%arg0: i32) -> (i32, i32) {
    %c0_i32 = arith.constant 0 : i32
    %c0_i32_0 = arith.constant 0 : i32
    return %arg0, %c0_i32 : i32, i32
  }
  func.func @transform_1(%arg0: i32) -> (i32, i32) {
    %c0_i32 = arith.constant 0 : i32
    %c0_i32_0 = arith.constant 0 : i32
    %c0_i32_1 = arith.constant 0 : i32
    return %c0_i32, %c0_i32_0 : i32, i32
  }
  func.func @transform_2(%arg0: i32) -> (i32, i32) {
    %c0_i32 = arith.constant 0 : i32
    %c0_i32_0 = arith.constant 0 : i32
    %c0_i32_1 = arith.constant 0 : i32
    return %c0_i32, %c0_i32_0 : i32, i32
  }
  func.func @transform_3(%arg0: i32) -> (i32, i32) {
    %c0_i32 = arith.constant 0 : i32
    %c0_i32_0 = arith.constant 0 : i32
    %c0_i32_1 = arith.constant 0 : i32
    return %c0_i32, %c0_i32_0 : i32, i32
  }
  func.func @transform_4(%arg0: i32) -> (i32, i32) {
    %c0_i32 = arith.constant 0 : i32
    %c0_i32_0 = arith.constant 0 : i32
    %c0_i32_1 = arith.constant 0 : i32
    return %c0_i32, %c0_i32_0 : i32, i32
  }
  func.func @transform_5(%arg0: i32) -> (i32, i32) {
    %c0_i32 = arith.constant 0 : i32
    %c0_i32_0 = arith.constant 0 : i32
    %c0_i32_1 = arith.constant 0 : i32
    return %c0_i32, %c0_i32_0 : i32, i32
  }
  func.func @transform_6(%arg0: i32) -> (i32, i32) {
    %c0_i32 = arith.constant 0 : i32
    %c0_i32_0 = arith.constant 0 : i32
    %c0_i32_1 = arith.constant 0 : i32
    return %c0_i32, %c0_i32_0 : i32, i32
  }
  func.func @transform_7(%arg0: i32) -> (i32, i32) {
    %c0_i32 = arith.constant 0 : i32
    %c0_i32_0 = arith.constant 0 : i32
    %c0_i32_1 = arith.constant 0 : i32
    return %c0_i32, %c0_i32_0 : i32, i32
  }
  func.func @transform_8(%arg0: i32) -> (i32, i32) {
    %c0_i32 = arith.constant 0 : i32
    %c0_i32_0 = arith.constant 0 : i32
    %c0_i32_1 = arith.constant 0 : i32
    return %c0_i32, %c0_i32_0 : i32, i32
  }
  func.func @transform_9(%arg0: i32) -> (i32, i32) {
    %c0_i32 = arith.constant 0 : i32
    %c0_i32_0 = arith.constant 0 : i32
    %c0_i32_1 = arith.constant 0 : i32
    return %c0_i32, %c0_i32_0 : i32, i32
  }
  func.func @transform_10(%arg0: i32) -> (i32, i32) {
    %c0_i32 = arith.constant 0 : i32
    %c0_i32_0 = arith.constant 0 : i32
    %c0_i32_1 = arith.constant 0 : i32
    return %c0_i32, %c0_i32_0 : i32, i32
  }
  func.func @transform_11(%arg0: i32) -> (i32, i32) {
    %c0_i32 = arith.constant 0 : i32
    %c0_i32_0 = arith.constant 0 : i32
    %c0_i32_1 = arith.constant 0 : i32
    return %c0_i32, %c0_i32_0 : i32, i32
  }
  func.func @transform_12(%arg0: i32) -> (i32, i32) {
    %c0_i32 = arith.constant 0 : i32
    %c0_i32_0 = arith.constant 0 : i32
    %c0_i32_1 = arith.constant 0 : i32
    return %c0_i32, %c0_i32_0 : i32, i32
  }
  func.func @transform_13(%arg0: i32) -> (i32, i32, i32) {
    %c0_i32 = arith.constant 0 : i32
    %c0_i32_0 = arith.constant 0 : i32
    %c0_i32_1 = arith.constant 0 : i32
    return %arg0, %c0_i32, %c0_i32_0 : i32, i32, i32
  }
}

</mosaic_0001>

<llo_original>
// kernel: tpu_custom_call.1
$region0: #{tpu_custom_call.1}
  #allocation0 [shape = 'u32[]', space=smem, size = 0x4, offset = 0x4, fixed_abs, tag = 'smem constant byte address 0x4 - core index']
  #allocation1 [shape = 'u32[144,128]{1,0:T(1,128)}', space=vmem, size = 0x12000, scoped, tag = 'internal scratch']
  #allocation2 [shape = 'f32[1,1]{1,0:T(1,128)S(1)}', space=vmem, size = 0x200, scoped, tag = 'scoped memory for tpu_custom_call.1']
  %s0 = inlined_call_operand.vmem [shape: f32[8,128], index: 0, kind: input, shape index: {}]
  %s1 = inlined_call_operand.vmem [shape: f32[1,128], index: 1, kind: input, shape index: {}]
  %s2 = inlined_call_operand.vmem [shape: f32[1,128], index: 2, kind: input, shape index: {}]
  %s3 = inlined_call_operand.vmem [shape: bf16[128,64], index: 3, kind: input, shape index: {}]
  %s4 = inlined_call_operand.vmem [shape: f32[1,64], index: 4, kind: input, shape index: {}]
  %s5 = inlined_call_operand.vmem [shape: bf16[64,32], index: 5, kind: input, shape index: {}]
  %s6 = inlined_call_operand.vmem [shape: f32[1,32], index: 6, kind: input, shape index: {}]
  %s7 = inlined_call_operand.vmem [shape: bf16[32,64], index: 7, kind: input, shape index: {}]
  %s8 = inlined_call_operand.vmem [shape: f32[1,64], index: 8, kind: input, shape index: {}]
  %s9 = inlined_call_operand.vmem [shape: bf16[64,128], index: 9, kind: input, shape index: {}]
  %s10 = inlined_call_operand.vmem [shape: f32[1,128], index: 10, kind: input, shape index: {}]
  %s11 = inlined_call_operand.vmem [shape: f32[1,128], index: 11, kind: input, shape index: {}]
  %s12 = inlined_call_operand.<no memory space> [shape: f32[1,1], index: 12, kind: input, shape index: {}]
  %s13 = inlined_call_operand.hbm [shape: f32[1,8,128], index: 13, kind: output, shape index: {}]
  %s14 = sld [smem:[#allocation0]]
  $region62: #{tpu_custom_call.1} parent=0
    _
  %s16 = ssub.s32 1, %s14
  %s17 = scalar_select 0, %s16, %s14
  %v18 = vstv %s12
  %19 = vst [vmem:[#allocation2] sm:$0x1] %v18
  $region1: #{tpu_custom_call.1} parent=0
    #allocation3 [shape = 'u8[4096]{0}', space=vmem, size = 0x1000, scoped, tag = 'output window, operand 0, single buffered']
    #allocation4 [shape = 's32[1]{0}', space=sflag, size = 0x4, scoped, tag = 'scoped memory for tpu_custom_call.1']
    %20 = vsyncpa [#allocation4], 0
    // Predicated region
    $region2: #{tpu_custom_call.1} parent=1 // pred_check
      _
    $region3: #{tpu_custom_call.1} parent=1 // pred_check_branch
      %22 = sbr.rel (0) target = $region5
    $region4: #{tpu_custom_call.1} parent=1 // pred_region
      _
    $region5: #{tpu_custom_call.1} parent=1 // pred_fallthru
      _
    // Predicated region
    $region6: #{tpu_custom_call.1} parent=1 // pred_check
      _
    $region7: #{tpu_custom_call.1} parent=1 // pred_check_branch
      %24 = sbr.rel (0) target = $region9
    $region8: #{tpu_custom_call.1} parent=1 // pred_region
      _
    $region9: #{tpu_custom_call.1} parent=1 // pred_fallthru
      _
    // Predicated region
    $region10: #{tpu_custom_call.1} parent=1 // pred_check
      _
    $region11: #{tpu_custom_call.1} parent=1 // pred_check_branch
      %26 = sbr.rel (0) target = $region13
    $region12: #{tpu_custom_call.1} parent=1 // pred_region
      _
    $region13: #{tpu_custom_call.1} parent=1 // pred_fallthru
      _
    // Predicated region
    $region14: #{tpu_custom_call.1} parent=1 // pred_check
      _
    $region15: #{tpu_custom_call.1} parent=1 // pred_check_branch
      %28 = sbr.rel (0) target = $region17
    $region16: #{tpu_custom_call.1} parent=1 // pred_region
      _
    $region17: #{tpu_custom_call.1} parent=1 // pred_fallthru
      _
    // Predicated region
    $region18: #{tpu_custom_call.1} parent=1 // pred_check
      _
    $region19: #{tpu_custom_call.1} parent=1 // pred_check_branch
      %30 = sbr.rel (0) target = $region21
    $region20: #{tpu_custom_call.1} parent=1 // pred_region
      _
    $region21: #{tpu_custom_call.1} parent=1 // pred_fallthru
      _
    // Predicated region
    $region22: #{tpu_custom_call.1} parent=1 // pred_check
      _
    $region23: #{tpu_custom_call.1} parent=1 // pred_check_branch
      %32 = sbr.rel (0) target = $region25
    $region24: #{tpu_custom_call.1} parent=1 // pred_region
      _
    $region25: #{tpu_custom_call.1} parent=1 // pred_fallthru
      _
    // Predicated region
    $region26: #{tpu_custom_call.1} parent=1 // pred_check
      _
    $region27: #{tpu_custom_call.1} parent=1 // pred_check_branch
      %34 = sbr.rel (0) target = $region29
    $region28: #{tpu_custom_call.1} parent=1 // pred_region
      _
    $region29: #{tpu_custom_call.1} parent=1 // pred_fallthru
      _
    // Predicated region
    $region30: #{tpu_custom_call.1} parent=1 // pred_check
      _
    $region31: #{tpu_custom_call.1} parent=1 // pred_check_branch
      %36 = sbr.rel (0) target = $region33
    $region32: #{tpu_custom_call.1} parent=1 // pred_region
      _
    $region33: #{tpu_custom_call.1} parent=1 // pred_fallthru
      _
    // Predicated region
    $region34: #{tpu_custom_call.1} parent=1 // pred_check
      _
    $region35: #{tpu_custom_call.1} parent=1 // pred_check_branch
      %38 = sbr.rel (0) target = $region37
    $region36: #{tpu_custom_call.1} parent=1 // pred_region
      _
    $region37: #{tpu_custom_call.1} parent=1 // pred_fallthru
      _
    // Predicated region
    $region38: #{tpu_custom_call.1} parent=1 // pred_check
      _
    $region39: #{tpu_custom_call.1} parent=1 // pred_check_branch
      %40 = sbr.rel (0) target = $region41
    $region40: #{tpu_custom_call.1} parent=1 // pred_region
      _
    $region41: #{tpu_custom_call.1} parent=1 // pred_fallthru
      _
    // Predicated region
    $region42: #{tpu_custom_call.1} parent=1 // pred_check
      _
    $region43: #{tpu_custom_call.1} parent=1 // pred_check_branch
      %42 = sbr.rel (0) target = $region45
    $region44: #{tpu_custom_call.1} parent=1 // pred_region
      _
    $region45: #{tpu_custom_call.1} parent=1 // pred_fallthru
      _
    // Predicated region
    $region46: #{tpu_custom_call.1} parent=1 // pred_check
      _
    $region47: #{tpu_custom_call.1} parent=1 // pred_check_branch
      %44 = sbr.rel (0) target = $region49
    $region48: #{tpu_custom_call.1} parent=1 // pred_region
      _
    $region49: #{tpu_custom_call.1} parent=1 // pred_fallthru
      _
    // Predicated region
    $region50: #{tpu_custom_call.1} parent=1 // pred_check
      _
    $region51: #{tpu_custom_call.1} parent=1 // pred_check_branch
      %46 = sbr.rel (0) target = $region53
    $region52: #{tpu_custom_call.1} parent=1 // pred_region
      _
    $region53: #{tpu_custom_call.1} parent=1 // pred_fallthru
      _
    %v48 = vld [vmem:[%s0] sm:$0xff]
    %v49 = vlaneseq
    %v50 = vshrl.u32 %v49, 7
    %v51 = vsub.s32 0, %v50
    %v52 = vrot.slane %v48, %v51
    %54 = vbcast.lane.b32.xlu0 %v52, 256
    %v55 = vpop.permute.xlu0 %54
    %s57 = sor.u32 256, 8
    %58 = vbcast.lane.b32.xlu0 %v52, %s57
    %v59 = vpop.permute.xlu0 %58
    %s61 = sor.u32 256, 16
    %62 = vbcast.lane.b32.xlu0 %v52, %s61
    %v63 = vpop.permute.xlu0 %62
    %s65 = sor.u32 256, 24
    %66 = vbcast.lane.b32.xlu0 %v52, %s65
    %v67 = vpop.permute.xlu0 %66
    %s69 = sor.u32 256, 32
    %70 = vbcast.lane.b32.xlu0 %v52, %s69
    %v71 = vpop.permute.xlu0 %70
    %s73 = sor.u32 256, 40
    %74 = vbcast.lane.b32.xlu0 %v52, %s73
    %v75 = vpop.permute.xlu0 %74
    %s77 = sor.u32 256, 48
    %78 = vbcast.lane.b32.xlu0 %v52, %s77
    %v79 = vpop.permute.xlu0 %78
    %s81 = sor.u32 256, 56
    %82 = vbcast.lane.b32.xlu0 %v52, %s81
    %v83 = vpop.permute.xlu0 %82
    %s85 = sor.u32 256, 64
    %86 = vbcast.lane.b32.xlu0 %v52, %s85
    %v87 = vpop.permute.xlu0 %86
    %s89 = sor.u32 256, 72
    %90 = vbcast.lane.b32.xlu0 %v52, %s89
    %v91 = vpop.permute.xlu0 %90
    %s93 = sor.u32 256, 80
    %94 = vbcast.lane.b32.xlu0 %v52, %s93
    %v95 = vpop.permute.xlu0 %94
    %s97 = sor.u32 256, 88
    %98 = vbcast.lane.b32.xlu0 %v52, %s97
    %v99 = vpop.permute.xlu0 %98
    %s101 = sor.u32 256, 96
    %102 = vbcast.lane.b32.xlu0 %v52, %s101
    %v103 = vpop.permute.xlu0 %102
    %s105 = sor.u32 256, 104
    %106 = vbcast.lane.b32.xlu0 %v52, %s105
    %v107 = vpop.permute.xlu0 %106
    %s109 = sor.u32 256, 112
    %110 = vbcast.lane.b32.xlu0 %v52, %s109
    %v111 = vpop.permute.xlu0 %110
    %s113 = sor.u32 256, 120
    %114 = vbcast.lane.b32.xlu0 %v52, %s113
    %v115 = vpop.permute.xlu0 %114
    %v116 = vlaneseq
    %v117 = vshrl.u32 %v116, 7
    %v118 = vsub.s32 1, %v117
    %v119 = vrot.slane %v48, %v118
    %121 = vbcast.lane.b32.xlu0 %v119, 256
    %v122 = vpop.permute.xlu0 %121
    %s124 = sor.u32 256, 8
    %125 = vbcast.lane.b32.xlu0 %v119, %s124
    %v126 = vpop.permute.xlu0 %125
    %s128 = sor.u32 256, 16
    %129 = vbcast.lane.b32.xlu0 %v119, %s128
    %v130 = vpop.permute.xlu0 %129
    %s132 = sor.u32 256, 24
    %133 = vbcast.lane.b32.xlu0 %v119, %s132
    %v134 = vpop.permute.xlu0 %133
    %s136 = sor.u32 256, 32
    %137 = vbcast.lane.b32.xlu0 %v119, %s136
    %v138 = vpop.permute.xlu0 %137
    %s140 = sor.u32 256, 40
    %141 = vbcast.lane.b32.xlu0 %v119, %s140
    %v142 = vpop.permute.xlu0 %141
    %s144 = sor.u32 256, 48
    %145 = vbcast.lane.b32.xlu0 %v119, %s144
    %v146 = vpop.permute.xlu0 %145
    %s148 = sor.u32 256, 56
    %149 = vbcast.lane.b32.xlu0 %v119, %s148
    %v150 = vpop.permute.xlu0 %149
    %s152 = sor.u32 256, 64
    %153 = vbcast.lane.b32.xlu0 %v119, %s152
    %v154 = vpop.permute.xlu0 %153
    %s156 = sor.u32 256, 72
    %157 = vbcast.lane.b32.xlu0 %v119, %s156
    %v158 = vpop.permute.xlu0 %157
    %s160 = sor.u32 256, 80
    %161 = vbcast.lane.b32.xlu0 %v119, %s160
    %v162 = vpop.permute.xlu0 %161
    %s164 = sor.u32 256, 88
    %165 = vbcast.lane.b32.xlu0 %v119, %s164
    %v166 = vpop.permute.xlu0 %165
    %s168 = sor.u32 256, 96
    %169 = vbcast.lane.b32.xlu0 %v119, %s168
    %v170 = vpop.permute.xlu0 %169
    %s172 = sor.u32 256, 104
    %173 = vbcast.lane.b32.xlu0 %v119, %s172
    %v174 = vpop.permute.xlu0 %173
    %s176 = sor.u32 256, 112
    %177 = vbcast.lane.b32.xlu0 %v119, %s176
    %v178 = vpop.permute.xlu0 %177
    %s180 = sor.u32 256, 120
    %181 = vbcast.lane.b32.xlu0 %v119, %s180
    %v182 = vpop.permute.xlu0 %181
    %v183 = vlaneseq
    %v184 = vshrl.u32 %v183, 7
    %v185 = vsub.s32 2, %v184
    %v186 = vrot.slane %v48, %v185
    %188 = vbcast.lane.b32.xlu0 %v186, 256
    %v189 = vpop.permute.xlu0 %188
    %s191 = sor.u32 256, 8
    %192 = vbcast.lane.b32.xlu0 %v186, %s191
    %v193 = vpop.permute.xlu0 %192
    %s195 = sor.u32 256, 16
    %196 = vbcast.lane.b32.xlu0 %v186, %s195
    %v197 = vpop.permute.xlu0 %196
    %s199 = sor.u32 256, 24
    %200 = vbcast.lane.b32.xlu0 %v186, %s199
    %v201 = vpop.permute.xlu0 %200
    %s203 = sor.u32 256, 32
    %204 = vbcast.lane.b32.xlu0 %v186, %s203
    %v205 = vpop.permute.xlu0 %204
    %s207 = sor.u32 256, 40
    %208 = vbcast.lane.b32.xlu0 %v186, %s207
    %v209 = vpop.permute.xlu0 %208
    %s211 = sor.u32 256, 48
    %212 = vbcast.lane.b32.xlu0 %v186, %s211
    %v213 = vpop.permute.xlu0 %212
    %s215 = sor.u32 256, 56
    %216 = vbcast.lane.b32.xlu0 %v186, %s215
    %v217 = vpop.permute.xlu0 %216
    %s219 = sor.u32 256, 64
    %220 = vbcast.lane.b32.xlu0 %v186, %s219
    %v221 = vpop.permute.xlu0 %220
    %s223 = sor.u32 256, 72
    %224 = vbcast.lane.b32.xlu0 %v186, %s223
    %v225 = vpop.permute.xlu0 %224
    %s227 = sor.u32 256, 80
    %228 = vbcast.lane.b32.xlu0 %v186, %s227
    %v229 = vpop.permute.xlu0 %228
    %s231 = sor.u32 256, 88
    %232 = vbcast.lane.b32.xlu0 %v186, %s231
    %v233 = vpop.permute.xlu0 %232
    %s235 = sor.u32 256, 96
    %236 = vbcast.lane.b32.xlu0 %v186, %s235
    %v237 = vpop.permute.xlu0 %236
    %s239 = sor.u32 256, 104
    %240 = vbcast.lane.b32.xlu0 %v186, %s239
    %v241 = vpop.permute.xlu0 %240
    %s243 = sor.u32 256, 112
    %244 = vbcast.lane.b32.xlu0 %v186, %s243
    %v245 = vpop.permute.xlu0 %244
    %s247 = sor.u32 256, 120
    %248 = vbcast.lane.b32.xlu0 %v186, %s247
    %v249 = vpop.permute.xlu0 %248
    %v250 = vlaneseq
    %v251 = vshrl.u32 %v250, 7
    %v252 = vsub.s32 3, %v251
    %v253 = vrot.slane %v48, %v252
    %255 = vbcast.lane.b32.xlu0 %v253, 256
    %v256 = vpop.permute.xlu0 %255
    %s258 = sor.u32 256, 8
    %259 = vbcast.lane.b32.xlu0 %v253, %s258
    %v260 = vpop.permute.xlu0 %259
    %s262 = sor.u32 256, 16
    %263 = vbcast.lane.b32.xlu0 %v253, %s262
    %v264 = vpop.permute.xlu0 %263
    %s266 = sor.u32 256, 24
    %267 = vbcast.lane.b32.xlu0 %v253, %s266
    %v268 = vpop.permute.xlu0 %267
    %s270 = sor.u32 256, 32
    %271 = vbcast.lane.b32.xlu0 %v253, %s270
    %v272 = vpop.permute.xlu0 %271
    %s274 = sor.u32 256, 40
    %275 = vbcast.lane.b32.xlu0 %v253, %s274
    %v276 = vpop.permute.xlu0 %275
    %s278 = sor.u32 256, 48
    %279 = vbcast.lane.b32.xlu0 %v253, %s278
    %v280 = vpop.permute.xlu0 %279
    %s282 = sor.u32 256, 56
    %283 = vbcast.lane.b32.xlu0 %v253, %s282
    %v284 = vpop.permute.xlu0 %283
    %s286 = sor.u32 256, 64
    %287 = vbcast.lane.b32.xlu0 %v253, %s286
    %v288 = vpop.permute.xlu0 %287
    %s290 = sor.u32 256, 72
    %291 = vbcast.lane.b32.xlu0 %v253, %s290
    %v292 = vpop.permute.xlu0 %291
    %s294 = sor.u32 256, 80
    %295 = vbcast.lane.b32.xlu0 %v253, %s294
    %v296 = vpop.permute.xlu0 %295
    %s298 = sor.u32 256, 88
    %299 = vbcast.lane.b32.xlu0 %v253, %s298
    %v300 = vpop.permute.xlu0 %299
    %s302 = sor.u32 256, 96
    %303 = vbcast.lane.b32.xlu0 %v253, %s302
    %v304 = vpop.permute.xlu0 %303
    %s306 = sor.u32 256, 104
    %307 = vbcast.lane.b32.xlu0 %v253, %s306
    %v308 = vpop.permute.xlu0 %307
    %s310 = sor.u32 256, 112
    %311 = vbcast.lane.b32.xlu0 %v253, %s310
    %v312 = vpop.permute.xlu0 %311
    %s314 = sor.u32 256, 120
    %315 = vbcast.lane.b32.xlu0 %v253, %s314
    %v316 = vpop.permute.xlu0 %315
    %v317 = vlaneseq
    %v318 = vshrl.u32 %v317, 7
    %v319 = vsub.s32 4, %v318
    %v320 = vrot.slane %v48, %v319
    %322 = vbcast.lane.b32.xlu0 %v320, 256
    %v323 = vpop.permute.xlu0 %322
    %s325 = sor.u32 256, 8
    %326 = vbcast.lane.b32.xlu0 %v320, %s325
    %v327 = vpop.permute.xlu0 %326
    %s329 = sor.u32 256, 16
    %330 = vbcast.lane.b32.xlu0 %v320, %s329
    %v331 = vpop.permute.xlu0 %330
    %s333 = sor.u32 256, 24
    %334 = vbcast.lane.b32.xlu0 %v320, %s333
    %v335 = vpop.permute.xlu0 %334
    %s337 = sor.u32 256, 32
    %338 = vbcast.lane.b32.xlu0 %v320, %s337
    %v339 = vpop.permute.xlu0 %338
    %s341 = sor.u32 256, 40
    %342 = vbcast.lane.b32.xlu0 %v320, %s341
    %v343 = vpop.permute.xlu0 %342
    %s345 = sor.u32 256, 48
    %346 = vbcast.lane.b32.xlu0 %v320, %s345
    %v347 = vpop.permute.xlu0 %346
    %s349 = sor.u32 256, 56
    %350 = vbcast.lane.b32.xlu0 %v320, %s349
    %v351 = vpop.permute.xlu0 %350
    %s353 = sor.u32 256, 64
    %354 = vbcast.lane.b32.xlu0 %v320, %s353
    %v355 = vpop.permute.xlu0 %354
    %s357 = sor.u32 256, 72
    %358 = vbcast.lane.b32.xlu0 %v320, %s357
    %v359 = vpop.permute.xlu0 %358
    %s361 = sor.u32 256, 80
    %362 = vbcast.lane.b32.xlu0 %v320, %s361
    %v363 = vpop.permute.xlu0 %362
    %s365 = sor.u32 256, 88
    %366 = vbcast.lane.b32.xlu0 %v320, %s365
    %v367 = vpop.permute.xlu0 %366
    %s369 = sor.u32 256, 96
    %370 = vbcast.lane.b32.xlu0 %v320, %s369
    %v371 = vpop.permute.xlu0 %370
    %s373 = sor.u32 256, 104
    %374 = vbcast.lane.b32.xlu0 %v320, %s373
    %v375 = vpop.permute.xlu0 %374
    %s377 = sor.u32 256, 112
    %378 = vbcast.lane.b32.xlu0 %v320, %s377
    %v379 = vpop.permute.xlu0 %378
    %s381 = sor.u32 256, 120
    %382 = vbcast.lane.b32.xlu0 %v320, %s381
    %v383 = vpop.permute.xlu0 %382
    %v384 = vlaneseq
    %v385 = vshrl.u32 %v384, 7
    %v386 = vsub.s32 5, %v385
    %v387 = vrot.slane %v48, %v386
    %389 = vbcast.lane.b32.xlu0 %v387, 256
    %v390 = vpop.permute.xlu0 %389
    %s392 = sor.u32 256, 8
    %393 = vbcast.lane.b32.xlu0 %v387, %s392
    %v394 = vpop.permute.xlu0 %393
    %s396 = sor.u32 256, 16
    %397 = vbcast.lane.b32.xlu0 %v387, %s396
    %v398 = vpop.permute.xlu0 %397
    %s400 = sor.u32 256, 24
    %401 = vbcast.lane.b32.xlu0 %v387, %s400
    %v402 = vpop.permute.xlu0 %401
    %s404 = sor.u32 256, 32
    %405 = vbcast.lane.b32.xlu0 %v387, %s404
    %v406 = vpop.permute.xlu0 %405
    %s408 = sor.u32 256, 40
    %409 = vbcast.lane.b32.xlu0 %v387, %s408
    %v410 = vpop.permute.xlu0 %409
    %s412 = sor.u32 256, 48
    %413 = vbcast.lane.b32.xlu0 %v387, %s412
    %v414 = vpop.permute.xlu0 %413
    %s416 = sor.u32 256, 56
    %417 = vbcast.lane.b32.xlu0 %v387, %s416
    %v418 = vpop.permute.xlu0 %417
    %s420 = sor.u32 256, 64
    %421 = vbcast.lane.b32.xlu0 %v387, %s420
    %v422 = vpop.permute.xlu0 %421
    %s424 = sor.u32 256, 72
    %425 = vbcast.lane.b32.xlu0 %v387, %s424
    %v426 = vpop.permute.xlu0 %425
    %s428 = sor.u32 256, 80
    %429 = vbcast.lane.b32.xlu0 %v387, %s428
    %v430 = vpop.permute.xlu0 %429
    %s432 = sor.u32 256, 88
    %433 = vbcast.lane.b32.xlu0 %v387, %s432
    %v434 = vpop.permute.xlu0 %433
    %s436 = sor.u32 256, 96
    %437 = vbcast.lane.b32.xlu0 %v387, %s436
    %v438 = vpop.permute.xlu0 %437
    %s440 = sor.u32 256, 104
    %441 = vbcast.lane.b32.xlu0 %v387, %s440
    %v442 = vpop.permute.xlu0 %441
    %s444 = sor.u32 256, 112
    %445 = vbcast.lane.b32.xlu0 %v387, %s444
    %v446 = vpop.permute.xlu0 %445
    %s448 = sor.u32 256, 120
    %449 = vbcast.lane.b32.xlu0 %v387, %s448
    %v450 = vpop.permute.xlu0 %449
    %v451 = vlaneseq
    %v452 = vshrl.u32 %v451, 7
    %v453 = vsub.s32 6, %v452
    %v454 = vrot.slane %v48, %v453
    %456 = vbcast.lane.b32.xlu0 %v454, 256
    %v457 = vpop.permute.xlu0 %456
    %s459 = sor.u32 256, 8
    %460 = vbcast.lane.b32.xlu0 %v454, %s459
    %v461 = vpop.permute.xlu0 %460
    %s463 = sor.u32 256, 16
    %464 = vbcast.lane.b32.xlu0 %v454, %s463
    %v465 = vpop.permute.xlu0 %464
    %s467 = sor.u32 256, 24
    %468 = vbcast.lane.b32.xlu0 %v454, %s467
    %v469 = vpop.permute.xlu0 %468
    %s471 = sor.u32 256, 32
    %472 = vbcast.lane.b32.xlu0 %v454, %s471
    %v473 = vpop.permute.xlu0 %472
    %s475 = sor.u32 256, 40
    %476 = vbcast.lane.b32.xlu0 %v454, %s475
    %v477 = vpop.permute.xlu0 %476
    %s479 = sor.u32 256, 48
    %480 = vbcast.lane.b32.xlu0 %v454, %s479
    %v481 = vpop.permute.xlu0 %480
    %s483 = sor.u32 256, 56
    %484 = vbcast.lane.b32.xlu0 %v454, %s483
    %v485 = vpop.permute.xlu0 %484
    %s487 = sor.u32 256, 64
    %488 = vbcast.lane.b32.xlu0 %v454, %s487
    %v489 = vpop.permute.xlu0 %488
    %s491 = sor.u32 256, 72
    %492 = vbcast.lane.b32.xlu0 %v454, %s491
    %v493 = vpop.permute.xlu0 %492
    %s495 = sor.u32 256, 80
    %496 = vbcast.lane.b32.xlu0 %v454, %s495
    %v497 = vpop.permute.xlu0 %496
    %s499 = sor.u32 256, 88
    %500 = vbcast.lane.b32.xlu0 %v454, %s499
    %v501 = vpop.permute.xlu0 %500
    %s503 = sor.u32 256, 96
    %504 = vbcast.lane.b32.xlu0 %v454, %s503
    %v505 = vpop.permute.xlu0 %504
    %s507 = sor.u32 256, 104
    %508 = vbcast.lane.b32.xlu0 %v454, %s507
    %v509 = vpop.permute.xlu0 %508
    %s511 = sor.u32 256, 112
    %512 = vbcast.lane.b32.xlu0 %v454, %s511
    %v513 = vpop.permute.xlu0 %512
    %s515 = sor.u32 256, 120
    %516 = vbcast.lane.b32.xlu0 %v454, %s515
    %v517 = vpop.permute.xlu0 %516
    %v518 = vlaneseq
    %v519 = vshrl.u32 %v518, 7
    %v520 = vsub.s32 7, %v519
    %v521 = vrot.slane %v48, %v520
    %523 = vbcast.lane.b32.xlu0 %v521, 256
    %v524 = vpop.permute.xlu0 %523
    %s526 = sor.u32 256, 8
    %527 = vbcast.lane.b32.xlu0 %v521, %s526
    %v528 = vpop.permute.xlu0 %527
    %s530 = sor.u32 256, 16
    %531 = vbcast.lane.b32.xlu0 %v521, %s530
    %v532 = vpop.permute.xlu0 %531
    %s534 = sor.u32 256, 24
    %535 = vbcast.lane.b32.xlu0 %v521, %s534
    %v536 = vpop.permute.xlu0 %535
    %s538 = sor.u32 256, 32
    %539 = vbcast.lane.b32.xlu0 %v521, %s538
    %v540 = vpop.permute.xlu0 %539
    %s542 = sor.u32 256, 40
    %543 = vbcast.lane.b32.xlu0 %v521, %s542
    %v544 = vpop.permute.xlu0 %543
    %s546 = sor.u32 256, 48
    %547 = vbcast.lane.b32.xlu0 %v521, %s546
    %v548 = vpop.permute.xlu0 %547
    %s550 = sor.u32 256, 56
    %551 = vbcast.lane.b32.xlu0 %v521, %s550
    %v552 = vpop.permute.xlu0 %551
    %s554 = sor.u32 256, 64
    %555 = vbcast.lane.b32.xlu0 %v521, %s554
    %v556 = vpop.permute.xlu0 %555
    %s558 = sor.u32 256, 72
    %559 = vbcast.lane.b32.xlu0 %v521, %s558
    %v560 = vpop.permute.xlu0 %559
    %s562 = sor.u32 256, 80
    %563 = vbcast.lane.b32.xlu0 %v521, %s562
    %v564 = vpop.permute.xlu0 %563
    %s566 = sor.u32 256, 88
    %567 = vbcast.lane.b32.xlu0 %v521, %s566
    %v568 = vpop.permute.xlu0 %567
    %s570 = sor.u32 256, 96
    %571 = vbcast.lane.b32.xlu0 %v521, %s570
    %v572 = vpop.permute.xlu0 %571
    %s574 = sor.u32 256, 104
    %575 = vbcast.lane.b32.xlu0 %v521, %s574
    %v576 = vpop.permute.xlu0 %575
    %s578 = sor.u32 256, 112
    %579 = vbcast.lane.b32.xlu0 %v521, %s578
    %v580 = vpop.permute.xlu0 %579
    %s582 = sor.u32 256, 120
    %583 = vbcast.lane.b32.xlu0 %v521, %s582
    %v584 = vpop.permute.xlu0 %583
    %v585 = vld [vmem:[%s1] sm:$0x1]
    %v587 = vlaneseq
    %v588 = vshrl.u32 %v587, 7
    %v589 = vsub.s32 0, %v588
    %v590 = vrot.slane %v585, %v589
    %v592 = vmul.f32 %v55, %v590
    %v593 = vmul.f32 %v59, %v590
    %v594 = vmul.f32 %v63, %v590
    %v595 = vmul.f32 %v67, %v590
    %v596 = vmul.f32 %v71, %v590
    %v597 = vmul.f32 %v75, %v590
    %v598 = vmul.f32 %v79, %v590
    %v599 = vmul.f32 %v83, %v590
    %v600 = vmul.f32 %v87, %v590
    %v601 = vmul.f32 %v91, %v590
    %v602 = vmul.f32 %v95, %v590
    %v603 = vmul.f32 %v99, %v590
    %v604 = vmul.f32 %v103, %v590
    %v605 = vmul.f32 %v107, %v590
    %v606 = vmul.f32 %v111, %v590
    %v607 = vmul.f32 %v115, %v590
    %v608 = vmul.f32 %v122, %v590
    %v609 = vmul.f32 %v126, %v590
    %v610 = vmul.f32 %v130, %v590
    %v611 = vmul.f32 %v134, %v590
    %v612 = vmul.f32 %v138, %v590
    %v613 = vmul.f32 %v142, %v590
    %v614 = vmul.f32 %v146, %v590
    %v615 = vmul.f32 %v150, %v590
    %v616 = vmul.f32 %v154, %v590
    %v617 = vmul.f32 %v158, %v590
    %v618 = vmul.f32 %v162, %v590
    %v619 = vmul.f32 %v166, %v590
    %v620 = vmul.f32 %v170, %v590
    %v621 = vmul.f32 %v174, %v590
    %v622 = vmul.f32 %v178, %v590
    %v623 = vmul.f32 %v182, %v590
    %v624 = vmul.f32 %v189, %v590
    %v625 = vmul.f32 %v193, %v590
    %v626 = vmul.f32 %v197, %v590
    %v627 = vmul.f32 %v201, %v590
    %v628 = vmul.f32 %v205, %v590
    %v629 = vmul.f32 %v209, %v590
    %v630 = vmul.f32 %v213, %v590
    %v631 = vmul.f32 %v217, %v590
    %v632 = vmul.f32 %v221, %v590
    %v633 = vmul.f32 %v225, %v590
    %v634 = vmul.f32 %v229, %v590
    %v635 = vmul.f32 %v233, %v590
    %v636 = vmul.f32 %v237, %v590
    %v637 = vmul.f32 %v241, %v590
    %v638 = vmul.f32 %v245, %v590
    %v639 = vmul.f32 %v249, %v590
    %v640 = vmul.f32 %v256, %v590
    %v641 = vmul.f32 %v260, %v590
    %v642 = vmul.f32 %v264, %v590
    %v643 = vmul.f32 %v268, %v590
    %v644 = vmul.f32 %v272, %v590
    %v645 = vmul.f32 %v276, %v590
    %v646 = vmul.f32 %v280, %v590
    %v647 = vmul.f32 %v284, %v590
    %v648 = vmul.f32 %v288, %v590
    %v649 = vmul.f32 %v292, %v590
    %v650 = vmul.f32 %v296, %v590
    %v651 = vmul.f32 %v300, %v590
    %v652 = vmul.f32 %v304, %v590
    %v653 = vmul.f32 %v308, %v590
    %v654 = vmul.f32 %v312, %v590
    %v655 = vmul.f32 %v316, %v590
    %v656 = vmul.f32 %v323, %v590
    %v657 = vmul.f32 %v327, %v590
    %v658 = vmul.f32 %v331, %v590
    %v659 = vmul.f32 %v335, %v590
    %v660 = vmul.f32 %v339, %v590
    %v661 = vmul.f32 %v343, %v590
    %v662 = vmul.f32 %v347, %v590
    %v663 = vmul.f32 %v351, %v590
    %v664 = vmul.f32 %v355, %v590
    %v665 = vmul.f32 %v359, %v590
    %v666 = vmul.f32 %v363, %v590
    %v667 = vmul.f32 %v367, %v590
    %v668 = vmul.f32 %v371, %v590
    %v669 = vmul.f32 %v375, %v590
    %v670 = vmul.f32 %v379, %v590
    %v671 = vmul.f32 %v383, %v590
    %v672 = vmul.f32 %v390, %v590
    %v673 = vmul.f32 %v394, %v590
    %v674 = vmul.f32 %v398, %v590
    %v675 = vmul.f32 %v402, %v590
    %v676 = vmul.f32 %v406, %v590
    %v677 = vmul.f32 %v410, %v590
    %v678 = vmul.f32 %v414, %v590
    %v679 = vmul.f32 %v418, %v590
    %v680 = vmul.f32 %v422, %v590
    %v681 = vmul.f32 %v426, %v590
    %v682 = vmul.f32 %v430, %v590
    %v683 = vmul.f32 %v434, %v590
    %v684 = vmul.f32 %v438, %v590
    %v685 = vmul.f32 %v442, %v590
    %v686 = vmul.f32 %v446, %v590
    %v687 = vmul.f32 %v450, %v590
    %v688 = vmul.f32 %v457, %v590
    %v689 = vmul.f32 %v461, %v590
    %v690 = vmul.f32 %v465, %v590
    %v691 = vmul.f32 %v469, %v590
    %v692 = vmul.f32 %v473, %v590
    %v693 = vmul.f32 %v477, %v590
    %v694 = vmul.f32 %v481, %v590
    %v695 = vmul.f32 %v485, %v590
    %v696 = vmul.f32 %v489, %v590
    %v697 = vmul.f32 %v493, %v590
    %v698 = vmul.f32 %v497, %v590
    %v699 = vmul.f32 %v501, %v590
    %v700 = vmul.f32 %v505, %v590
    %v701 = vmul.f32 %v509, %v590
    %v702 = vmul.f32 %v513, %v590
    %v703 = vmul.f32 %v517, %v590
    %v704 = vmul.f32 %v524, %v590
    %v705 = vmul.f32 %v528, %v590
    %v706 = vmul.f32 %v532, %v590
    %v707 = vmul.f32 %v536, %v590
    %v708 = vmul.f32 %v540, %v590
    %v709 = vmul.f32 %v544, %v590
    %v710 = vmul.f32 %v548, %v590
    %v711 = vmul.f32 %v552, %v590
    %v712 = vmul.f32 %v556, %v590
    %v713 = vmul.f32 %v560, %v590
    %v714 = vmul.f32 %v564, %v590
    %v715 = vmul.f32 %v568, %v590
    %v716 = vmul.f32 %v572, %v590
    %v717 = vmul.f32 %v576, %v590
    %v718 = vmul.f32 %v580, %v590
    %v719 = vmul.f32 %v584, %v590
    %v720 = vld [vmem:[%s2] sm:$0x1]
    %v722 = vlaneseq
    %v723 = vshrl.u32 %v722, 7
    %v724 = vsub.s32 0, %v723
    %v725 = vrot.slane %v720, %v724
    %v727 = vadd.f32 %v592, %v725
    %v728 = vadd.f32 %v593, %v725
    %v729 = vadd.f32 %v594, %v725
    %v730 = vadd.f32 %v595, %v725
    %v731 = vadd.f32 %v596, %v725
    %v732 = vadd.f32 %v597, %v725
    %v733 = vadd.f32 %v598, %v725
    %v734 = vadd.f32 %v599, %v725
    %v735 = vadd.f32 %v600, %v725
    %v736 = vadd.f32 %v601, %v725
    %v737 = vadd.f32 %v602, %v725
    %v738 = vadd.f32 %v603, %v725
    %v739 = vadd.f32 %v604, %v725
    %v740 = vadd.f32 %v605, %v725
    %v741 = vadd.f32 %v606, %v725
    %v742 = vadd.f32 %v607, %v725
    %v743 = vadd.f32 %v608, %v725
    %v744 = vadd.f32 %v609, %v725
    %v745 = vadd.f32 %v610, %v725
    %v746 = vadd.f32 %v611, %v725
    %v747 = vadd.f32 %v612, %v725
    %v748 = vadd.f32 %v613, %v725
    %v749 = vadd.f32 %v614, %v725
    %v750 = vadd.f32 %v615, %v725
    %v751 = vadd.f32 %v616, %v725
    %v752 = vadd.f32 %v617, %v725
    %v753 = vadd.f32 %v618, %v725
    %v754 = vadd.f32 %v619, %v725
    %v755 = vadd.f32 %v620, %v725
    %v756 = vadd.f32 %v621, %v725
    %v757 = vadd.f32 %v622, %v725
    %v758 = vadd.f32 %v623, %v725
    %v759 = vadd.f32 %v624, %v725
    %v760 = vadd.f32 %v625, %v725
    %v761 = vadd.f32 %v626, %v725
    %v762 = vadd.f32 %v627, %v725
    %v763 = vadd.f32 %v628, %v725
    %v764 = vadd.f32 %v629, %v725
    %v765 = vadd.f32 %v630, %v725
    %v766 = vadd.f32 %v631, %v725
    %v767 = vadd.f32 %v632, %v725
    %v768 = vadd.f32 %v633, %v725
    %v769 = vadd.f32 %v634, %v725
    %v770 = vadd.f32 %v635, %v725
    %v771 = vadd.f32 %v636, %v725
    %v772 = vadd.f32 %v637, %v725
    %v773 = vadd.f32 %v638, %v725
    %v774 = vadd.f32 %v639, %v725
    %v775 = vadd.f32 %v640, %v725
    %v776 = vadd.f32 %v641, %v725
    %v777 = vadd.f32 %v642, %v725
    %v778 = vadd.f32 %v643, %v725
    %v779 = vadd.f32 %v644, %v725
    %v780 = vadd.f32 %v645, %v725
    %v781 = vadd.f32 %v646, %v725
    %v782 = vadd.f32 %v647, %v725
    %v783 = vadd.f32 %v648, %v725
    %v784 = vadd.f32 %v649, %v725
    %v785 = vadd.f32 %v650, %v725
    %v786 = vadd.f32 %v651, %v725
    %v787 = vadd.f32 %v652, %v725
    %v788 = vadd.f32 %v653, %v725
    %v789 = vadd.f32 %v654, %v725
    %v790 = vadd.f32 %v655, %v725
    %v791 = vadd.f32 %v656, %v725
    %v792 = vadd.f32 %v657, %v725
    %v793 = vadd.f32 %v658, %v725
    %v794 = vadd.f32 %v659, %v725
    %v795 = vadd.f32 %v660, %v725
    %v796 = vadd.f32 %v661, %v725
    %v797 = vadd.f32 %v662, %v725
    %v798 = vadd.f32 %v663, %v725
    %v799 = vadd.f32 %v664, %v725
    %v800 = vadd.f32 %v665, %v725
    %v801 = vadd.f32 %v666, %v725
    %v802 = vadd.f32 %v667, %v725
    %v803 = vadd.f32 %v668, %v725
    %v804 = vadd.f32 %v669, %v725
    %v805 = vadd.f32 %v670, %v725
    %v806 = vadd.f32 %v671, %v725
    %v807 = vadd.f32 %v672, %v725
    %v808 = vadd.f32 %v673, %v725
    %v809 = vadd.f32 %v674, %v725
    %v810 = vadd.f32 %v675, %v725
    %v811 = vadd.f32 %v676, %v725
    %v812 = vadd.f32 %v677, %v725
    %v813 = vadd.f32 %v678, %v725
    %v814 = vadd.f32 %v679, %v725
    %v815 = vadd.f32 %v680, %v725
    %v816 = vadd.f32 %v681, %v725
    %v817 = vadd.f32 %v682, %v725
    %v818 = vadd.f32 %v683, %v725
    %v819 = vadd.f32 %v684, %v725
    %v820 = vadd.f32 %v685, %v725
    %v821 = vadd.f32 %v686, %v725
    %v822 = vadd.f32 %v687, %v725
    %v823 = vadd.f32 %v688, %v725
    %v824 = vadd.f32 %v689, %v725
    %v825 = vadd.f32 %v690, %v725
    %v826 = vadd.f32 %v691, %v725
    %v827 = vadd.f32 %v692, %v725
    %v828 = vadd.f32 %v693, %v725
    %v829 = vadd.f32 %v694, %v725
    %v830 = vadd.f32 %v695, %v725
    %v831 = vadd.f32 %v696, %v725
    %v832 = vadd.f32 %v697, %v725
    %v833 = vadd.f32 %v698, %v725
    %v834 = vadd.f32 %v699, %v725
    %v835 = vadd.f32 %v700, %v725
    %v836 = vadd.f32 %v701, %v725
    %v837 = vadd.f32 %v702, %v725
    %v838 = vadd.f32 %v703, %v725
    %v839 = vadd.f32 %v704, %v725
    %v840 = vadd.f32 %v705, %v725
    %v841 = vadd.f32 %v706, %v725
    %v842 = vadd.f32 %v707, %v725
    %v843 = vadd.f32 %v708, %v725
    %v844 = vadd.f32 %v709, %v725
    %v845 = vadd.f32 %v710, %v725
    %v846 = vadd.f32 %v711, %v725
    %v847 = vadd.f32 %v712, %v725
    %v848 = vadd.f32 %v713, %v725
    %v849 = vadd.f32 %v714, %v725
    %v850 = vadd.f32 %v715, %v725
    %v851 = vadd.f32 %v716, %v725
    %v852 = vadd.f32 %v717, %v725
    %v853 = vadd.f32 %v718, %v725
    %v854 = vadd.f32 %v719, %v725
    %v855 = vmax.f32 %v727, 0.0
    %v856 = vmax.f32 %v728, 0.0
    %v857 = vmax.f32 %v729, 0.0
    %v858 = vmax.f32 %v730, 0.0
    %v859 = vmax.f32 %v731, 0.0
    %v860 = vmax.f32 %v732, 0.0
    %v861 = vmax.f32 %v733, 0.0
    %v862 = vmax.f32 %v734, 0.0
    %v863 = vmax.f32 %v735, 0.0
    %v864 = vmax.f32 %v736, 0.0
    %v865 = vmax.f32 %v737, 0.0
    %v866 = vmax.f32 %v738, 0.0
    %v867 = vmax.f32 %v739, 0.0
    %v868 = vmax.f32 %v740, 0.0
    %v869 = vmax.f32 %v741, 0.0
    %v870 = vmax.f32 %v742, 0.0
    %v871 = vmax.f32 %v743, 0.0
    %v872 = vmax.f32 %v744, 0.0
    %v873 = vmax.f32 %v745, 0.0
    %v874 = vmax.f32 %v746, 0.0
    %v875 = vmax.f32 %v747, 0.0
    %v876 = vmax.f32 %v748, 0.0
    %v877 = vmax.f32 %v749, 0.0
    %v878 = vmax.f32 %v750, 0.0
    %v879 = vmax.f32 %v751, 0.0
    %v880 = vmax.f32 %v752, 0.0
    %v881 = vmax.f32 %v753, 0.0
    %v882 = vmax.f32 %v754, 0.0
    %v883 = vmax.f32 %v755, 0.0
    %v884 = vmax.f32 %v756, 0.0
    %v885 = vmax.f32 %v757, 0.0
    %v886 = vmax.f32 %v758, 0.0
    %v887 = vmax.f32 %v759, 0.0
    %v888 = vmax.f32 %v760, 0.0
    %v889 = vmax.f32 %v761, 0.0
    %v890 = vmax.f32 %v762, 0.0
    %v891 = vmax.f32 %v763, 0.0
    %v892 = vmax.f32 %v764, 0.0
    %v893 = vmax.f32 %v765, 0.0
    %v894 = vmax.f32 %v766, 0.0
    %v895 = vmax.f32 %v767, 0.0
    %v896 = vmax.f32 %v768, 0.0
    %v897 = vmax.f32 %v769, 0.0
    %v898 = vmax.f32 %v770, 0.0
    %v899 = vmax.f32 %v771, 0.0
    %v900 = vmax.f32 %v772, 0.0
    %v901 = vmax.f32 %v773, 0.0
    %v902 = vmax.f32 %v774, 0.0
    %v903 = vmax.f32 %v775, 0.0
    %v904 = vmax.f32 %v776, 0.0
    %v905 = vmax.f32 %v777, 0.0
    %v906 = vmax.f32 %v778, 0.0
    %v907 = vmax.f32 %v779, 0.0
    %v908 = vmax.f32 %v780, 0.0
    %v909 = vmax.f32 %v781, 0.0
    %v910 = vmax.f32 %v782, 0.0
    %v911 = vmax.f32 %v783, 0.0
    %v912 = vmax.f32 %v784, 0.0
    %v913 = vmax.f32 %v785, 0.0
    %v914 = vmax.f32 %v786, 0.0
    %v915 = vmax.f32 %v787, 0.0
    %v916 = vmax.f32 %v788, 0.0
    %v917 = vmax.f32 %v789, 0.0
    %v918 = vmax.f32 %v790, 0.0
    %v919 = vmax.f32 %v791, 0.0
    %v920 = vmax.f32 %v792, 0.0
    %v921 = vmax.f32 %v793, 0.0
    %v922 = vmax.f32 %v794, 0.0
    %v923 = vmax.f32 %v795, 0.0
    %v924 = vmax.f32 %v796, 0.0
    %v925 = vmax.f32 %v797, 0.0
    %v926 = vmax.f32 %v798, 0.0
    %v927 = vmax.f32 %v799, 0.0
    %v928 = vmax.f32 %v800, 0.0
    %v929 = vmax.f32 %v801, 0.0
    %v930 = vmax.f32 %v802, 0.0
    %v931 = vmax.f32 %v803, 0.0
    %v932 = vmax.f32 %v804, 0.0
    %v933 = vmax.f32 %v805, 0.0
    %v934 = vmax.f32 %v806, 0.0
    %v935 = vmax.f32 %v807, 0.0
    %v936 = vmax.f32 %v808, 0.0
    %v937 = vmax.f32 %v809, 0.0
    %v938 = vmax.f32 %v810, 0.0
    %v939 = vmax.f32 %v811, 0.0
    %v940 = vmax.f32 %v812, 0.0
    %v941 = vmax.f32 %v813, 0.0
    %v942 = vmax.f32 %v814, 0.0
    %v943 = vmax.f32 %v815, 0.0
    %v944 = vmax.f32 %v816, 0.0
    %v945 = vmax.f32 %v817, 0.0
    %v946 = vmax.f32 %v818, 0.0
    %v947 = vmax.f32 %v819, 0.0
    %v948 = vmax.f32 %v820, 0.0
    %v949 = vmax.f32 %v821, 0.0
    %v950 = vmax.f32 %v822, 0.0
    %v951 = vmax.f32 %v823, 0.0
    %v952 = vmax.f32 %v824, 0.0
    %v953 = vmax.f32 %v825, 0.0
    %v954 = vmax.f32 %v826, 0.0
    %v955 = vmax.f32 %v827, 0.0
    %v956 = vmax.f32 %v828, 0.0
    %v957 = vmax.f32 %v829, 0.0
    %v958 = vmax.f32 %v830, 0.0
    %v959 = vmax.f32 %v831, 0.0
    %v960 = vmax.f32 %v832, 0.0
    %v961 = vmax.f32 %v833, 0.0
    %v962 = vmax.f32 %v834, 0.0
    %v963 = vmax.f32 %v835, 0.0
    %v964 = vmax.f32 %v836, 0.0
    %v965 = vmax.f32 %v837, 0.0
    %v966 = vmax.f32 %v838, 0.0
    %v967 = vmax.f32 %v839, 0.0
    %v968 = vmax.f32 %v840, 0.0
    %v969 = vmax.f32 %v841, 0.0
    %v970 = vmax.f32 %v842, 0.0
    %v971 = vmax.f32 %v843, 0.0
    %v972 = vmax.f32 %v844, 0.0
    %v973 = vmax.f32 %v845, 0.0
    %v974 = vmax.f32 %v846, 0.0
    %v975 = vmax.f32 %v847, 0.0
    %v976 = vmax.f32 %v848, 0.0
    %v977 = vmax.f32 %v849, 0.0
    %v978 = vmax.f32 %v850, 0.0
    %v979 = vmax.f32 %v851, 0.0
    %v980 = vmax.f32 %v852, 0.0
    %v981 = vmax.f32 %v853, 0.0
    %v982 = vmax.f32 %v854, 0.0
    %v983 = vpack.c.bf16 %v856, %v855
    %v984 = vpack.c.bf16 %v858, %v857
    %v985 = vpack.c.bf16 %v860, %v859
    %v986 = vpack.c.bf16 %v862, %v861
    %v987 = vpack.c.bf16 %v864, %v863
    %v988 = vpack.c.bf16 %v866, %v865
    %v989 = vpack.c.bf16 %v868, %v867
    %v990 = vpack.c.bf16 %v870, %v869
    %v991 = vpack.c.bf16 %v872, %v871
    %v992 = vpack.c.bf16 %v874, %v873
    %v993 = vpack.c.bf16 %v876, %v875
    %v994 = vpack.c.bf16 %v878, %v877
    %v995 = vpack.c.bf16 %v880, %v879
    %v996 = vpack.c.bf16 %v882, %v881
    %v997 = vpack.c.bf16 %v884, %v883
    %v998 = vpack.c.bf16 %v886, %v885
    %v999 = vpack.c.bf16 %v888, %v887
    %v1000 = vpack.c.bf16 %v890, %v889
    %v1001 = vpack.c.bf16 %v892, %v891
    %v1002 = vpack.c.bf16 %v894, %v893
    %v1003 = vpack.c.bf16 %v896, %v895
    %v1004 = vpack.c.bf16 %v898, %v897
    %v1005 = vpack.c.bf16 %v900, %v899
    %v1006 = vpack.c.bf16 %v902, %v901
    %v1007 = vpack.c.bf16 %v904, %v903
    %v1008 = vpack.c.bf16 %v906, %v905
    %v1009 = vpack.c.bf16 %v908, %v907
    %v1010 = vpack.c.bf16 %v910, %v909
    %v1011 = vpack.c.bf16 %v912, %v911
    %v1012 = vpack.c.bf16 %v914, %v913
    %v1013 = vpack.c.bf16 %v916, %v915
    %v1014 = vpack.c.bf16 %v918, %v917
    %v1015 = vpack.c.bf16 %v920, %v919
    %v1016 = vpack.c.bf16 %v922, %v921
    %v1017 = vpack.c.bf16 %v924, %v923
    %v1018 = vpack.c.bf16 %v926, %v925
    %v1019 = vpack.c.bf16 %v928, %v927
    %v1020 = vpack.c.bf16 %v930, %v929
    %v1021 = vpack.c.bf16 %v932, %v931
    %v1022 = vpack.c.bf16 %v934, %v933
    %v1023 = vpack.c.bf16 %v936, %v935
    %v1024 = vpack.c.bf16 %v938, %v937
    %v1025 = vpack.c.bf16 %v940, %v939
    %v1026 = vpack.c.bf16 %v942, %v941
    %v1027 = vpack.c.bf16 %v944, %v943
    %v1028 = vpack.c.bf16 %v946, %v945
    %v1029 = vpack.c.bf16 %v948, %v947
    %v1030 = vpack.c.bf16 %v950, %v949
    %v1031 = vpack.c.bf16 %v952, %v951
    %v1032 = vpack.c.bf16 %v954, %v953
    %v1033 = vpack.c.bf16 %v956, %v955
    %v1034 = vpack.c.bf16 %v958, %v957
    %v1035 = vpack.c.bf16 %v960, %v959
    %v1036 = vpack.c.bf16 %v962, %v961
    %v1037 = vpack.c.bf16 %v964, %v963
    %v1038 = vpack.c.bf16 %v966, %v965
    %v1039 = vpack.c.bf16 %v968, %v967
    %v1040 = vpack.c.bf16 %v970, %v969
    %v1041 = vpack.c.bf16 %v972, %v971
    %v1042 = vpack.c.bf16 %v974, %v973
    %v1043 = vpack.c.bf16 %v976, %v975
    %v1044 = vpack.c.bf16 %v978, %v977
    %v1045 = vpack.c.bf16 %v980, %v979
    %v1046 = vpack.c.bf16 %v982, %v981
    %v1047 = vld [vmem:[%s3] sm:$0xf]
    %v1048 = vld [vmem:[%s3 + $0x4] sm:$0xf]
    %v1049 = vld [vmem:[%s3 + $0x8] sm:$0xf]
    %v1050 = vld [vmem:[%s3 + $0xc] sm:$0xf]
    %v1051 = vld [vmem:[%s3 + $0x10] sm:$0xf]
    %v1052 = vld [vmem:[%s3 + $0x14] sm:$0xf]
    %v1053 = vld [vmem:[%s3 + $0x18] sm:$0xf]
    %v1054 = vld [vmem:[%s3 + $0x1c] sm:$0xf]
    %v1055 = vld [vmem:[%s3 + $0x20] sm:$0xf]
    %v1056 = vld [vmem:[%s3 + $0x24] sm:$0xf]
    %v1057 = vld [vmem:[%s3 + $0x28] sm:$0xf]
    %v1058 = vld [vmem:[%s3 + $0x2c] sm:$0xf]
    %v1059 = vld [vmem:[%s3 + $0x30] sm:$0xf]
    %v1060 = vld [vmem:[%s3 + $0x34] sm:$0xf]
    %v1061 = vld [vmem:[%s3 + $0x38] sm:$0xf]
    %v1062 = vld [vmem:[%s3 + $0x3c] sm:$0xf]
    %v1063 = vld [vmem:[%s4] sm:$0x1]
    %v1065 = vlaneseq
    %v1066 = vshrl.u32 %v1065, 7
    %v1067 = vsub.s32 0, %v1066
    %v1068 = vrot.slane %v1063, %v1067
    %v1086 = vunpack.c.l.b16 %v1047
    %v1087 = vunpack.c.l.b16 %v1048
    %v1088 = vunpack.c.l.b16 %v1049
    %v1089 = vunpack.c.l.b16 %v1050
    %v1090 = vunpack.c.l.b16 %v1051
    %v1091 = vunpack.c.l.b16 %v1052
    %v1092 = vunpack.c.l.b16 %v1053
    %v1093 = vunpack.c.l.b16 %v1054
    %v1094 = vunpack.c.l.b16 %v1055
    %v1095 = vunpack.c.l.b16 %v1056
    %v1096 = vunpack.c.l.b16 %v1057
    %v1097 = vunpack.c.l.b16 %v1058
    %v1098 = vunpack.c.l.b16 %v1059
    %v1099 = vunpack.c.l.b16 %v1060
    %v1100 = vunpack.c.l.b16 %v1061
    %v1101 = vunpack.c.l.b16 %v1062
    %v1102 = vpack.c.b16 %v1087, %v1086
    %v1103 = vpack.c.b16 %v1089, %v1088
    %v1104 = vpack.c.b16 %v1091, %v1090
    %v1105 = vpack.c.b16 %v1093, %v1092
    %v1106 = vpack.c.b16 %v1095, %v1094
    %v1107 = vpack.c.b16 %v1097, %v1096
    %v1108 = vpack.c.b16 %v1099, %v1098
    %v1109 = vpack.c.b16 %v1101, %v1100
    %1118 = vmatprep.subr.bf16.mxu0 0
    %1119 = vmatpush1.bf16.msra.mxu0 %v1109
    %1120 = vmatprep.subr.bf16.mxu0 0
    %1121 = vmatpush1.bf16.msra.mxu0 %v1108
    %1122 = vmatprep.subr.bf16.mxu0 0
    %1123 = vmatpush1.bf16.msra.mxu0 %v1107
    %1124 = vmatprep.subr.bf16.mxu0 0
    %1125 = vmatpush1.bf16.msra.mxu0 %v1106
    %1126 = vmatprep.subr.bf16.mxu0 0
    %1127 = vmatpush1.bf16.msra.mxu0 %v1105
    %1128 = vmatprep.subr.bf16.mxu0 0
    %1129 = vmatpush1.bf16.msra.mxu0 %v1104
    %1130 = vmatprep.subr.bf16.mxu0 0
    %1131 = vmatpush1.bf16.msra.mxu0 %v1103
    %1132 = vmatprep.subr.bf16.mxu0 0
    %1133 = vmatpush1.bf16.msra.mxu0 %v1102
    %1134 = vmatprep.subr.bf16.mxu0 0
    %1135 = vmatpush2.bf16.msra.mxu0 0
    %1136 = vmatprep.subr.bf16.mxu0 0
    %1137 = vmatpush2.bf16.msra.mxu0 0
    %1138 = vmatprep.subr.bf16.mxu0 0
    %1139 = vmatpush2.bf16.msra.mxu0 0
    %1140 = vmatprep.subr.bf16.mxu0 0
    %1141 = vmatpush2.bf16.msra.mxu0 0
    %1142 = vmatprep.subr.bf16.mxu0 0
    %1143 = vmatpush2.bf16.msra.mxu0 0
    %1144 = vmatprep.subr.bf16.mxu0 0
    %1145 = vmatpush2.bf16.msra.mxu0 0
    %1146 = vmatprep.subr.bf16.mxu0 0
    %1147 = vmatpush2.bf16.msra.mxu0 0
    %1148 = vmatprep.subr.bf16.mxu0 0
    %1149 = vmatpush2.bf16.msra.mxu0 0
    %1150 = vmatprep.mubr.bf16.mxu0 0
    %1151 = vmatmul.mubr.bf16.gmra.mxu0 %v983
    %v1152 = vpop.f32.mrf.mxu0
    %v1153 = vadd.f32 %v1068, %v1152
    %v1154 = vpop.f32.mrf.mxu0
    %v1155 = vpop.f32.mrf.mxu0
    %v1156 = vadd.f32 %v1068, %v1155
    %v1157 = vpop.f32.mrf.mxu0
    %1158 = vmatprep.mubr.bf16.mxu0 0
    %1159 = vmatmul.mubr.bf16.gmra.mxu0 %v984
    %v1160 = vpop.f32.mrf.mxu0
    %v1161 = vadd.f32 %v1068, %v1160
    %v1162 = vpop.f32.mrf.mxu0
    %v1163 = vpop.f32.mrf.mxu0
    %v1164 = vadd.f32 %v1068, %v1163
    %v1165 = vpop.f32.mrf.mxu0
    %1166 = vmatprep.mubr.bf16.mxu0 0
    %1167 = vmatmul.mubr.bf16.gmra.mxu0 %v985
    %v1168 = vpop.f32.mrf.mxu0
    %v1169 = vadd.f32 %v1068, %v1168
    %v1170 = vpop.f32.mrf.mxu0
    %v1171 = vpop.f32.mrf.mxu0
    %v1172 = vadd.f32 %v1068, %v1171
    %v1173 = vpop.f32.mrf.mxu0
    %1174 = vmatprep.mubr.bf16.mxu0 0
    %1175 = vmatmul.mubr.bf16.gmra.mxu0 %v986
    %v1176 = vpop.f32.mrf.mxu0
    %v1177 = vadd.f32 %v1068, %v1176
    %v1178 = vpop.f32.mrf.mxu0
    %v1179 = vpop.f32.mrf.mxu0
    %v1180 = vadd.f32 %v1068, %v1179
    %v1181 = vpop.f32.mrf.mxu0
    %1182 = vmatprep.mubr.bf16.mxu0 0
    %1183 = vmatmul.mubr.bf16.gmra.mxu0 %v987
    %v1184 = vpop.f32.mrf.mxu0
    %v1185 = vadd.f32 %v1068, %v1184
    %v1186 = vpop.f32.mrf.mxu0
    %v1187 = vpop.f32.mrf.mxu0
    %v1188 = vadd.f32 %v1068, %v1187
    %v1189 = vpop.f32.mrf.mxu0
    %1190 = vmatprep.mubr.bf16.mxu0 0
    %1191 = vmatmul.mubr.bf16.gmra.mxu0 %v988
    %v1192 = vpop.f32.mrf.mxu0
    %v1193 = vadd.f32 %v1068, %v1192
    %v1194 = vpop.f32.mrf.mxu0
    %v1195 = vpop.f32.mrf.mxu0
    %v1196 = vadd.f32 %v1068, %v1195
    %v1197 = vpop.f32.mrf.mxu0
    %1198 = vmatprep.mubr.bf16.mxu0 0
    %1199 = vmatmul.mubr.bf16.gmra.mxu0 %v989
    %v1200 = vpop.f32.mrf.mxu0
    %v1201 = vadd.f32 %v1068, %v1200
    %v1202 = vpop.f32.mrf.mxu0
    %v1203 = vpop.f32.mrf.mxu0
    %v1204 = vadd.f32 %v1068, %v1203
    %v1205 = vpop.f32.mrf.mxu0
    %1206 = vmatprep.mubr.bf16.mxu0 0
    %1207 = vmatmul.mubr.bf16.gmra.mxu0 %v990
    %v1208 = vpop.f32.mrf.mxu0
    %v1209 = vadd.f32 %v1068, %v1208
    %v1210 = vpop.f32.mrf.mxu0
    %v1211 = vpop.f32.mrf.mxu0
    %v1212 = vadd.f32 %v1068, %v1211
    %v1213 = vpop.f32.mrf.mxu0
    %1214 = vmatprep.mubr.bf16.mxu0 0
    %1215 = vmatmul.mubr.bf16.gmra.mxu0 %v991
    %v1216 = vpop.f32.mrf.mxu0
    %v1217 = vadd.f32 %v1068, %v1216
    %v1218 = vpop.f32.mrf.mxu0
    %v1219 = vpop.f32.mrf.mxu0
    %v1220 = vadd.f32 %v1068, %v1219
    %v1221 = vpop.f32.mrf.mxu0
    %1222 = vmatprep.mubr.bf16.mxu0 0
    %1223 = vmatmul.mubr.bf16.gmra.mxu0 %v992
    %v1224 = vpop.f32.mrf.mxu0
    %v1225 = vadd.f32 %v1068, %v1224
    %v1226 = vpop.f32.mrf.mxu0
    %v1227 = vpop.f32.mrf.mxu0
    %v1228 = vadd.f32 %v1068, %v1227
    %v1229 = vpop.f32.mrf.mxu0
    %1230 = vmatprep.mubr.bf16.mxu0 0
    %1231 = vmatmul.mubr.bf16.gmra.mxu0 %v993
    %v1232 = vpop.f32.mrf.mxu0
    %v1233 = vadd.f32 %v1068, %v1232
    %v1234 = vpop.f32.mrf.mxu0
    %v1235 = vpop.f32.mrf.mxu0
    %v1236 = vadd.f32 %v1068, %v1235
    %v1237 = vpop.f32.mrf.mxu0
    %1238 = vmatprep.mubr.bf16.mxu0 0
    %1239 = vmatmul.mubr.bf16.gmra.mxu0 %v994
    %v1240 = vpop.f32.mrf.mxu0
    %v1241 = vadd.f32 %v1068, %v1240
    %v1242 = vpop.f32.mrf.mxu0
    %v1243 = vpop.f32.mrf.mxu0
    %v1244 = vadd.f32 %v1068, %v1243
    %v1245 = vpop.f32.mrf.mxu0
    %1246 = vmatprep.mubr.bf16.mxu0 0
    %1247 = vmatmul.mubr.bf16.gmra.mxu0 %v995
    %v1248 = vpop.f32.mrf.mxu0
    %v1249 = vadd.f32 %v1068, %v1248
    %v1250 = vpop.f32.mrf.mxu0
    %v1251 = vpop.f32.mrf.mxu0
    %v1252 = vadd.f32 %v1068, %v1251
    %v1253 = vpop.f32.mrf.mxu0
    %1254 = vmatprep.mubr.bf16.mxu0 0
    %1255 = vmatmul.mubr.bf16.gmra.mxu0 %v996
    %v1256 = vpop.f32.mrf.mxu0
    %v1257 = vadd.f32 %v1068, %v1256
    %v1258 = vpop.f32.mrf.mxu0
    %v1259 = vpop.f32.mrf.mxu0
    %v1260 = vadd.f32 %v1068, %v1259
    %v1261 = vpop.f32.mrf.mxu0
    %1262 = vmatprep.mubr.bf16.mxu0 0
    %1263 = vmatmul.mubr.bf16.gmra.mxu0 %v997
    %v1264 = vpop.f32.mrf.mxu0
    %v1265 = vadd.f32 %v1068, %v1264
    %v1266 = vpop.f32.mrf.mxu0
    %v1267 = vpop.f32.mrf.mxu0
    %v1268 = vadd.f32 %v1068, %v1267
    %v1269 = vpop.f32.mrf.mxu0
    %1270 = vmatprep.mubr.bf16.mxu0 0
    %1271 = vmatmul.mubr.bf16.gmra.mxu0 %v998
    %v1272 = vpop.f32.mrf.mxu0
    %v1273 = vadd.f32 %v1068, %v1272
    %v1274 = vpop.f32.mrf.mxu0
    %v1275 = vpop.f32.mrf.mxu0
    %v1276 = vadd.f32 %v1068, %v1275
    %v1277 = vpop.f32.mrf.mxu0
    %1278 = vmatprep.mubr.bf16.mxu0 0
    %1279 = vmatmul.mubr.bf16.gmra.mxu0 %v999
    %v1280 = vpop.f32.mrf.mxu0
    %v1281 = vadd.f32 %v1068, %v1280
    %v1282 = vpop.f32.mrf.mxu0
    %v1283 = vpop.f32.mrf.mxu0
    %v1284 = vadd.f32 %v1068, %v1283
    %v1285 = vpop.f32.mrf.mxu0
    %1286 = vmatprep.mubr.bf16.mxu0 0
    %1287 = vmatmul.mubr.bf16.gmra.mxu0 %v1000
    %v1288 = vpop.f32.mrf.mxu0
    %v1289 = vadd.f32 %v1068, %v1288
    %v1290 = vpop.f32.mrf.mxu0
    %v1291 = vpop.f32.mrf.mxu0
    %v1292 = vadd.f32 %v1068, %v1291
    %v1293 = vpop.f32.mrf.mxu0
    %1294 = vmatprep.mubr.bf16.mxu0 0
    %1295 = vmatmul.mubr.bf16.gmra.mxu0 %v1001
    %v1296 = vpop.f32.mrf.mxu0
    %v1297 = vadd.f32 %v1068, %v1296
    %v1298 = vpop.f32.mrf.mxu0
    %v1299 = vpop.f32.mrf.mxu0
    %v1300 = vadd.f32 %v1068, %v1299
    %v1301 = vpop.f32.mrf.mxu0
    %1302 = vmatprep.mubr.bf16.mxu0 0
    %1303 = vmatmul.mubr.bf16.gmra.mxu0 %v1002
    %v1304 = vpop.f32.mrf.mxu0
    %v1305 = vadd.f32 %v1068, %v1304
    %v1306 = vpop.f32.mrf.mxu0
    %v1307 = vpop.f32.mrf.mxu0
    %v1308 = vadd.f32 %v1068, %v1307
    %v1309 = vpop.f32.mrf.mxu0
    %1310 = vmatprep.mubr.bf16.mxu0 0
    %1311 = vmatmul.mubr.bf16.gmra.mxu0 %v1003
    %v1312 = vpop.f32.mrf.mxu0
    %v1313 = vadd.f32 %v1068, %v1312
    %v1314 = vpop.f32.mrf.mxu0
    %v1315 = vpop.f32.mrf.mxu0
    %v1316 = vadd.f32 %v1068, %v1315
    %v1317 = vpop.f32.mrf.mxu0
    %1318 = vmatprep.mubr.bf16.mxu0 0
    %1319 = vmatmul.mubr.bf16.gmra.mxu0 %v1004
    %v1320 = vpop.f32.mrf.mxu0
    %v1321 = vadd.f32 %v1068, %v1320
    %v1322 = vpop.f32.mrf.mxu0
    %v1323 = vpop.f32.mrf.mxu0
    %v1324 = vadd.f32 %v1068, %v1323
    %v1325 = vpop.f32.mrf.mxu0
    %1326 = vmatprep.mubr.bf16.mxu0 0
    %1327 = vmatmul.mubr.bf16.gmra.mxu0 %v1005
    %v1328 = vpop.f32.mrf.mxu0
    %v1329 = vadd.f32 %v1068, %v1328
    %v1330 = vpop.f32.mrf.mxu0
    %v1331 = vpop.f32.mrf.mxu0
    %v1332 = vadd.f32 %v1068, %v1331
    %v1333 = vpop.f32.mrf.mxu0
    %1334 = vmatprep.mubr.bf16.mxu0 0
    %1335 = vmatmul.mubr.bf16.gmra.mxu0 %v1006
    %v1336 = vpop.f32.mrf.mxu0
    %v1337 = vadd.f32 %v1068, %v1336
    %v1338 = vpop.f32.mrf.mxu0
    %v1339 = vpop.f32.mrf.mxu0
    %v1340 = vadd.f32 %v1068, %v1339
    %v1341 = vpop.f32.mrf.mxu0
    %1342 = vmatprep.mubr.bf16.mxu0 0
    %1343 = vmatmul.mubr.bf16.gmra.mxu0 %v1007
    %v1344 = vpop.f32.mrf.mxu0
    %v1345 = vadd.f32 %v1068, %v1344
    %v1346 = vpop.f32.mrf.mxu0
    %v1347 = vpop.f32.mrf.mxu0
    %v1348 = vadd.f32 %v1068, %v1347
    %v1349 = vpop.f32.mrf.mxu0
    %1350 = vmatprep.mubr.bf16.mxu0 0
    %1351 = vmatmul.mubr.bf16.gmra.mxu0 %v1008
    %v1352 = vpop.f32.mrf.mxu0
    %v1353 = vadd.f32 %v1068, %v1352
    %v1354 = vpop.f32.mrf.mxu0
    %v1355 = vpop.f32.mrf.mxu0
    %v1356 = vadd.f32 %v1068, %v1355
    %v1357 = vpop.f32.mrf.mxu0
    %1358 = vmatprep.mubr.bf16.mxu0 0
    %1359 = vmatmul.mubr.bf16.gmra.mxu0 %v1009
    %v1360 = vpop.f32.mrf.mxu0
    %v1361 = vadd.f32 %v1068, %v1360
    %v1362 = vpop.f32.mrf.mxu0
    %v1363 = vpop.f32.mrf.mxu0
    %v1364 = vadd.f32 %v1068, %v1363
    %v1365 = vpop.f32.mrf.mxu0
    %1366 = vmatprep.mubr.bf16.mxu0 0
    %1367 = vmatmul.mubr.bf16.gmra.mxu0 %v1010
    %v1368 = vpop.f32.mrf.mxu0
    %v1369 = vadd.f32 %v1068, %v1368
    %v1370 = vpop.f32.mrf.mxu0
    %v1371 = vpop.f32.mrf.mxu0
    %v1372 = vadd.f32 %v1068, %v1371
    %v1373 = vpop.f32.mrf.mxu0
    %1374 = vmatprep.mubr.bf16.mxu0 0
    %1375 = vmatmul.mubr.bf16.gmra.mxu0 %v1011
    %v1376 = vpop.f32.mrf.mxu0
    %v1377 = vadd.f32 %v1068, %v1376
    %v1378 = vpop.f32.mrf.mxu0
    %v1379 = vpop.f32.mrf.mxu0
    %v1380 = vadd.f32 %v1068, %v1379
    %v1381 = vpop.f32.mrf.mxu0
    %1382 = vmatprep.mubr.bf16.mxu0 0
    %1383 = vmatmul.mubr.bf16.gmra.mxu0 %v1012
    %v1384 = vpop.f32.mrf.mxu0
    %v1385 = vadd.f32 %v1068, %v1384
    %v1386 = vpop.f32.mrf.mxu0
    %v1387 = vpop.f32.mrf.mxu0
    %v1388 = vadd.f32 %v1068, %v1387
    %v1389 = vpop.f32.mrf.mxu0
    %1390 = vmatprep.mubr.bf16.mxu0 0
    %1391 = vmatmul.mubr.bf16.gmra.mxu0 %v1013
    %v1392 = vpop.f32.mrf.mxu0
    %v1393 = vadd.f32 %v1068, %v1392
    %v1394 = vpop.f32.mrf.mxu0
    %v1395 = vpop.f32.mrf.mxu0
    %v1396 = vadd.f32 %v1068, %v1395
    %v1397 = vpop.f32.mrf.mxu0
    %1398 = vmatprep.mubr.bf16.mxu0 0
    %1399 = vmatmul.mubr.bf16.gmra.mxu0 %v1014
    %v1400 = vpop.f32.mrf.mxu0
    %v1401 = vadd.f32 %v1068, %v1400
    %v1402 = vpop.f32.mrf.mxu0
    %v1403 = vpop.f32.mrf.mxu0
    %v1404 = vadd.f32 %v1068, %v1403
    %v1405 = vpop.f32.mrf.mxu0
    %1406 = vmatprep.mubr.bf16.mxu0 0
    %1407 = vmatmul.mubr.bf16.gmra.mxu0 %v1015
    %v1408 = vpop.f32.mrf.mxu0
    %v1409 = vadd.f32 %v1068, %v1408
    %v1410 = vpop.f32.mrf.mxu0
    %v1411 = vpop.f32.mrf.mxu0
    %v1412 = vadd.f32 %v1068, %v1411
    %v1413 = vpop.f32.mrf.mxu0
    %1414 = vmatprep.mubr.bf16.mxu0 0
    %1415 = vmatmul.mubr.bf16.gmra.mxu0 %v1016
    %v1416 = vpop.f32.mrf.mxu0
    %v1417 = vadd.f32 %v1068, %v1416
    %v1418 = vpop.f32.mrf.mxu0
    %v1419 = vpop.f32.mrf.mxu0
    %v1420 = vadd.f32 %v1068, %v1419
    %v1421 = vpop.f32.mrf.mxu0
    %1422 = vmatprep.mubr.bf16.mxu0 0
    %1423 = vmatmul.mubr.bf16.gmra.mxu0 %v1017
    %v1424 = vpop.f32.mrf.mxu0
    %v1425 = vadd.f32 %v1068, %v1424
    %v1426 = vpop.f32.mrf.mxu0
    %v1427 = vpop.f32.mrf.mxu0
    %v1428 = vadd.f32 %v1068, %v1427
    %v1429 = vpop.f32.mrf.mxu0
    %1430 = vmatprep.mubr.bf16.mxu0 0
    %1431 = vmatmul.mubr.bf16.gmra.mxu0 %v1018
    %v1432 = vpop.f32.mrf.mxu0
    %v1433 = vadd.f32 %v1068, %v1432
    %v1434 = vpop.f32.mrf.mxu0
    %v1435 = vpop.f32.mrf.mxu0
    %v1436 = vadd.f32 %v1068, %v1435
    %v1437 = vpop.f32.mrf.mxu0
    %1438 = vmatprep.mubr.bf16.mxu0 0
    %1439 = vmatmul.mubr.bf16.gmra.mxu0 %v1019
    %v1440 = vpop.f32.mrf.mxu0
    %v1441 = vadd.f32 %v1068, %v1440
    %v1442 = vpop.f32.mrf.mxu0
    %v1443 = vpop.f32.mrf.mxu0
    %v1444 = vadd.f32 %v1068, %v1443
    %v1445 = vpop.f32.mrf.mxu0
    %1446 = vmatprep.mubr.bf16.mxu0 0
    %1447 = vmatmul.mubr.bf16.gmra.mxu0 %v1020
    %v1448 = vpop.f32.mrf.mxu0
    %v1449 = vadd.f32 %v1068, %v1448
    %v1450 = vpop.f32.mrf.mxu0
    %v1451 = vpop.f32.mrf.mxu0
    %v1452 = vadd.f32 %v1068, %v1451
    %v1453 = vpop.f32.mrf.mxu0
    %1454 = vmatprep.mubr.bf16.mxu0 0
    %1455 = vmatmul.mubr.bf16.gmra.mxu0 %v1021
    %v1456 = vpop.f32.mrf.mxu0
    %v1457 = vadd.f32 %v1068, %v1456
    %v1458 = vpop.f32.mrf.mxu0
    %v1459 = vpop.f32.mrf.mxu0
    %v1460 = vadd.f32 %v1068, %v1459
    %v1461 = vpop.f32.mrf.mxu0
    %1462 = vmatprep.mubr.bf16.mxu0 0
    %1463 = vmatmul.mubr.bf16.gmra.mxu0 %v1022
    %v1464 = vpop.f32.mrf.mxu0
    %v1465 = vadd.f32 %v1068, %v1464
    %v1466 = vpop.f32.mrf.mxu0
    %v1467 = vpop.f32.mrf.mxu0
    %v1468 = vadd.f32 %v1068, %v1467
    %v1469 = vpop.f32.mrf.mxu0
    %1470 = vmatprep.mubr.bf16.mxu0 0
    %1471 = vmatmul.mubr.bf16.gmra.mxu0 %v1023
    %v1472 = vpop.f32.mrf.mxu0
    %v1473 = vadd.f32 %v1068, %v1472
    %v1474 = vpop.f32.mrf.mxu0
    %v1475 = vpop.f32.mrf.mxu0
    %v1476 = vadd.f32 %v1068, %v1475
    %v1477 = vpop.f32.mrf.mxu0
    %1478 = vmatprep.mubr.bf16.mxu0 0
    %1479 = vmatmul.mubr.bf16.gmra.mxu0 %v1024
    %v1480 = vpop.f32.mrf.mxu0
    %v1481 = vadd.f32 %v1068, %v1480
    %v1482 = vpop.f32.mrf.mxu0
    %v1483 = vpop.f32.mrf.mxu0
    %v1484 = vadd.f32 %v1068, %v1483
    %v1485 = vpop.f32.mrf.mxu0
    %1486 = vmatprep.mubr.bf16.mxu0 0
    %1487 = vmatmul.mubr.bf16.gmra.mxu0 %v1025
    %v1488 = vpop.f32.mrf.mxu0
    %v1489 = vadd.f32 %v1068, %v1488
    %v1490 = vpop.f32.mrf.mxu0
    %v1491 = vpop.f32.mrf.mxu0
    %v1492 = vadd.f32 %v1068, %v1491
    %v1493 = vpop.f32.mrf.mxu0
    %1494 = vmatprep.mubr.bf16.mxu0 0
    %1495 = vmatmul.mubr.bf16.gmra.mxu0 %v1026
    %v1496 = vpop.f32.mrf.mxu0
    %v1497 = vadd.f32 %v1068, %v1496
    %v1498 = vpop.f32.mrf.mxu0
    %v1499 = vpop.f32.mrf.mxu0
    %v1500 = vadd.f32 %v1068, %v1499
    %v1501 = vpop.f32.mrf.mxu0
    %1502 = vmatprep.mubr.bf16.mxu0 0
    %1503 = vmatmul.mubr.bf16.gmra.mxu0 %v1027
    %v1504 = vpop.f32.mrf.mxu0
    %v1505 = vadd.f32 %v1068, %v1504
    %v1506 = vpop.f32.mrf.mxu0
    %v1507 = vpop.f32.mrf.mxu0
    %v1508 = vadd.f32 %v1068, %v1507
    %v1509 = vpop.f32.mrf.mxu0
    %1510 = vmatprep.mubr.bf16.mxu0 0
    %1511 = vmatmul.mubr.bf16.gmra.mxu0 %v1028
    %v1512 = vpop.f32.mrf.mxu0
    %v1513 = vadd.f32 %v1068, %v1512
    %v1514 = vpop.f32.mrf.mxu0
    %v1515 = vpop.f32.mrf.mxu0
    %v1516 = vadd.f32 %v1068, %v1515
    %v1517 = vpop.f32.mrf.mxu0
    %1518 = vmatprep.mubr.bf16.mxu0 0
    %1519 = vmatmul.mubr.bf16.gmra.mxu0 %v1029
    %v1520 = vpop.f32.mrf.mxu0
    %v1521 = vadd.f32 %v1068, %v1520
    %v1522 = vpop.f32.mrf.mxu0
    %v1523 = vpop.f32.mrf.mxu0
    %v1524 = vadd.f32 %v1068, %v1523
    %v1525 = vpop.f32.mrf.mxu0
    %1526 = vmatprep.mubr.bf16.mxu0 0
    %1527 = vmatmul.mubr.bf16.gmra.mxu0 %v1030
    %v1528 = vpop.f32.mrf.mxu0
    %v1529 = vadd.f32 %v1068, %v1528
    %v1530 = vpop.f32.mrf.mxu0
    %v1531 = vpop.f32.mrf.mxu0
    %v1532 = vadd.f32 %v1068, %v1531
    %v1533 = vpop.f32.mrf.mxu0
    %1534 = vmatprep.mubr.bf16.mxu0 0
    %1535 = vmatmul.mubr.bf16.gmra.mxu0 %v1031
    %v1536 = vpop.f32.mrf.mxu0
    %v1537 = vadd.f32 %v1068, %v1536
    %v1538 = vpop.f32.mrf.mxu0
    %v1539 = vpop.f32.mrf.mxu0
    %v1540 = vadd.f32 %v1068, %v1539
    %v1541 = vpop.f32.mrf.mxu0
    %1542 = vmatprep.mubr.bf16.mxu0 0
    %1543 = vmatmul.mubr.bf16.gmra.mxu0 %v1032
    %v1544 = vpop.f32.mrf.mxu0
    %v1545 = vadd.f32 %v1068, %v1544
    %v1546 = vpop.f32.mrf.mxu0
    %v1547 = vpop.f32.mrf.mxu0
    %v1548 = vadd.f32 %v1068, %v1547
    %v1549 = vpop.f32.mrf.mxu0
    %1550 = vmatprep.mubr.bf16.mxu0 0
    %1551 = vmatmul.mubr.bf16.gmra.mxu0 %v1033
    %v1552 = vpop.f32.mrf.mxu0
    %v1553 = vadd.f32 %v1068, %v1552
    %v1554 = vpop.f32.mrf.mxu0
    %v1555 = vpop.f32.mrf.mxu0
    %v1556 = vadd.f32 %v1068, %v1555
    %v1557 = vpop.f32.mrf.mxu0
    %1558 = vmatprep.mubr.bf16.mxu0 0
    %1559 = vmatmul.mubr.bf16.gmra.mxu0 %v1034
    %v1560 = vpop.f32.mrf.mxu0
    %v1561 = vadd.f32 %v1068, %v1560
    %v1562 = vpop.f32.mrf.mxu0
    %v1563 = vpop.f32.mrf.mxu0
    %v1564 = vadd.f32 %v1068, %v1563
    %v1565 = vpop.f32.mrf.mxu0
    %1566 = vmatprep.mubr.bf16.mxu0 0
    %1567 = vmatmul.mubr.bf16.gmra.mxu0 %v1035
    %v1568 = vpop.f32.mrf.mxu0
    %v1569 = vadd.f32 %v1068, %v1568
    %v1570 = vpop.f32.mrf.mxu0
    %v1571 = vpop.f32.mrf.mxu0
    %v1572 = vadd.f32 %v1068, %v1571
    %v1573 = vpop.f32.mrf.mxu0
    %1574 = vmatprep.mubr.bf16.mxu0 0
    %1575 = vmatmul.mubr.bf16.gmra.mxu0 %v1036
    %v1576 = vpop.f32.mrf.mxu0
    %v1577 = vadd.f32 %v1068, %v1576
    %v1578 = vpop.f32.mrf.mxu0
    %v1579 = vpop.f32.mrf.mxu0
    %v1580 = vadd.f32 %v1068, %v1579
    %v1581 = vpop.f32.mrf.mxu0
    %1582 = vmatprep.mubr.bf16.mxu0 0
    %1583 = vmatmul.mubr.bf16.gmra.mxu0 %v1037
    %v1584 = vpop.f32.mrf.mxu0
    %v1585 = vadd.f32 %v1068, %v1584
    %v1586 = vpop.f32.mrf.mxu0
    %v1587 = vpop.f32.mrf.mxu0
    %v1588 = vadd.f32 %v1068, %v1587
    %v1589 = vpop.f32.mrf.mxu0
    %1590 = vmatprep.mubr.bf16.mxu0 0
    %1591 = vmatmul.mubr.bf16.gmra.mxu0 %v1038
    %v1592 = vpop.f32.mrf.mxu0
    %v1593 = vadd.f32 %v1068, %v1592
    %v1594 = vpop.f32.mrf.mxu0
    %v1595 = vpop.f32.mrf.mxu0
    %v1596 = vadd.f32 %v1068, %v1595
    %v1597 = vpop.f32.mrf.mxu0
    %1598 = vmatprep.mubr.bf16.mxu0 0
    %1599 = vmatmul.mubr.bf16.gmra.mxu0 %v1039
    %v1600 = vpop.f32.mrf.mxu0
    %v1601 = vadd.f32 %v1068, %v1600
    %v1602 = vpop.f32.mrf.mxu0
    %v1603 = vpop.f32.mrf.mxu0
    %v1604 = vadd.f32 %v1068, %v1603
    %v1605 = vpop.f32.mrf.mxu0
    %1606 = vmatprep.mubr.bf16.mxu0 0
    %1607 = vmatmul.mubr.bf16.gmra.mxu0 %v1040
    %v1608 = vpop.f32.mrf.mxu0
    %v1609 = vadd.f32 %v1068, %v1608
    %v1610 = vpop.f32.mrf.mxu0
    %v1611 = vpop.f32.mrf.mxu0
    %v1612 = vadd.f32 %v1068, %v1611
    %v1613 = vpop.f32.mrf.mxu0
    %1614 = vmatprep.mubr.bf16.mxu0 0
    %1615 = vmatmul.mubr.bf16.gmra.mxu0 %v1041
    %v1616 = vpop.f32.mrf.mxu0
    %v1617 = vadd.f32 %v1068, %v1616
    %v1618 = vpop.f32.mrf.mxu0
    %v1619 = vpop.f32.mrf.mxu0
    %v1620 = vadd.f32 %v1068, %v1619
    %v1621 = vpop.f32.mrf.mxu0
    %1622 = vmatprep.mubr.bf16.mxu0 0
    %1623 = vmatmul.mubr.bf16.gmra.mxu0 %v1042
    %v1624 = vpop.f32.mrf.mxu0
    %v1625 = vadd.f32 %v1068, %v1624
    %v1626 = vpop.f32.mrf.mxu0
    %v1627 = vpop.f32.mrf.mxu0
    %v1628 = vadd.f32 %v1068, %v1627
    %v1629 = vpop.f32.mrf.mxu0
    %1630 = vmatprep.mubr.bf16.mxu0 0
    %1631 = vmatmul.mubr.bf16.gmra.mxu0 %v1043
    %v1632 = vpop.f32.mrf.mxu0
    %v1633 = vadd.f32 %v1068, %v1632
    %v1634 = vpop.f32.mrf.mxu0
    %v1635 = vpop.f32.mrf.mxu0
    %v1636 = vadd.f32 %v1068, %v1635
    %v1637 = vpop.f32.mrf.mxu0
    %1638 = vmatprep.mubr.bf16.mxu0 0
    %1639 = vmatmul.mubr.bf16.gmra.mxu0 %v1044
    %v1640 = vpop.f32.mrf.mxu0
    %v1641 = vadd.f32 %v1068, %v1640
    %v1642 = vpop.f32.mrf.mxu0
    %v1643 = vpop.f32.mrf.mxu0
    %v1644 = vadd.f32 %v1068, %v1643
    %v1645 = vpop.f32.mrf.mxu0
    %1646 = vmatprep.mubr.bf16.mxu0 0
    %1647 = vmatmul.mubr.bf16.gmra.mxu0 %v1045
    %v1648 = vpop.f32.mrf.mxu0
    %v1649 = vadd.f32 %v1068, %v1648
    %v1650 = vpop.f32.mrf.mxu0
    %v1651 = vpop.f32.mrf.mxu0
    %v1652 = vadd.f32 %v1068, %v1651
    %v1653 = vpop.f32.mrf.mxu0
    %1654 = vmatprep.mubr.bf16.mxu0 0
    %1655 = vmatmul.mubr.bf16.gmra.mxu0 %v1046
    %v1656 = vpop.f32.mrf.mxu0
    %v1657 = vadd.f32 %v1068, %v1656
    %v1658 = vpop.f32.mrf.mxu0
    %v1659 = vpop.f32.mrf.mxu0
    %v1660 = vadd.f32 %v1068, %v1659
    %v1661 = vpop.f32.mrf.mxu0
    %1662 = vdwg.mxu0
    %v1663 = vmax.f32 %v1153, 0.0
    %v1664 = vmax.f32 %v1156, 0.0
    %v1665 = vmax.f32 %v1161, 0.0
    %v1666 = vmax.f32 %v1164, 0.0
    %v1667 = vmax.f32 %v1169, 0.0
    %v1668 = vmax.f32 %v1172, 0.0
    %v1669 = vmax.f32 %v1177, 0.0
    %v1670 = vmax.f32 %v1180, 0.0
    %v1671 = vmax.f32 %v1185, 0.0
    %v1672 = vmax.f32 %v1188, 0.0
    %v1673 = vmax.f32 %v1193, 0.0
    %v1674 = vmax.f32 %v1196, 0.0
    %v1675 = vmax.f32 %v1201, 0.0
    %v1676 = vmax.f32 %v1204, 0.0
    %v1677 = vmax.f32 %v1209, 0.0
    %v1678 = vmax.f32 %v1212, 0.0
    %v1679 = vmax.f32 %v1217, 0.0
    %v1680 = vmax.f32 %v1220, 0.0
    %v1681 = vmax.f32 %v1225, 0.0
    %v1682 = vmax.f32 %v1228, 0.0
    %v1683 = vmax.f32 %v1233, 0.0
    %v1684 = vmax.f32 %v1236, 0.0
    %v1685 = vmax.f32 %v1241, 0.0
    %v1686 = vmax.f32 %v1244, 0.0
    %v1687 = vmax.f32 %v1249, 0.0
    %v1688 = vmax.f32 %v1252, 0.0
    %v1689 = vmax.f32 %v1257, 0.0
    %v1690 = vmax.f32 %v1260, 0.0
    %v1691 = vmax.f32 %v1265, 0.0
    %v1692 = vmax.f32 %v1268, 0.0
    %v1693 = vmax.f32 %v1273, 0.0
    %v1694 = vmax.f32 %v1276, 0.0
    %v1695 = vmax.f32 %v1281, 0.0
    %v1696 = vmax.f32 %v1284, 0.0
    %v1697 = vmax.f32 %v1289, 0.0
    %v1698 = vmax.f32 %v1292, 0.0
    %v1699 = vmax.f32 %v1297, 0.0
    %v1700 = vmax.f32 %v1300, 0.0
    %v1701 = vmax.f32 %v1305, 0.0
    %v1702 = vmax.f32 %v1308, 0.0
    %v1703 = vmax.f32 %v1313, 0.0
    %v1704 = vmax.f32 %v1316, 0.0
    %v1705 = vmax.f32 %v1321, 0.0
    %v1706 = vmax.f32 %v1324, 0.0
    %v1707 = vmax.f32 %v1329, 0.0
    %v1708 = vmax.f32 %v1332, 0.0
    %v1709 = vmax.f32 %v1337, 0.0
    %v1710 = vmax.f32 %v1340, 0.0
    %v1711 = vmax.f32 %v1345, 0.0
    %v1712 = vmax.f32 %v1348, 0.0
    %v1713 = vmax.f32 %v1353, 0.0
    %v1714 = vmax.f32 %v1356, 0.0
    %v1715 = vmax.f32 %v1361, 0.0
    %v1716 = vmax.f32 %v1364, 0.0
    %v1717 = vmax.f32 %v1369, 0.0
    %v1718 = vmax.f32 %v1372, 0.0
    %v1719 = vmax.f32 %v1377, 0.0
    %v1720 = vmax.f32 %v1380, 0.0
    %v1721 = vmax.f32 %v1385, 0.0
    %v1722 = vmax.f32 %v1388, 0.0
    %v1723 = vmax.f32 %v1393, 0.0
    %v1724 = vmax.f32 %v1396, 0.0
    %v1725 = vmax.f32 %v1401, 0.0
    %v1726 = vmax.f32 %v1404, 0.0
    %v1727 = vmax.f32 %v1409, 0.0
    %v1728 = vmax.f32 %v1412, 0.0
    %v1729 = vmax.f32 %v1417, 0.0
    %v1730 = vmax.f32 %v1420, 0.0
    %v1731 = vmax.f32 %v1425, 0.0
    %v1732 = vmax.f32 %v1428, 0.0
    %v1733 = vmax.f32 %v1433, 0.0
    %v1734 = vmax.f32 %v1436, 0.0
    %v1735 = vmax.f32 %v1441, 0.0
    %v1736 = vmax.f32 %v1444, 0.0
    %v1737 = vmax.f32 %v1449, 0.0
    %v1738 = vmax.f32 %v1452, 0.0
    %v1739 = vmax.f32 %v1457, 0.0
    %v1740 = vmax.f32 %v1460, 0.0
    %v1741 = vmax.f32 %v1465, 0.0
    %v1742 = vmax.f32 %v1468, 0.0
    %v1743 = vmax.f32 %v1473, 0.0
    %v1744 = vmax.f32 %v1476, 0.0
    %v1745 = vmax.f32 %v1481, 0.0
    %v1746 = vmax.f32 %v1484, 0.0
    %v1747 = vmax.f32 %v1489, 0.0
    %v1748 = vmax.f32 %v1492, 0.0
    %v1749 = vmax.f32 %v1497, 0.0
    %v1750 = vmax.f32 %v1500, 0.0
    %v1751 = vmax.f32 %v1505, 0.0
    %v1752 = vmax.f32 %v1508, 0.0
    %v1753 = vmax.f32 %v1513, 0.0
    %v1754 = vmax.f32 %v1516, 0.0
    %v1755 = vmax.f32 %v1521, 0.0
    %v1756 = vmax.f32 %v1524, 0.0
    %v1757 = vmax.f32 %v1529, 0.0
    %v1758 = vmax.f32 %v1532, 0.0
    %v1759 = vmax.f32 %v1537, 0.0
    %v1760 = vmax.f32 %v1540, 0.0
    %v1761 = vmax.f32 %v1545, 0.0
    %v1762 = vmax.f32 %v1548, 0.0
    %v1763 = vmax.f32 %v1553, 0.0
    %v1764 = vmax.f32 %v1556, 0.0
    %v1765 = vmax.f32 %v1561, 0.0
    %v1766 = vmax.f32 %v1564, 0.0
    %v1767 = vmax.f32 %v1569, 0.0
    %v1768 = vmax.f32 %v1572, 0.0
    %v1769 = vmax.f32 %v1577, 0.0
    %v1770 = vmax.f32 %v1580, 0.0
    %v1771 = vmax.f32 %v1585, 0.0
    %v1772 = vmax.f32 %v1588, 0.0
    %v1773 = vmax.f32 %v1593, 0.0
    %v1774 = vmax.f32 %v1596, 0.0
    %v1775 = vmax.f32 %v1601, 0.0
    %v1776 = vmax.f32 %v1604, 0.0
    %v1777 = vmax.f32 %v1609, 0.0
    %v1778 = vmax.f32 %v1612, 0.0
    %v1779 = vmax.f32 %v1617, 0.0
    %v1780 = vmax.f32 %v1620, 0.0
    %v1781 = vmax.f32 %v1625, 0.0
    %v1782 = vmax.f32 %v1628, 0.0
    %v1783 = vmax.f32 %v1633, 0.0
    %v1784 = vmax.f32 %v1636, 0.0
    %v1785 = vmax.f32 %v1641, 0.0
    %v1786 = vmax.f32 %v1644, 0.0
    %v1787 = vmax.f32 %v1649, 0.0
    %v1788 = vmax.f32 %v1652, 0.0
    %v1789 = vmax.f32 %v1657, 0.0
    %v1790 = vmax.f32 %v1660, 0.0
    %v1791 = vpack.c.bf16 %v1664, %v1663
    %v1792 = vpack.c.bf16 %v1666, %v1665
    %v1793 = vpack.c.bf16 %v1668, %v1667
    %v1794 = vpack.c.bf16 %v1670, %v1669
    %v1795 = vpack.c.bf16 %v1672, %v1671
    %v1796 = vpack.c.bf16 %v1674, %v1673
    %v1797 = vpack.c.bf16 %v1676, %v1675
    %v1798 = vpack.c.bf16 %v1678, %v1677
    %v1799 = vpack.c.bf16 %v1680, %v1679
    %v1800 = vpack.c.bf16 %v1682, %v1681
    %v1801 = vpack.c.bf16 %v1684, %v1683
    %v1802 = vpack.c.bf16 %v1686, %v1685
    %v1803 = vpack.c.bf16 %v1688, %v1687
    %v1804 = vpack.c.bf16 %v1690, %v1689
    %v1805 = vpack.c.bf16 %v1692, %v1691
    %v1806 = vpack.c.bf16 %v1694, %v1693
    %v1807 = vpack.c.bf16 %v1696, %v1695
    %v1808 = vpack.c.bf16 %v1698, %v1697
    %v1809 = vpack.c.bf16 %v1700, %v1699
    %v1810 = vpack.c.bf16 %v1702, %v1701
    %v1811 = vpack.c.bf16 %v1704, %v1703
    %v1812 = vpack.c.bf16 %v1706, %v1705
    %v1813 = vpack.c.bf16 %v1708, %v1707
    %v1814 = vpack.c.bf16 %v1710, %v1709
    %v1815 = vpack.c.bf16 %v1712, %v1711
    %v1816 = vpack.c.bf16 %v1714, %v1713
    %v1817 = vpack.c.bf16 %v1716, %v1715
    %v1818 = vpack.c.bf16 %v1718, %v1717
    %v1819 = vpack.c.bf16 %v1720, %v1719
    %v1820 = vpack.c.bf16 %v1722, %v1721
    %v1821 = vpack.c.bf16 %v1724, %v1723
    %v1822 = vpack.c.bf16 %v1726, %v1725
    %v1823 = vpack.c.bf16 %v1728, %v1727
    %v1824 = vpack.c.bf16 %v1730, %v1729
    %v1825 = vpack.c.bf16 %v1732, %v1731
    %v1826 = vpack.c.bf16 %v1734, %v1733
    %v1827 = vpack.c.bf16 %v1736, %v1735
    %v1828 = vpack.c.bf16 %v1738, %v1737
    %v1829 = vpack.c.bf16 %v1740, %v1739
    %v1830 = vpack.c.bf16 %v1742, %v1741
    %v1831 = vpack.c.bf16 %v1744, %v1743
    %v1832 = vpack.c.bf16 %v1746, %v1745
    %v1833 = vpack.c.bf16 %v1748, %v1747
    %v1834 = vpack.c.bf16 %v1750, %v1749
    %v1835 = vpack.c.bf16 %v1752, %v1751
    %v1836 = vpack.c.bf16 %v1754, %v1753
    %v1837 = vpack.c.bf16 %v1756, %v1755
    %v1838 = vpack.c.bf16 %v1758, %v1757
    %v1839 = vpack.c.bf16 %v1760, %v1759
    %v1840 = vpack.c.bf16 %v1762, %v1761
    %v1841 = vpack.c.bf16 %v1764, %v1763
    %v1842 = vpack.c.bf16 %v1766, %v1765
    %v1843 = vpack.c.bf16 %v1768, %v1767
    %v1844 = vpack.c.bf16 %v1770, %v1769
    %v1845 = vpack.c.bf16 %v1772, %v1771
    %v1846 = vpack.c.bf16 %v1774, %v1773
    %v1847 = vpack.c.bf16 %v1776, %v1775
    %v1848 = vpack.c.bf16 %v1778, %v1777
    %v1849 = vpack.c.bf16 %v1780, %v1779
    %v1850 = vpack.c.bf16 %v1782, %v1781
    %v1851 = vpack.c.bf16 %v1784, %v1783
    %v1852 = vpack.c.bf16 %v1786, %v1785
    %v1853 = vpack.c.bf16 %v1788, %v1787
    %v1854 = vpack.c.bf16 %v1790, %v1789
    %v1855 = vld [vmem:[%s5] sm:$0xf]
    %v1856 = vld [vmem:[%s5 + $0x4] sm:$0xf]
    %v1857 = vld [vmem:[%s5 + $0x8] sm:$0xf]
    %v1858 = vld [vmem:[%s5 + $0xc] sm:$0xf]
    %v1859 = vld [vmem:[%s5 + $0x10] sm:$0xf]
    %v1860 = vld [vmem:[%s5 + $0x14] sm:$0xf]
    %v1861 = vld [vmem:[%s5 + $0x18] sm:$0xf]
    %v1862 = vld [vmem:[%s5 + $0x1c] sm:$0xf]
    %v1863 = vld [vmem:[%s6] sm:$0x1]
    %v1865 = vlaneseq
    %v1866 = vshrl.u32 %v1865, 7
    %v1867 = vsub.s32 0, %v1866
    %v1868 = vrot.slane %v1863, %v1867
    %v1878 = vunpack.c.l.b16 %v1855
    %v1879 = vunpack.c.l.b16 %v1856
    %v1880 = vunpack.c.l.b16 %v1857
    %v1881 = vunpack.c.l.b16 %v1858
    %v1882 = vunpack.c.l.b16 %v1859
    %v1883 = vunpack.c.l.b16 %v1860
    %v1884 = vunpack.c.l.b16 %v1861
    %v1885 = vunpack.c.l.b16 %v1862
    %v1886 = vpack.c.b16 %v1879, %v1878
    %v1887 = vpack.c.b16 %v1881, %v1880
    %v1888 = vpack.c.b16 %v1883, %v1882
    %v1889 = vpack.c.b16 %v1885, %v1884
    %vm1894 = vcmask 523264
    %v1896 = vsel %vm1894, %v1791, 0
    %v1899 = vsel %vm1894, %v1792, 0
    %v1902 = vsel %vm1894, %v1793, 0
    %v1905 = vsel %vm1894, %v1794, 0
    %v1908 = vsel %vm1894, %v1795, 0
    %v1911 = vsel %vm1894, %v1796, 0
    %v1914 = vsel %vm1894, %v1797, 0
    %v1917 = vsel %vm1894, %v1798, 0
    %v1920 = vsel %vm1894, %v1799, 0
    %v1923 = vsel %vm1894, %v1800, 0
    %v1926 = vsel %vm1894, %v1801, 0
    %v1929 = vsel %vm1894, %v1802, 0
    %v1932 = vsel %vm1894, %v1803, 0
    %v1935 = vsel %vm1894, %v1804, 0
    %v1938 = vsel %vm1894, %v1805, 0
    %v1941 = vsel %vm1894, %v1806, 0
    %v1944 = vsel %vm1894, %v1807, 0
    %v1947 = vsel %vm1894, %v1808, 0
    %v1950 = vsel %vm1894, %v1809, 0
    %v1953 = vsel %vm1894, %v1810, 0
    %v1956 = vsel %vm1894, %v1811, 0
    %v1959 = vsel %vm1894, %v1812, 0
    %v1962 = vsel %vm1894, %v1813, 0
    %v1965 = vsel %vm1894, %v1814, 0
    %v1968 = vsel %vm1894, %v1815, 0
    %v1971 = vsel %vm1894, %v1816, 0
    %v1974 = vsel %vm1894, %v1817, 0
    %v1977 = vsel %vm1894, %v1818, 0
    %v1980 = vsel %vm1894, %v1819, 0
    %v1983 = vsel %vm1894, %v1820, 0
    %v1986 = vsel %vm1894, %v1821, 0
    %v1989 = vsel %vm1894, %v1822, 0
    %v1992 = vsel %vm1894, %v1823, 0
    %v1995 = vsel %vm1894, %v1824, 0
    %v1998 = vsel %vm1894, %v1825, 0
    %v2001 = vsel %vm1894, %v1826, 0
    %v2004 = vsel %vm1894, %v1827, 0
    %v2007 = vsel %vm1894, %v1828, 0
    %v2010 = vsel %vm1894, %v1829, 0
    %v2013 = vsel %vm1894, %v1830, 0
    %v2016 = vsel %vm1894, %v1831, 0
    %v2019 = vsel %vm1894, %v1832, 0
    %v2022 = vsel %vm1894, %v1833, 0
    %v2025 = vsel %vm1894, %v1834, 0
    %v2028 = vsel %vm1894, %v1835, 0
    %v2031 = vsel %vm1894, %v1836, 0
    %v2034 = vsel %vm1894, %v1837, 0
    %v2037 = vsel %vm1894, %v1838, 0
    %v2040 = vsel %vm1894, %v1839, 0
    %v2043 = vsel %vm1894, %v1840, 0
    %v2046 = vsel %vm1894, %v1841, 0
    %v2049 = vsel %vm1894, %v1842, 0
    %v2052 = vsel %vm1894, %v1843, 0
    %v2055 = vsel %vm1894, %v1844, 0
    %v2058 = vsel %vm1894, %v1845, 0
    %v2061 = vsel %vm1894, %v1846, 0
    %v2064 = vsel %vm1894, %v1847, 0
    %v2067 = vsel %vm1894, %v1848, 0
    %v2070 = vsel %vm1894, %v1849, 0
    %v2073 = vsel %vm1894, %v1850, 0
    %v2076 = vsel %vm1894, %v1851, 0
    %v2079 = vsel %vm1894, %v1852, 0
    %v2082 = vsel %vm1894, %v1853, 0
    %v2085 = vsel %vm1894, %v1854, 0
    %2087 = vmatprep.subr.bf16.mxu0 0
    %2088 = vmatpush1.bf16.msra.mxu0 0
    %2089 = vmatprep.subr.bf16.mxu0 0
    %2090 = vmatpush1.bf16.msra.mxu0 0
    %2091 = vmatprep.subr.bf16.mxu0 0
    %2092 = vmatpush1.bf16.msra.mxu0 0
    %2093 = vmatprep.subr.bf16.mxu0 0
    %2094 = vmatpush1.bf16.msra.mxu0 0
    %2095 = vmatprep.subr.bf16.mxu0 0
    %2096 = vmatpush1.bf16.msra.mxu0 %v1889
    %2097 = vmatprep.subr.bf16.mxu0 0
    %2098 = vmatpush1.bf16.msra.mxu0 %v1888
    %2099 = vmatprep.subr.bf16.mxu0 0
    %2100 = vmatpush1.bf16.msra.mxu0 %v1887
    %2101 = vmatprep.subr.bf16.mxu0 0
    %2102 = vmatpush1.bf16.msra.mxu0 %v1886
    %2103 = vmatprep.subr.bf16.mxu0 0
    %2104 = vmatpush2.bf16.msra.mxu0 0
    %2105 = vmatprep.subr.bf16.mxu0 0
    %2106 = vmatpush2.bf16.msra.mxu0 0
    %2107 = vmatprep.subr.bf16.mxu0 0
    %2108 = vmatpush2.bf16.msra.mxu0 0
    %2109 = vmatprep.subr.bf16.mxu0 0
    %2110 = vmatpush2.bf16.msra.mxu0 0
    %2111 = vmatprep.subr.bf16.mxu0 0
    %2112 = vmatpush2.bf16.msra.mxu0 0
    %2113 = vmatprep.subr.bf16.mxu0 0
    %2114 = vmatpush2.bf16.msra.mxu0 0
    %2115 = vmatprep.subr.bf16.mxu0 0
    %2116 = vmatpush2.bf16.msra.mxu0 0
    %2117 = vmatprep.subr.bf16.mxu0 0
    %2118 = vmatpush2.bf16.msra.mxu0 0
    %2119 = vmatprep.mubr.bf16.mxu0 0
    %2120 = vmatmul.mubr.bf16.gmra.mxu0 %v1896
    %v2121 = vpop.f32.mrf.mxu0
    %v2122 = vadd.f32 %v1868, %v2121
    %v2123 = vpop.f32.mrf.mxu0
    %v2124 = vpop.f32.mrf.mxu0
    %v2125 = vadd.f32 %v1868, %v2124
    %v2126 = vpop.f32.mrf.mxu0
    %2127 = vmatprep.mubr.bf16.mxu0 0
    %2128 = vmatmul.mubr.bf16.gmra.mxu0 %v1899
    %v2129 = vpop.f32.mrf.mxu0
    %v2130 = vadd.f32 %v1868, %v2129
    %v2131 = vpop.f32.mrf.mxu0
    %v2132 = vpop.f32.mrf.mxu0
    %v2133 = vadd.f32 %v1868, %v2132
    %v2134 = vpop.f32.mrf.mxu0
    %2135 = vmatprep.mubr.bf16.mxu0 0
    %2136 = vmatmul.mubr.bf16.gmra.mxu0 %v1902
    %v2137 = vpop.f32.mrf.mxu0
    %v2138 = vadd.f32 %v1868, %v2137
    %v2139 = vpop.f32.mrf.mxu0
    %v2140 = vpop.f32.mrf.mxu0
    %v2141 = vadd.f32 %v1868, %v2140
    %v2142 = vpop.f32.mrf.mxu0
    %2143 = vmatprep.mubr.bf16.mxu0 0
    %2144 = vmatmul.mubr.bf16.gmra.mxu0 %v1905
    %v2145 = vpop.f32.mrf.mxu0
    %v2146 = vadd.f32 %v1868, %v2145
    %v2147 = vpop.f32.mrf.mxu0
    %v2148 = vpop.f32.mrf.mxu0
    %v2149 = vadd.f32 %v1868, %v2148
    %v2150 = vpop.f32.mrf.mxu0
    %2151 = vmatprep.mubr.bf16.mxu0 0
    %2152 = vmatmul.mubr.bf16.gmra.mxu0 %v1908
    %v2153 = vpop.f32.mrf.mxu0
    %v2154 = vadd.f32 %v1868, %v2153
    %v2155 = vpop.f32.mrf.mxu0
    %v2156 = vpop.f32.mrf.mxu0
    %v2157 = vadd.f32 %v1868, %v2156
    %v2158 = vpop.f32.mrf.mxu0
    %2159 = vmatprep.mubr.bf16.mxu0 0
    %2160 = vmatmul.mubr.bf16.gmra.mxu0 %v1911
    %v2161 = vpop.f32.mrf.mxu0
    %v2162 = vadd.f32 %v1868, %v2161
    %v2163 = vpop.f32.mrf.mxu0
    %v2164 = vpop.f32.mrf.mxu0
    %v2165 = vadd.f32 %v1868, %v2164
    %v2166 = vpop.f32.mrf.mxu0
    %2167 = vmatprep.mubr.bf16.mxu0 0
    %2168 = vmatmul.mubr.bf16.gmra.mxu0 %v1914
    %v2169 = vpop.f32.mrf.mxu0
    %v2170 = vadd.f32 %v1868, %v2169
    %v2171 = vpop.f32.mrf.mxu0
    %v2172 = vpop.f32.mrf.mxu0
    %v2173 = vadd.f32 %v1868, %v2172
    %v2174 = vpop.f32.mrf.mxu0
    %2175 = vmatprep.mubr.bf16.mxu0 0
    %2176 = vmatmul.mubr.bf16.gmra.mxu0 %v1917
    %v2177 = vpop.f32.mrf.mxu0
    %v2178 = vadd.f32 %v1868, %v2177
    %v2179 = vpop.f32.mrf.mxu0
    %v2180 = vpop.f32.mrf.mxu0
    %v2181 = vadd.f32 %v1868, %v2180
    %v2182 = vpop.f32.mrf.mxu0
    %2183 = vmatprep.mubr.bf16.mxu0 0
    %2184 = vmatmul.mubr.bf16.gmra.mxu0 %v1920
    %v2185 = vpop.f32.mrf.mxu0
    %v2186 = vadd.f32 %v1868, %v2185
    %v2187 = vpop.f32.mrf.mxu0
    %v2188 = vpop.f32.mrf.mxu0
    %v2189 = vadd.f32 %v1868, %v2188
    %v2190 = vpop.f32.mrf.mxu0
    %2191 = vmatprep.mubr.bf16.mxu0 0
    %2192 = vmatmul.mubr.bf16.gmra.mxu0 %v1923
    %v2193 = vpop.f32.mrf.mxu0
    %v2194 = vadd.f32 %v1868, %v2193
    %v2195 = vpop.f32.mrf.mxu0
    %v2196 = vpop.f32.mrf.mxu0
    %v2197 = vadd.f32 %v1868, %v2196
    %v2198 = vpop.f32.mrf.mxu0
    %2199 = vmatprep.mubr.bf16.mxu0 0
    %2200 = vmatmul.mubr.bf16.gmra.mxu0 %v1926
    %v2201 = vpop.f32.mrf.mxu0
    %v2202 = vadd.f32 %v1868, %v2201
    %v2203 = vpop.f32.mrf.mxu0
    %v2204 = vpop.f32.mrf.mxu0
    %v2205 = vadd.f32 %v1868, %v2204
    %v2206 = vpop.f32.mrf.mxu0
    %2207 = vmatprep.mubr.bf16.mxu0 0
    %2208 = vmatmul.mubr.bf16.gmra.mxu0 %v1929
    %v2209 = vpop.f32.mrf.mxu0
    %v2210 = vadd.f32 %v1868, %v2209
    %v2211 = vpop.f32.mrf.mxu0
    %v2212 = vpop.f32.mrf.mxu0
    %v2213 = vadd.f32 %v1868, %v2212
    %v2214 = vpop.f32.mrf.mxu0
    %2215 = vmatprep.mubr.bf16.mxu0 0
    %2216 = vmatmul.mubr.bf16.gmra.mxu0 %v1932
    %v2217 = vpop.f32.mrf.mxu0
    %v2218 = vadd.f32 %v1868, %v2217
    %v2219 = vpop.f32.mrf.mxu0
    %v2220 = vpop.f32.mrf.mxu0
    %v2221 = vadd.f32 %v1868, %v2220
    %v2222 = vpop.f32.mrf.mxu0
    %2223 = vmatprep.mubr.bf16.mxu0 0
    %2224 = vmatmul.mubr.bf16.gmra.mxu0 %v1935
    %v2225 = vpop.f32.mrf.mxu0
    %v2226 = vadd.f32 %v1868, %v2225
    %v2227 = vpop.f32.mrf.mxu0
    %v2228 = vpop.f32.mrf.mxu0
    %v2229 = vadd.f32 %v1868, %v2228
    %v2230 = vpop.f32.mrf.mxu0
    %2231 = vmatprep.mubr.bf16.mxu0 0
    %2232 = vmatmul.mubr.bf16.gmra.mxu0 %v1938
    %v2233 = vpop.f32.mrf.mxu0
    %v2234 = vadd.f32 %v1868, %v2233
    %v2235 = vpop.f32.mrf.mxu0
    %v2236 = vpop.f32.mrf.mxu0
    %v2237 = vadd.f32 %v1868, %v2236
    %v2238 = vpop.f32.mrf.mxu0
    %2239 = vmatprep.mubr.bf16.mxu0 0
    %2240 = vmatmul.mubr.bf16.gmra.mxu0 %v1941
    %v2241 = vpop.f32.mrf.mxu0
    %v2242 = vadd.f32 %v1868, %v2241
    %v2243 = vpop.f32.mrf.mxu0
    %v2244 = vpop.f32.mrf.mxu0
    %v2245 = vadd.f32 %v1868, %v2244
    %v2246 = vpop.f32.mrf.mxu0
    %2247 = vmatprep.mubr.bf16.mxu0 0
    %2248 = vmatmul.mubr.bf16.gmra.mxu0 %v1944
    %v2249 = vpop.f32.mrf.mxu0
    %v2250 = vadd.f32 %v1868, %v2249
    %v2251 = vpop.f32.mrf.mxu0
    %v2252 = vpop.f32.mrf.mxu0
    %v2253 = vadd.f32 %v1868, %v2252
    %v2254 = vpop.f32.mrf.mxu0
    %2255 = vmatprep.mubr.bf16.mxu0 0
    %2256 = vmatmul.mubr.bf16.gmra.mxu0 %v1947
    %v2257 = vpop.f32.mrf.mxu0
    %v2258 = vadd.f32 %v1868, %v2257
    %v2259 = vpop.f32.mrf.mxu0
    %v2260 = vpop.f32.mrf.mxu0
    %v2261 = vadd.f32 %v1868, %v2260
    %v2262 = vpop.f32.mrf.mxu0
    %2263 = vmatprep.mubr.bf16.mxu0 0
    %2264 = vmatmul.mubr.bf16.gmra.mxu0 %v1950
    %v2265 = vpop.f32.mrf.mxu0
    %v2266 = vadd.f32 %v1868, %v2265
    %v2267 = vpop.f32.mrf.mxu0
    %v2268 = vpop.f32.mrf.mxu0
    %v2269 = vadd.f32 %v1868, %v2268
    %v2270 = vpop.f32.mrf.mxu0
    %2271 = vmatprep.mubr.bf16.mxu0 0
    %2272 = vmatmul.mubr.bf16.gmra.mxu0 %v1953
    %v2273 = vpop.f32.mrf.mxu0
    %v2274 = vadd.f32 %v1868, %v2273
    %v2275 = vpop.f32.mrf.mxu0
    %v2276 = vpop.f32.mrf.mxu0
    %v2277 = vadd.f32 %v1868, %v2276
    %v2278 = vpop.f32.mrf.mxu0
    %2279 = vmatprep.mubr.bf16.mxu0 0
    %2280 = vmatmul.mubr.bf16.gmra.mxu0 %v1956
    %v2281 = vpop.f32.mrf.mxu0
    %v2282 = vadd.f32 %v1868, %v2281
    %v2283 = vpop.f32.mrf.mxu0
    %v2284 = vpop.f32.mrf.mxu0
    %v2285 = vadd.f32 %v1868, %v2284
    %v2286 = vpop.f32.mrf.mxu0
    %2287 = vmatprep.mubr.bf16.mxu0 0
    %2288 = vmatmul.mubr.bf16.gmra.mxu0 %v1959
    %v2289 = vpop.f32.mrf.mxu0
    %v2290 = vadd.f32 %v1868, %v2289
    %v2291 = vpop.f32.mrf.mxu0
    %v2292 = vpop.f32.mrf.mxu0
    %v2293 = vadd.f32 %v1868, %v2292
    %v2294 = vpop.f32.mrf.mxu0
    %2295 = vmatprep.mubr.bf16.mxu0 0
    %2296 = vmatmul.mubr.bf16.gmra.mxu0 %v1962
    %v2297 = vpop.f32.mrf.mxu0
    %v2298 = vadd.f32 %v1868, %v2297
    %v2299 = vpop.f32.mrf.mxu0
    %v2300 = vpop.f32.mrf.mxu0
    %v2301 = vadd.f32 %v1868, %v2300
    %v2302 = vpop.f32.mrf.mxu0
    %2303 = vmatprep.mubr.bf16.mxu0 0
    %2304 = vmatmul.mubr.bf16.gmra.mxu0 %v1965
    %v2305 = vpop.f32.mrf.mxu0
    %v2306 = vadd.f32 %v1868, %v2305
    %v2307 = vpop.f32.mrf.mxu0
    %v2308 = vpop.f32.mrf.mxu0
    %v2309 = vadd.f32 %v1868, %v2308
    %v2310 = vpop.f32.mrf.mxu0
    %2311 = vmatprep.mubr.bf16.mxu0 0
    %2312 = vmatmul.mubr.bf16.gmra.mxu0 %v1968
    %v2313 = vpop.f32.mrf.mxu0
    %v2314 = vadd.f32 %v1868, %v2313
    %v2315 = vpop.f32.mrf.mxu0
    %v2316 = vpop.f32.mrf.mxu0
    %v2317 = vadd.f32 %v1868, %v2316
    %v2318 = vpop.f32.mrf.mxu0
    %2319 = vmatprep.mubr.bf16.mxu0 0
    %2320 = vmatmul.mubr.bf16.gmra.mxu0 %v1971
    %v2321 = vpop.f32.mrf.mxu0
    %v2322 = vadd.f32 %v1868, %v2321
    %v2323 = vpop.f32.mrf.mxu0
    %v2324 = vpop.f32.mrf.mxu0
    %v2325 = vadd.f32 %v1868, %v2324
    %v2326 = vpop.f32.mrf.mxu0
    %2327 = vmatprep.mubr.bf16.mxu0 0
    %2328 = vmatmul.mubr.bf16.gmra.mxu0 %v1974
    %v2329 = vpop.f32.mrf.mxu0
    %v2330 = vadd.f32 %v1868, %v2329
    %v2331 = vpop.f32.mrf.mxu0
    %v2332 = vpop.f32.mrf.mxu0
    %v2333 = vadd.f32 %v1868, %v2332
    %v2334 = vpop.f32.mrf.mxu0
    %2335 = vmatprep.mubr.bf16.mxu0 0
    %2336 = vmatmul.mubr.bf16.gmra.mxu0 %v1977
    %v2337 = vpop.f32.mrf.mxu0
    %v2338 = vadd.f32 %v1868, %v2337
    %v2339 = vpop.f32.mrf.mxu0
    %v2340 = vpop.f32.mrf.mxu0
    %v2341 = vadd.f32 %v1868, %v2340
    %v2342 = vpop.f32.mrf.mxu0
    %2343 = vmatprep.mubr.bf16.mxu0 0
    %2344 = vmatmul.mubr.bf16.gmra.mxu0 %v1980
    %v2345 = vpop.f32.mrf.mxu0
    %v2346 = vadd.f32 %v1868, %v2345
    %v2347 = vpop.f32.mrf.mxu0
    %v2348 = vpop.f32.mrf.mxu0
    %v2349 = vadd.f32 %v1868, %v2348
    %v2350 = vpop.f32.mrf.mxu0
    %2351 = vmatprep.mubr.bf16.mxu0 0
    %2352 = vmatmul.mubr.bf16.gmra.mxu0 %v1983
    %v2353 = vpop.f32.mrf.mxu0
    %v2354 = vadd.f32 %v1868, %v2353
    %v2355 = vpop.f32.mrf.mxu0
    %v2356 = vpop.f32.mrf.mxu0
    %v2357 = vadd.f32 %v1868, %v2356
    %v2358 = vpop.f32.mrf.mxu0
    %2359 = vmatprep.mubr.bf16.mxu0 0
    %2360 = vmatmul.mubr.bf16.gmra.mxu0 %v1986
    %v2361 = vpop.f32.mrf.mxu0
    %v2362 = vadd.f32 %v1868, %v2361
    %v2363 = vpop.f32.mrf.mxu0
    %v2364 = vpop.f32.mrf.mxu0
    %v2365 = vadd.f32 %v1868, %v2364
    %v2366 = vpop.f32.mrf.mxu0
    %2367 = vmatprep.mubr.bf16.mxu0 0
    %2368 = vmatmul.mubr.bf16.gmra.mxu0 %v1989
    %v2369 = vpop.f32.mrf.mxu0
    %v2370 = vadd.f32 %v1868, %v2369
    %v2371 = vpop.f32.mrf.mxu0
    %v2372 = vpop.f32.mrf.mxu0
    %v2373 = vadd.f32 %v1868, %v2372
    %v2374 = vpop.f32.mrf.mxu0
    %2375 = vmatprep.mubr.bf16.mxu0 0
    %2376 = vmatmul.mubr.bf16.gmra.mxu0 %v1992
    %v2377 = vpop.f32.mrf.mxu0
    %v2378 = vadd.f32 %v1868, %v2377
    %v2379 = vpop.f32.mrf.mxu0
    %v2380 = vpop.f32.mrf.mxu0
    %v2381 = vadd.f32 %v1868, %v2380
    %v2382 = vpop.f32.mrf.mxu0
    %2383 = vmatprep.mubr.bf16.mxu0 0
    %2384 = vmatmul.mubr.bf16.gmra.mxu0 %v1995
    %v2385 = vpop.f32.mrf.mxu0
    %v2386 = vadd.f32 %v1868, %v2385
    %v2387 = vpop.f32.mrf.mxu0
    %v2388 = vpop.f32.mrf.mxu0
    %v2389 = vadd.f32 %v1868, %v2388
    %v2390 = vpop.f32.mrf.mxu0
    %2391 = vmatprep.mubr.bf16.mxu0 0
    %2392 = vmatmul.mubr.bf16.gmra.mxu0 %v1998
    %v2393 = vpop.f32.mrf.mxu0
    %v2394 = vadd.f32 %v1868, %v2393
    %v2395 = vpop.f32.mrf.mxu0
    %v2396 = vpop.f32.mrf.mxu0
    %v2397 = vadd.f32 %v1868, %v2396
    %v2398 = vpop.f32.mrf.mxu0
    %2399 = vmatprep.mubr.bf16.mxu0 0
    %2400 = vmatmul.mubr.bf16.gmra.mxu0 %v2001
    %v2401 = vpop.f32.mrf.mxu0
    %v2402 = vadd.f32 %v1868, %v2401
    %v2403 = vpop.f32.mrf.mxu0
    %v2404 = vpop.f32.mrf.mxu0
    %v2405 = vadd.f32 %v1868, %v2404
    %v2406 = vpop.f32.mrf.mxu0
    %2407 = vmatprep.mubr.bf16.mxu0 0
    %2408 = vmatmul.mubr.bf16.gmra.mxu0 %v2004
    %v2409 = vpop.f32.mrf.mxu0
    %v2410 = vadd.f32 %v1868, %v2409
    %v2411 = vpop.f32.mrf.mxu0
    %v2412 = vpop.f32.mrf.mxu0
    %v2413 = vadd.f32 %v1868, %v2412
    %v2414 = vpop.f32.mrf.mxu0
    %2415 = vmatprep.mubr.bf16.mxu0 0
    %2416 = vmatmul.mubr.bf16.gmra.mxu0 %v2007
    %v2417 = vpop.f32.mrf.mxu0
    %v2418 = vadd.f32 %v1868, %v2417
    %v2419 = vpop.f32.mrf.mxu0
    %v2420 = vpop.f32.mrf.mxu0
    %v2421 = vadd.f32 %v1868, %v2420
    %v2422 = vpop.f32.mrf.mxu0
    %2423 = vmatprep.mubr.bf16.mxu0 0
    %2424 = vmatmul.mubr.bf16.gmra.mxu0 %v2010
    %v2425 = vpop.f32.mrf.mxu0
    %v2426 = vadd.f32 %v1868, %v2425
    %v2427 = vpop.f32.mrf.mxu0
    %v2428 = vpop.f32.mrf.mxu0
    %v2429 = vadd.f32 %v1868, %v2428
    %v2430 = vpop.f32.mrf.mxu0
    %2431 = vmatprep.mubr.bf16.mxu0 0
    %2432 = vmatmul.mubr.bf16.gmra.mxu0 %v2013
    %v2433 = vpop.f32.mrf.mxu0
    %v2434 = vadd.f32 %v1868, %v2433
    %v2435 = vpop.f32.mrf.mxu0
    %v2436 = vpop.f32.mrf.mxu0
    %v2437 = vadd.f32 %v1868, %v2436
    %v2438 = vpop.f32.mrf.mxu0
    %2439 = vmatprep.mubr.bf16.mxu0 0
    %2440 = vmatmul.mubr.bf16.gmra.mxu0 %v2016
    %v2441 = vpop.f32.mrf.mxu0
    %v2442 = vadd.f32 %v1868, %v2441
    %v2443 = vpop.f32.mrf.mxu0
    %v2444 = vpop.f32.mrf.mxu0
    %v2445 = vadd.f32 %v1868, %v2444
    %v2446 = vpop.f32.mrf.mxu0
    %2447 = vmatprep.mubr.bf16.mxu0 0
    %2448 = vmatmul.mubr.bf16.gmra.mxu0 %v2019
    %v2449 = vpop.f32.mrf.mxu0
    %v2450 = vadd.f32 %v1868, %v2449
    %v2451 = vpop.f32.mrf.mxu0
    %v2452 = vpop.f32.mrf.mxu0
    %v2453 = vadd.f32 %v1868, %v2452
    %v2454 = vpop.f32.mrf.mxu0
    %2455 = vmatprep.mubr.bf16.mxu0 0
    %2456 = vmatmul.mubr.bf16.gmra.mxu0 %v2022
    %v2457 = vpop.f32.mrf.mxu0
    %v2458 = vadd.f32 %v1868, %v2457
    %v2459 = vpop.f32.mrf.mxu0
    %v2460 = vpop.f32.mrf.mxu0
    %v2461 = vadd.f32 %v1868, %v2460
    %v2462 = vpop.f32.mrf.mxu0
    %2463 = vmatprep.mubr.bf16.mxu0 0
    %2464 = vmatmul.mubr.bf16.gmra.mxu0 %v2025
    %v2465 = vpop.f32.mrf.mxu0
    %v2466 = vadd.f32 %v1868, %v2465
    %v2467 = vpop.f32.mrf.mxu0
    %v2468 = vpop.f32.mrf.mxu0
    %v2469 = vadd.f32 %v1868, %v2468
    %v2470 = vpop.f32.mrf.mxu0
    %2471 = vmatprep.mubr.bf16.mxu0 0
    %2472 = vmatmul.mubr.bf16.gmra.mxu0 %v2028
    %v2473 = vpop.f32.mrf.mxu0
    %v2474 = vadd.f32 %v1868, %v2473
    %v2475 = vpop.f32.mrf.mxu0
    %v2476 = vpop.f32.mrf.mxu0
    %v2477 = vadd.f32 %v1868, %v2476
    %v2478 = vpop.f32.mrf.mxu0
    %2479 = vmatprep.mubr.bf16.mxu0 0
    %2480 = vmatmul.mubr.bf16.gmra.mxu0 %v2031
    %v2481 = vpop.f32.mrf.mxu0
    %v2482 = vadd.f32 %v1868, %v2481
    %v2483 = vpop.f32.mrf.mxu0
    %v2484 = vpop.f32.mrf.mxu0
    %v2485 = vadd.f32 %v1868, %v2484
    %v2486 = vpop.f32.mrf.mxu0
    %2487 = vmatprep.mubr.bf16.mxu0 0
    %2488 = vmatmul.mubr.bf16.gmra.mxu0 %v2034
    %v2489 = vpop.f32.mrf.mxu0
    %v2490 = vadd.f32 %v1868, %v2489
    %v2491 = vpop.f32.mrf.mxu0
    %v2492 = vpop.f32.mrf.mxu0
    %v2493 = vadd.f32 %v1868, %v2492
    %v2494 = vpop.f32.mrf.mxu0
    %2495 = vmatprep.mubr.bf16.mxu0 0
    %2496 = vmatmul.mubr.bf16.gmra.mxu0 %v2037
    %v2497 = vpop.f32.mrf.mxu0
    %v2498 = vadd.f32 %v1868, %v2497
    %v2499 = vpop.f32.mrf.mxu0
    %v2500 = vpop.f32.mrf.mxu0
    %v2501 = vadd.f32 %v1868, %v2500
    %v2502 = vpop.f32.mrf.mxu0
    %2503 = vmatprep.mubr.bf16.mxu0 0
    %2504 = vmatmul.mubr.bf16.gmra.mxu0 %v2040
    %v2505 = vpop.f32.mrf.mxu0
    %v2506 = vadd.f32 %v1868, %v2505
    %v2507 = vpop.f32.mrf.mxu0
    %v2508 = vpop.f32.mrf.mxu0
    %v2509 = vadd.f32 %v1868, %v2508
    %v2510 = vpop.f32.mrf.mxu0
    %2511 = vmatprep.mubr.bf16.mxu0 0
    %2512 = vmatmul.mubr.bf16.gmra.mxu0 %v2043
    %v2513 = vpop.f32.mrf.mxu0
    %v2514 = vadd.f32 %v1868, %v2513
    %v2515 = vpop.f32.mrf.mxu0
    %v2516 = vpop.f32.mrf.mxu0
    %v2517 = vadd.f32 %v1868, %v2516
    %v2518 = vpop.f32.mrf.mxu0
    %2519 = vmatprep.mubr.bf16.mxu0 0
    %2520 = vmatmul.mubr.bf16.gmra.mxu0 %v2046
    %v2521 = vpop.f32.mrf.mxu0
    %v2522 = vadd.f32 %v1868, %v2521
    %v2523 = vpop.f32.mrf.mxu0
    %v2524 = vpop.f32.mrf.mxu0
    %v2525 = vadd.f32 %v1868, %v2524
    %v2526 = vpop.f32.mrf.mxu0
    %2527 = vmatprep.mubr.bf16.mxu0 0
    %2528 = vmatmul.mubr.bf16.gmra.mxu0 %v2049
    %v2529 = vpop.f32.mrf.mxu0
    %v2530 = vadd.f32 %v1868, %v2529
    %v2531 = vpop.f32.mrf.mxu0
    %v2532 = vpop.f32.mrf.mxu0
    %v2533 = vadd.f32 %v1868, %v2532
    %v2534 = vpop.f32.mrf.mxu0
    %2535 = vmatprep.mubr.bf16.mxu0 0
    %2536 = vmatmul.mubr.bf16.gmra.mxu0 %v2052
    %v2537 = vpop.f32.mrf.mxu0
    %v2538 = vadd.f32 %v1868, %v2537
    %v2539 = vpop.f32.mrf.mxu0
    %v2540 = vpop.f32.mrf.mxu0
    %v2541 = vadd.f32 %v1868, %v2540
    %v2542 = vpop.f32.mrf.mxu0
    %2543 = vmatprep.mubr.bf16.mxu0 0
    %2544 = vmatmul.mubr.bf16.gmra.mxu0 %v2055
    %v2545 = vpop.f32.mrf.mxu0
    %v2546 = vadd.f32 %v1868, %v2545
    %v2547 = vpop.f32.mrf.mxu0
    %v2548 = vpop.f32.mrf.mxu0
    %v2549 = vadd.f32 %v1868, %v2548
    %v2550 = vpop.f32.mrf.mxu0
    %2551 = vmatprep.mubr.bf16.mxu0 0
    %2552 = vmatmul.mubr.bf16.gmra.mxu0 %v2058
    %v2553 = vpop.f32.mrf.mxu0
    %v2554 = vadd.f32 %v1868, %v2553
    %v2555 = vpop.f32.mrf.mxu0
    %v2556 = vpop.f32.mrf.mxu0
    %v2557 = vadd.f32 %v1868, %v2556
    %v2558 = vpop.f32.mrf.mxu0
    %2559 = vmatprep.mubr.bf16.mxu0 0
    %2560 = vmatmul.mubr.bf16.gmra.mxu0 %v2061
    %v2561 = vpop.f32.mrf.mxu0
    %v2562 = vadd.f32 %v1868, %v2561
    %v2563 = vpop.f32.mrf.mxu0
    %v2564 = vpop.f32.mrf.mxu0
    %v2565 = vadd.f32 %v1868, %v2564
    %v2566 = vpop.f32.mrf.mxu0
    %2567 = vmatprep.mubr.bf16.mxu0 0
    %2568 = vmatmul.mubr.bf16.gmra.mxu0 %v2064
    %v2569 = vpop.f32.mrf.mxu0
    %v2570 = vadd.f32 %v1868, %v2569
    %v2571 = vpop.f32.mrf.mxu0
    %v2572 = vpop.f32.mrf.mxu0
    %v2573 = vadd.f32 %v1868, %v2572
    %v2574 = vpop.f32.mrf.mxu0
    %2575 = vmatprep.mubr.bf16.mxu0 0
    %2576 = vmatmul.mubr.bf16.gmra.mxu0 %v2067
    %v2577 = vpop.f32.mrf.mxu0
    %v2578 = vadd.f32 %v1868, %v2577
    %v2579 = vpop.f32.mrf.mxu0
    %v2580 = vpop.f32.mrf.mxu0
    %v2581 = vadd.f32 %v1868, %v2580
    %v2582 = vpop.f32.mrf.mxu0
    %2583 = vmatprep.mubr.bf16.mxu0 0
    %2584 = vmatmul.mubr.bf16.gmra.mxu0 %v2070
    %v2585 = vpop.f32.mrf.mxu0
    %v2586 = vadd.f32 %v1868, %v2585
    %v2587 = vpop.f32.mrf.mxu0
    %v2588 = vpop.f32.mrf.mxu0
    %v2589 = vadd.f32 %v1868, %v2588
    %v2590 = vpop.f32.mrf.mxu0
    %2591 = vmatprep.mubr.bf16.mxu0 0
    %2592 = vmatmul.mubr.bf16.gmra.mxu0 %v2073
    %v2593 = vpop.f32.mrf.mxu0
    %v2594 = vadd.f32 %v1868, %v2593
    %v2595 = vpop.f32.mrf.mxu0
    %v2596 = vpop.f32.mrf.mxu0
    %v2597 = vadd.f32 %v1868, %v2596
    %v2598 = vpop.f32.mrf.mxu0
    %2599 = vmatprep.mubr.bf16.mxu0 0
    %2600 = vmatmul.mubr.bf16.gmra.mxu0 %v2076
    %v2601 = vpop.f32.mrf.mxu0
    %v2602 = vadd.f32 %v1868, %v2601
    %v2603 = vpop.f32.mrf.mxu0
    %v2604 = vpop.f32.mrf.mxu0
    %v2605 = vadd.f32 %v1868, %v2604
    %v2606 = vpop.f32.mrf.mxu0
    %2607 = vmatprep.mubr.bf16.mxu0 0
    %2608 = vmatmul.mubr.bf16.gmra.mxu0 %v2079
    %v2609 = vpop.f32.mrf.mxu0
    %v2610 = vadd.f32 %v1868, %v2609
    %v2611 = vpop.f32.mrf.mxu0
    %v2612 = vpop.f32.mrf.mxu0
    %v2613 = vadd.f32 %v1868, %v2612
    %v2614 = vpop.f32.mrf.mxu0
    %2615 = vmatprep.mubr.bf16.mxu0 0
    %2616 = vmatmul.mubr.bf16.gmra.mxu0 %v2082
    %v2617 = vpop.f32.mrf.mxu0
    %v2618 = vadd.f32 %v1868, %v2617
    %v2619 = vpop.f32.mrf.mxu0
    %v2620 = vpop.f32.mrf.mxu0
    %v2621 = vadd.f32 %v1868, %v2620
    %v2622 = vpop.f32.mrf.mxu0
    %2623 = vmatprep.mubr.bf16.mxu0 0
    %2624 = vmatmul.mubr.bf16.gmra.mxu0 %v2085
    %v2625 = vpop.f32.mrf.mxu0
    %v2626 = vadd.f32 %v1868, %v2625
    %v2627 = vpop.f32.mrf.mxu0
    %v2628 = vpop.f32.mrf.mxu0
    %v2629 = vadd.f32 %v1868, %v2628
    %v2630 = vpop.f32.mrf.mxu0
    %2631 = vdwg.mxu0
    %v2632 = vmax.f32 %v2122, 0.0
    %v2633 = vmax.f32 %v2125, 0.0
    %v2634 = vmax.f32 %v2130, 0.0
    %v2635 = vmax.f32 %v2133, 0.0
    %v2636 = vmax.f32 %v2138, 0.0
    %v2637 = vmax.f32 %v2141, 0.0
    %v2638 = vmax.f32 %v2146, 0.0
    %v2639 = vmax.f32 %v2149, 0.0
    %v2640 = vmax.f32 %v2154, 0.0
    %v2641 = vmax.f32 %v2157, 0.0
    %v2642 = vmax.f32 %v2162, 0.0
    %v2643 = vmax.f32 %v2165, 0.0
    %v2644 = vmax.f32 %v2170, 0.0
    %v2645 = vmax.f32 %v2173, 0.0
    %v2646 = vmax.f32 %v2178, 0.0
    %v2647 = vmax.f32 %v2181, 0.0
    %v2648 = vmax.f32 %v2186, 0.0
    %v2649 = vmax.f32 %v2189, 0.0
    %v2650 = vmax.f32 %v2194, 0.0
    %v2651 = vmax.f32 %v2197, 0.0
    %v2652 = vmax.f32 %v2202, 0.0
    %v2653 = vmax.f32 %v2205, 0.0
    %v2654 = vmax.f32 %v2210, 0.0
    %v2655 = vmax.f32 %v2213, 0.0
    %v2656 = vmax.f32 %v2218, 0.0
    %v2657 = vmax.f32 %v2221, 0.0
    %v2658 = vmax.f32 %v2226, 0.0
    %v2659 = vmax.f32 %v2229, 0.0
    %v2660 = vmax.f32 %v2234, 0.0
    %v2661 = vmax.f32 %v2237, 0.0
    %v2662 = vmax.f32 %v2242, 0.0
    %v2663 = vmax.f32 %v2245, 0.0
    %v2664 = vmax.f32 %v2250, 0.0
    %v2665 = vmax.f32 %v2253, 0.0
    %v2666 = vmax.f32 %v2258, 0.0
    %v2667 = vmax.f32 %v2261, 0.0
    %v2668 = vmax.f32 %v2266, 0.0
    %v2669 = vmax.f32 %v2269, 0.0
    %v2670 = vmax.f32 %v2274, 0.0
    %v2671 = vmax.f32 %v2277, 0.0
    %v2672 = vmax.f32 %v2282, 0.0
    %v2673 = vmax.f32 %v2285, 0.0
    %v2674 = vmax.f32 %v2290, 0.0
    %v2675 = vmax.f32 %v2293, 0.0
    %v2676 = vmax.f32 %v2298, 0.0
    %v2677 = vmax.f32 %v2301, 0.0
    %v2678 = vmax.f32 %v2306, 0.0
    %v2679 = vmax.f32 %v2309, 0.0
    %v2680 = vmax.f32 %v2314, 0.0
    %v2681 = vmax.f32 %v2317, 0.0
    %v2682 = vmax.f32 %v2322, 0.0
    %v2683 = vmax.f32 %v2325, 0.0
    %v2684 = vmax.f32 %v2330, 0.0
    %v2685 = vmax.f32 %v2333, 0.0
    %v2686 = vmax.f32 %v2338, 0.0
    %v2687 = vmax.f32 %v2341, 0.0
    %v2688 = vmax.f32 %v2346, 0.0
    %v2689 = vmax.f32 %v2349, 0.0
    %v2690 = vmax.f32 %v2354, 0.0
    %v2691 = vmax.f32 %v2357, 0.0
    %v2692 = vmax.f32 %v2362, 0.0
    %v2693 = vmax.f32 %v2365, 0.0
    %v2694 = vmax.f32 %v2370, 0.0
    %v2695 = vmax.f32 %v2373, 0.0
    %v2696 = vmax.f32 %v2378, 0.0
    %v2697 = vmax.f32 %v2381, 0.0
    %v2698 = vmax.f32 %v2386, 0.0
    %v2699 = vmax.f32 %v2389, 0.0
    %v2700 = vmax.f32 %v2394, 0.0
    %v2701 = vmax.f32 %v2397, 0.0
    %v2702 = vmax.f32 %v2402, 0.0
    %v2703 = vmax.f32 %v2405, 0.0
    %v2704 = vmax.f32 %v2410, 0.0
    %v2705 = vmax.f32 %v2413, 0.0
    %v2706 = vmax.f32 %v2418, 0.0
    %v2707 = vmax.f32 %v2421, 0.0
    %v2708 = vmax.f32 %v2426, 0.0
    %v2709 = vmax.f32 %v2429, 0.0
    %v2710 = vmax.f32 %v2434, 0.0
    %v2711 = vmax.f32 %v2437, 0.0
    %v2712 = vmax.f32 %v2442, 0.0
    %v2713 = vmax.f32 %v2445, 0.0
    %v2714 = vmax.f32 %v2450, 0.0
    %v2715 = vmax.f32 %v2453, 0.0
    %v2716 = vmax.f32 %v2458, 0.0
    %v2717 = vmax.f32 %v2461, 0.0
    %v2718 = vmax.f32 %v2466, 0.0
    %v2719 = vmax.f32 %v2469, 0.0
    %v2720 = vmax.f32 %v2474, 0.0
    %v2721 = vmax.f32 %v2477, 0.0
    %v2722 = vmax.f32 %v2482, 0.0
    %v2723 = vmax.f32 %v2485, 0.0
    %v2724 = vmax.f32 %v2490, 0.0
    %v2725 = vmax.f32 %v2493, 0.0
    %v2726 = vmax.f32 %v2498, 0.0
    %v2727 = vmax.f32 %v2501, 0.0
    %v2728 = vmax.f32 %v2506, 0.0
    %v2729 = vmax.f32 %v2509, 0.0
    %v2730 = vmax.f32 %v2514, 0.0
    %v2731 = vmax.f32 %v2517, 0.0
    %v2732 = vmax.f32 %v2522, 0.0
    %v2733 = vmax.f32 %v2525, 0.0
    %v2734 = vmax.f32 %v2530, 0.0
    %v2735 = vmax.f32 %v2533, 0.0
    %v2736 = vmax.f32 %v2538, 0.0
    %v2737 = vmax.f32 %v2541, 0.0
    %v2738 = vmax.f32 %v2546, 0.0
    %v2739 = vmax.f32 %v2549, 0.0
    %v2740 = vmax.f32 %v2554, 0.0
    %v2741 = vmax.f32 %v2557, 0.0
    %v2742 = vmax.f32 %v2562, 0.0
    %v2743 = vmax.f32 %v2565, 0.0
    %v2744 = vmax.f32 %v2570, 0.0
    %v2745 = vmax.f32 %v2573, 0.0
    %v2746 = vmax.f32 %v2578, 0.0
    %v2747 = vmax.f32 %v2581, 0.0
    %v2748 = vmax.f32 %v2586, 0.0
    %v2749 = vmax.f32 %v2589, 0.0
    %v2750 = vmax.f32 %v2594, 0.0
    %v2751 = vmax.f32 %v2597, 0.0
    %v2752 = vmax.f32 %v2602, 0.0
    %v2753 = vmax.f32 %v2605, 0.0
    %v2754 = vmax.f32 %v2610, 0.0
    %v2755 = vmax.f32 %v2613, 0.0
    %v2756 = vmax.f32 %v2618, 0.0
    %v2757 = vmax.f32 %v2621, 0.0
    %v2758 = vmax.f32 %v2626, 0.0
    %v2759 = vmax.f32 %v2629, 0.0
    %v2760 = vpack.c.bf16 %v2633, %v2632
    %v2761 = vpack.c.bf16 %v2635, %v2634
    %v2762 = vpack.c.bf16 %v2637, %v2636
    %v2763 = vpack.c.bf16 %v2639, %v2638
    %v2764 = vpack.c.bf16 %v2641, %v2640
    %v2765 = vpack.c.bf16 %v2643, %v2642
    %v2766 = vpack.c.bf16 %v2645, %v2644
    %v2767 = vpack.c.bf16 %v2647, %v2646
    %v2768 = vpack.c.bf16 %v2649, %v2648
    %v2769 = vpack.c.bf16 %v2651, %v2650
    %v2770 = vpack.c.bf16 %v2653, %v2652
    %v2771 = vpack.c.bf16 %v2655, %v2654
    %v2772 = vpack.c.bf16 %v2657, %v2656
    %v2773 = vpack.c.bf16 %v2659, %v2658
    %v2774 = vpack.c.bf16 %v2661, %v2660
    %v2775 = vpack.c.bf16 %v2663, %v2662
    %v2776 = vpack.c.bf16 %v2665, %v2664
    %v2777 = vpack.c.bf16 %v2667, %v2666
    %v2778 = vpack.c.bf16 %v2669, %v2668
    %v2779 = vpack.c.bf16 %v2671, %v2670
    %v2780 = vpack.c.bf16 %v2673, %v2672
    %v2781 = vpack.c.bf16 %v2675, %v2674
    %v2782 = vpack.c.bf16 %v2677, %v2676
    %v2783 = vpack.c.bf16 %v2679, %v2678
    %v2784 = vpack.c.bf16 %v2681, %v2680
    %v2785 = vpack.c.bf16 %v2683, %v2682
    %v2786 = vpack.c.bf16 %v2685, %v2684
    %v2787 = vpack.c.bf16 %v2687, %v2686
    %v2788 = vpack.c.bf16 %v2689, %v2688
    %v2789 = vpack.c.bf16 %v2691, %v2690
    %v2790 = vpack.c.bf16 %v2693, %v2692
    %v2791 = vpack.c.bf16 %v2695, %v2694
    %v2792 = vpack.c.bf16 %v2697, %v2696
    %v2793 = vpack.c.bf16 %v2699, %v2698
    %v2794 = vpack.c.bf16 %v2701, %v2700
    %v2795 = vpack.c.bf16 %v2703, %v2702
    %v2796 = vpack.c.bf16 %v2705, %v2704
    %v2797 = vpack.c.bf16 %v2707, %v2706
    %v2798 = vpack.c.bf16 %v2709, %v2708
    %v2799 = vpack.c.bf16 %v2711, %v2710
    %v2800 = vpack.c.bf16 %v2713, %v2712
    %v2801 = vpack.c.bf16 %v2715, %v2714
    %v2802 = vpack.c.bf16 %v2717, %v2716
    %v2803 = vpack.c.bf16 %v2719, %v2718
    %v2804 = vpack.c.bf16 %v2721, %v2720
    %v2805 = vpack.c.bf16 %v2723, %v2722
    %v2806 = vpack.c.bf16 %v2725, %v2724
    %v2807 = vpack.c.bf16 %v2727, %v2726
    %v2808 = vpack.c.bf16 %v2729, %v2728
    %v2809 = vpack.c.bf16 %v2731, %v2730
    %v2810 = vpack.c.bf16 %v2733, %v2732
    %v2811 = vpack.c.bf16 %v2735, %v2734
    %v2812 = vpack.c.bf16 %v2737, %v2736
    %v2813 = vpack.c.bf16 %v2739, %v2738
    %v2814 = vpack.c.bf16 %v2741, %v2740
    %v2815 = vpack.c.bf16 %v2743, %v2742
    %v2816 = vpack.c.bf16 %v2745, %v2744
    %v2817 = vpack.c.bf16 %v2747, %v2746
    %v2818 = vpack.c.bf16 %v2749, %v2748
    %v2819 = vpack.c.bf16 %v2751, %v2750
    %v2820 = vpack.c.bf16 %v2753, %v2752
    %v2821 = vpack.c.bf16 %v2755, %v2754
    %v2822 = vpack.c.bf16 %v2757, %v2756
    %v2823 = vpack.c.bf16 %v2759, %v2758
    %v2824 = vld [vmem:[%s7] sm:$0xf]
    %v2825 = vld [vmem:[%s7 + $0x4] sm:$0xf]
    %v2826 = vld [vmem:[%s7 + $0x8] sm:$0xf]
    %v2827 = vld [vmem:[%s7 + $0xc] sm:$0xf]
    %v2828 = vld [vmem:[%s8] sm:$0x1]
    %v2830 = vlaneseq
    %v2831 = vshrl.u32 %v2830, 7
    %v2832 = vsub.s32 0, %v2831
    %v2833 = vrot.slane %v2828, %v2832
    %v2839 = vunpack.c.l.b16 %v2824
    %v2840 = vunpack.c.l.b16 %v2825
    %v2841 = vunpack.c.l.b16 %v2826
    %v2842 = vunpack.c.l.b16 %v2827
    %v2843 = vpack.c.b16 %v2840, %v2839
    %v2844 = vpack.c.b16 %v2842, %v2841
    %vm2847 = vcmask 261120
    %v2849 = vsel %vm2847, %v2760, 0
    %v2852 = vsel %vm2847, %v2761, 0
    %v2855 = vsel %vm2847, %v2762, 0
    %v2858 = vsel %vm2847, %v2763, 0
    %v2861 = vsel %vm2847, %v2764, 0
    %v2864 = vsel %vm2847, %v2765, 0
    %v2867 = vsel %vm2847, %v2766, 0
    %v2870 = vsel %vm2847, %v2767, 0
    %v2873 = vsel %vm2847, %v2768, 0
    %v2876 = vsel %vm2847, %v2769, 0
    %v2879 = vsel %vm2847, %v2770, 0
    %v2882 = vsel %vm2847, %v2771, 0
    %v2885 = vsel %vm2847, %v2772, 0
    %v2888 = vsel %vm2847, %v2773, 0
    %v2891 = vsel %vm2847, %v2774, 0
    %v2894 = vsel %vm2847, %v2775, 0
    %v2897 = vsel %vm2847, %v2776, 0
    %v2900 = vsel %vm2847, %v2777, 0
    %v2903 = vsel %vm2847, %v2778, 0
    %v2906 = vsel %vm2847, %v2779, 0
    %v2909 = vsel %vm2847, %v2780, 0
    %v2912 = vsel %vm2847, %v2781, 0
    %v2915 = vsel %vm2847, %v2782, 0
    %v2918 = vsel %vm2847, %v2783, 0
    %v2921 = vsel %vm2847, %v2784, 0
    %v2924 = vsel %vm2847, %v2785, 0
    %v2927 = vsel %vm2847, %v2786, 0
    %v2930 = vsel %vm2847, %v2787, 0
    %v2933 = vsel %vm2847, %v2788, 0
    %v2936 = vsel %vm2847, %v2789, 0
    %v2939 = vsel %vm2847, %v2790, 0
    %v2942 = vsel %vm2847, %v2791, 0
    %v2945 = vsel %vm2847, %v2792, 0
    %v2948 = vsel %vm2847, %v2793, 0
    %v2951 = vsel %vm2847, %v2794, 0
    %v2954 = vsel %vm2847, %v2795, 0
    %v2957 = vsel %vm2847, %v2796, 0
    %v2960 = vsel %vm2847, %v2797, 0
    %v2963 = vsel %vm2847, %v2798, 0
    %v2966 = vsel %vm2847, %v2799, 0
    %v2969 = vsel %vm2847, %v2800, 0
    %v2972 = vsel %vm2847, %v2801, 0
    %v2975 = vsel %vm2847, %v2802, 0
    %v2978 = vsel %vm2847, %v2803, 0
    %v2981 = vsel %vm2847, %v2804, 0
    %v2984 = vsel %vm2847, %v2805, 0
    %v2987 = vsel %vm2847, %v2806, 0
    %v2990 = vsel %vm2847, %v2807, 0
    %v2993 = vsel %vm2847, %v2808, 0
    %v2996 = vsel %vm2847, %v2809, 0
    %v2999 = vsel %vm2847, %v2810, 0
    %v3002 = vsel %vm2847, %v2811, 0
    %v3005 = vsel %vm2847, %v2812, 0
    %v3008 = vsel %vm2847, %v2813, 0
    %v3011 = vsel %vm2847, %v2814, 0
    %v3014 = vsel %vm2847, %v2815, 0
    %v3017 = vsel %vm2847, %v2816, 0
    %v3020 = vsel %vm2847, %v2817, 0
    %v3023 = vsel %vm2847, %v2818, 0
    %v3026 = vsel %vm2847, %v2819, 0
    %v3029 = vsel %vm2847, %v2820, 0
    %v3032 = vsel %vm2847, %v2821, 0
    %v3035 = vsel %vm2847, %v2822, 0
    %v3038 = vsel %vm2847, %v2823, 0
    %3040 = vmatprep.subr.bf16.mxu0 0
    %3041 = vmatpush1.bf16.msra.mxu0 0
    %3042 = vmatprep.subr.bf16.mxu0 0
    %3043 = vmatpush1.bf16.msra.mxu0 0
    %3044 = vmatprep.subr.bf16.mxu0 0
    %3045 = vmatpush1.bf16.msra.mxu0 0
    %3046 = vmatprep.subr.bf16.mxu0 0
    %3047 = vmatpush1.bf16.msra.mxu0 0
    %3048 = vmatprep.subr.bf16.mxu0 0
    %3049 = vmatpush1.bf16.msra.mxu0 0
    %3050 = vmatprep.subr.bf16.mxu0 0
    %3051 = vmatpush1.bf16.msra.mxu0 0
    %3052 = vmatprep.subr.bf16.mxu0 0
    %3053 = vmatpush1.bf16.msra.mxu0 %v2844
    %3054 = vmatprep.subr.bf16.mxu0 0
    %3055 = vmatpush1.bf16.msra.mxu0 %v2843
    %3056 = vmatprep.subr.bf16.mxu0 0
    %3057 = vmatpush2.bf16.msra.mxu0 0
    %3058 = vmatprep.subr.bf16.mxu0 0
    %3059 = vmatpush2.bf16.msra.mxu0 0
    %3060 = vmatprep.subr.bf16.mxu0 0
    %3061 = vmatpush2.bf16.msra.mxu0 0
    %3062 = vmatprep.subr.bf16.mxu0 0
    %3063 = vmatpush2.bf16.msra.mxu0 0
    %3064 = vmatprep.subr.bf16.mxu0 0
    %3065 = vmatpush2.bf16.msra.mxu0 0
    %3066 = vmatprep.subr.bf16.mxu0 0
    %3067 = vmatpush2.bf16.msra.mxu0 0
    %3068 = vmatprep.subr.bf16.mxu0 0
    %3069 = vmatpush2.bf16.msra.mxu0 0
    %3070 = vmatprep.subr.bf16.mxu0 0
    %3071 = vmatpush2.bf16.msra.mxu0 0
    %3072 = vmatprep.mubr.bf16.mxu0 0
    %3073 = vmatmul.mubr.bf16.gmra.mxu0 %v2849
    %v3074 = vpop.f32.mrf.mxu0
    %v3075 = vadd.f32 %v2833, %v3074
    %v3076 = vpop.f32.mrf.mxu0
    %v3077 = vpop.f32.mrf.mxu0
    %v3078 = vadd.f32 %v2833, %v3077
    %v3079 = vpop.f32.mrf.mxu0
    %3080 = vmatprep.mubr.bf16.mxu0 0
    %3081 = vmatmul.mubr.bf16.gmra.mxu0 %v2852
    %v3082 = vpop.f32.mrf.mxu0
    %v3083 = vadd.f32 %v2833, %v3082
    %v3084 = vpop.f32.mrf.mxu0
    %v3085 = vpop.f32.mrf.mxu0
    %v3086 = vadd.f32 %v2833, %v3085
    %v3087 = vpop.f32.mrf.mxu0
    %3088 = vmatprep.mubr.bf16.mxu0 0
    %3089 = vmatmul.mubr.bf16.gmra.mxu0 %v2855
    %v3090 = vpop.f32.mrf.mxu0
    %v3091 = vadd.f32 %v2833, %v3090
    %v3092 = vpop.f32.mrf.mxu0
    %v3093 = vpop.f32.mrf.mxu0
    %v3094 = vadd.f32 %v2833, %v3093
    %v3095 = vpop.f32.mrf.mxu0
    %3096 = vmatprep.mubr.bf16.mxu0 0
    %3097 = vmatmul.mubr.bf16.gmra.mxu0 %v2858
    %v3098 = vpop.f32.mrf.mxu0
    %v3099 = vadd.f32 %v2833, %v3098
    %v3100 = vpop.f32.mrf.mxu0
    %v3101 = vpop.f32.mrf.mxu0
    %v3102 = vadd.f32 %v2833, %v3101
    %v3103 = vpop.f32.mrf.mxu0
    %3104 = vmatprep.mubr.bf16.mxu0 0
    %3105 = vmatmul.mubr.bf16.gmra.mxu0 %v2861
    %v3106 = vpop.f32.mrf.mxu0
    %v3107 = vadd.f32 %v2833, %v3106
    %v3108 = vpop.f32.mrf.mxu0
    %v3109 = vpop.f32.mrf.mxu0
    %v3110 = vadd.f32 %v2833, %v3109
    %v3111 = vpop.f32.mrf.mxu0
    %3112 = vmatprep.mubr.bf16.mxu0 0
    %3113 = vmatmul.mubr.bf16.gmra.mxu0 %v2864
    %v3114 = vpop.f32.mrf.mxu0
    %v3115 = vadd.f32 %v2833, %v3114
    %v3116 = vpop.f32.mrf.mxu0
    %v3117 = vpop.f32.mrf.mxu0
    %v3118 = vadd.f32 %v2833, %v3117
    %v3119 = vpop.f32.mrf.mxu0
    %3120 = vmatprep.mubr.bf16.mxu0 0
    %3121 = vmatmul.mubr.bf16.gmra.mxu0 %v2867
    %v3122 = vpop.f32.mrf.mxu0
    %v3123 = vadd.f32 %v2833, %v3122
    %v3124 = vpop.f32.mrf.mxu0
    %v3125 = vpop.f32.mrf.mxu0
    %v3126 = vadd.f32 %v2833, %v3125
    %v3127 = vpop.f32.mrf.mxu0
    %3128 = vmatprep.mubr.bf16.mxu0 0
    %3129 = vmatmul.mubr.bf16.gmra.mxu0 %v2870
    %v3130 = vpop.f32.mrf.mxu0
    %v3131 = vadd.f32 %v2833, %v3130
    %v3132 = vpop.f32.mrf.mxu0
    %v3133 = vpop.f32.mrf.mxu0
    %v3134 = vadd.f32 %v2833, %v3133
    %v3135 = vpop.f32.mrf.mxu0
    %3136 = vmatprep.mubr.bf16.mxu0 0
    %3137 = vmatmul.mubr.bf16.gmra.mxu0 %v2873
    %v3138 = vpop.f32.mrf.mxu0
    %v3139 = vadd.f32 %v2833, %v3138
    %v3140 = vpop.f32.mrf.mxu0
    %v3141 = vpop.f32.mrf.mxu0
    %v3142 = vadd.f32 %v2833, %v3141
    %v3143 = vpop.f32.mrf.mxu0
    %3144 = vmatprep.mubr.bf16.mxu0 0
    %3145 = vmatmul.mubr.bf16.gmra.mxu0 %v2876
    %v3146 = vpop.f32.mrf.mxu0
    %v3147 = vadd.f32 %v2833, %v3146
    %v3148 = vpop.f32.mrf.mxu0
    %v3149 = vpop.f32.mrf.mxu0
    %v3150 = vadd.f32 %v2833, %v3149
    %v3151 = vpop.f32.mrf.mxu0
    %3152 = vmatprep.mubr.bf16.mxu0 0
    %3153 = vmatmul.mubr.bf16.gmra.mxu0 %v2879
    %v3154 = vpop.f32.mrf.mxu0
    %v3155 = vadd.f32 %v2833, %v3154
    %v3156 = vpop.f32.mrf.mxu0
    %v3157 = vpop.f32.mrf.mxu0
    %v3158 = vadd.f32 %v2833, %v3157
    %v3159 = vpop.f32.mrf.mxu0
    %3160 = vmatprep.mubr.bf16.mxu0 0
    %3161 = vmatmul.mubr.bf16.gmra.mxu0 %v2882
    %v3162 = vpop.f32.mrf.mxu0
    %v3163 = vadd.f32 %v2833, %v3162
    %v3164 = vpop.f32.mrf.mxu0
    %v3165 = vpop.f32.mrf.mxu0
    %v3166 = vadd.f32 %v2833, %v3165
    %v3167 = vpop.f32.mrf.mxu0
    %3168 = vmatprep.mubr.bf16.mxu0 0
    %3169 = vmatmul.mubr.bf16.gmra.mxu0 %v2885
    %v3170 = vpop.f32.mrf.mxu0
    %v3171 = vadd.f32 %v2833, %v3170
    %v3172 = vpop.f32.mrf.mxu0
    %v3173 = vpop.f32.mrf.mxu0
    %v3174 = vadd.f32 %v2833, %v3173
    %v3175 = vpop.f32.mrf.mxu0
    %3176 = vmatprep.mubr.bf16.mxu0 0
    %3177 = vmatmul.mubr.bf16.gmra.mxu0 %v2888
    %v3178 = vpop.f32.mrf.mxu0
    %v3179 = vadd.f32 %v2833, %v3178
    %v3180 = vpop.f32.mrf.mxu0
    %v3181 = vpop.f32.mrf.mxu0
    %v3182 = vadd.f32 %v2833, %v3181
    %v3183 = vpop.f32.mrf.mxu0
    %3184 = vmatprep.mubr.bf16.mxu0 0
    %3185 = vmatmul.mubr.bf16.gmra.mxu0 %v2891
    %v3186 = vpop.f32.mrf.mxu0
    %v3187 = vadd.f32 %v2833, %v3186
    %v3188 = vpop.f32.mrf.mxu0
    %v3189 = vpop.f32.mrf.mxu0
    %v3190 = vadd.f32 %v2833, %v3189
    %v3191 = vpop.f32.mrf.mxu0
    %3192 = vmatprep.mubr.bf16.mxu0 0
    %3193 = vmatmul.mubr.bf16.gmra.mxu0 %v2894
    %v3194 = vpop.f32.mrf.mxu0
    %v3195 = vadd.f32 %v2833, %v3194
    %v3196 = vpop.f32.mrf.mxu0
    %v3197 = vpop.f32.mrf.mxu0
    %v3198 = vadd.f32 %v2833, %v3197
    %v3199 = vpop.f32.mrf.mxu0
    %3200 = vmatprep.mubr.bf16.mxu0 0
    %3201 = vmatmul.mubr.bf16.gmra.mxu0 %v2897
    %v3202 = vpop.f32.mrf.mxu0
    %v3203 = vadd.f32 %v2833, %v3202
    %v3204 = vpop.f32.mrf.mxu0
    %v3205 = vpop.f32.mrf.mxu0
    %v3206 = vadd.f32 %v2833, %v3205
    %v3207 = vpop.f32.mrf.mxu0
    %3208 = vmatprep.mubr.bf16.mxu0 0
    %3209 = vmatmul.mubr.bf16.gmra.mxu0 %v2900
    %v3210 = vpop.f32.mrf.mxu0
    %v3211 = vadd.f32 %v2833, %v3210
    %v3212 = vpop.f32.mrf.mxu0
    %v3213 = vpop.f32.mrf.mxu0
    %v3214 = vadd.f32 %v2833, %v3213
    %v3215 = vpop.f32.mrf.mxu0
    %3216 = vmatprep.mubr.bf16.mxu0 0
    %3217 = vmatmul.mubr.bf16.gmra.mxu0 %v2903
    %v3218 = vpop.f32.mrf.mxu0
    %v3219 = vadd.f32 %v2833, %v3218
    %v3220 = vpop.f32.mrf.mxu0
    %v3221 = vpop.f32.mrf.mxu0
    %v3222 = vadd.f32 %v2833, %v3221
    %v3223 = vpop.f32.mrf.mxu0
    %3224 = vmatprep.mubr.bf16.mxu0 0
    %3225 = vmatmul.mubr.bf16.gmra.mxu0 %v2906
    %v3226 = vpop.f32.mrf.mxu0
    %v3227 = vadd.f32 %v2833, %v3226
    %v3228 = vpop.f32.mrf.mxu0
    %v3229 = vpop.f32.mrf.mxu0
    %v3230 = vadd.f32 %v2833, %v3229
    %v3231 = vpop.f32.mrf.mxu0
    %3232 = vmatprep.mubr.bf16.mxu0 0
    %3233 = vmatmul.mubr.bf16.gmra.mxu0 %v2909
    %v3234 = vpop.f32.mrf.mxu0
    %v3235 = vadd.f32 %v2833, %v3234
    %v3236 = vpop.f32.mrf.mxu0
    %v3237 = vpop.f32.mrf.mxu0
    %v3238 = vadd.f32 %v2833, %v3237
    %v3239 = vpop.f32.mrf.mxu0
    %3240 = vmatprep.mubr.bf16.mxu0 0
    %3241 = vmatmul.mubr.bf16.gmra.mxu0 %v2912
    %v3242 = vpop.f32.mrf.mxu0
    %v3243 = vadd.f32 %v2833, %v3242
    %v3244 = vpop.f32.mrf.mxu0
    %v3245 = vpop.f32.mrf.mxu0
    %v3246 = vadd.f32 %v2833, %v3245
    %v3247 = vpop.f32.mrf.mxu0
    %3248 = vmatprep.mubr.bf16.mxu0 0
    %3249 = vmatmul.mubr.bf16.gmra.mxu0 %v2915
    %v3250 = vpop.f32.mrf.mxu0
    %v3251 = vadd.f32 %v2833, %v3250
    %v3252 = vpop.f32.mrf.mxu0
    %v3253 = vpop.f32.mrf.mxu0
    %v3254 = vadd.f32 %v2833, %v3253
    %v3255 = vpop.f32.mrf.mxu0
    %3256 = vmatprep.mubr.bf16.mxu0 0
    %3257 = vmatmul.mubr.bf16.gmra.mxu0 %v2918
    %v3258 = vpop.f32.mrf.mxu0
    %v3259 = vadd.f32 %v2833, %v3258
    %v3260 = vpop.f32.mrf.mxu0
    %v3261 = vpop.f32.mrf.mxu0
    %v3262 = vadd.f32 %v2833, %v3261
    %v3263 = vpop.f32.mrf.mxu0
    %3264 = vmatprep.mubr.bf16.mxu0 0
    %3265 = vmatmul.mubr.bf16.gmra.mxu0 %v2921
    %v3266 = vpop.f32.mrf.mxu0
    %v3267 = vadd.f32 %v2833, %v3266
    %v3268 = vpop.f32.mrf.mxu0
    %v3269 = vpop.f32.mrf.mxu0
    %v3270 = vadd.f32 %v2833, %v3269
    %v3271 = vpop.f32.mrf.mxu0
    %3272 = vmatprep.mubr.bf16.mxu0 0
    %3273 = vmatmul.mubr.bf16.gmra.mxu0 %v2924
    %v3274 = vpop.f32.mrf.mxu0
    %v3275 = vadd.f32 %v2833, %v3274
    %v3276 = vpop.f32.mrf.mxu0
    %v3277 = vpop.f32.mrf.mxu0
    %v3278 = vadd.f32 %v2833, %v3277
    %v3279 = vpop.f32.mrf.mxu0
    %3280 = vmatprep.mubr.bf16.mxu0 0
    %3281 = vmatmul.mubr.bf16.gmra.mxu0 %v2927
    %v3282 = vpop.f32.mrf.mxu0
    %v3283 = vadd.f32 %v2833, %v3282
    %v3284 = vpop.f32.mrf.mxu0
    %v3285 = vpop.f32.mrf.mxu0
    %v3286 = vadd.f32 %v2833, %v3285
    %v3287 = vpop.f32.mrf.mxu0
    %3288 = vmatprep.mubr.bf16.mxu0 0
    %3289 = vmatmul.mubr.bf16.gmra.mxu0 %v2930
    %v3290 = vpop.f32.mrf.mxu0
    %v3291 = vadd.f32 %v2833, %v3290
    %v3292 = vpop.f32.mrf.mxu0
    %v3293 = vpop.f32.mrf.mxu0
    %v3294 = vadd.f32 %v2833, %v3293
    %v3295 = vpop.f32.mrf.mxu0
    %3296 = vmatprep.mubr.bf16.mxu0 0
    %3297 = vmatmul.mubr.bf16.gmra.mxu0 %v2933
    %v3298 = vpop.f32.mrf.mxu0
    %v3299 = vadd.f32 %v2833, %v3298
    %v3300 = vpop.f32.mrf.mxu0
    %v3301 = vpop.f32.mrf.mxu0
    %v3302 = vadd.f32 %v2833, %v3301
    %v3303 = vpop.f32.mrf.mxu0
    %3304 = vmatprep.mubr.bf16.mxu0 0
    %3305 = vmatmul.mubr.bf16.gmra.mxu0 %v2936
    %v3306 = vpop.f32.mrf.mxu0
    %v3307 = vadd.f32 %v2833, %v3306
    %v3308 = vpop.f32.mrf.mxu0
    %v3309 = vpop.f32.mrf.mxu0
    %v3310 = vadd.f32 %v2833, %v3309
    %v3311 = vpop.f32.mrf.mxu0
    %3312 = vmatprep.mubr.bf16.mxu0 0
    %3313 = vmatmul.mubr.bf16.gmra.mxu0 %v2939
    %v3314 = vpop.f32.mrf.mxu0
    %v3315 = vadd.f32 %v2833, %v3314
    %v3316 = vpop.f32.mrf.mxu0
    %v3317 = vpop.f32.mrf.mxu0
    %v3318 = vadd.f32 %v2833, %v3317
    %v3319 = vpop.f32.mrf.mxu0
    %3320 = vmatprep.mubr.bf16.mxu0 0
    %3321 = vmatmul.mubr.bf16.gmra.mxu0 %v2942
    %v3322 = vpop.f32.mrf.mxu0
    %v3323 = vadd.f32 %v2833, %v3322
    %v3324 = vpop.f32.mrf.mxu0
    %v3325 = vpop.f32.mrf.mxu0
    %v3326 = vadd.f32 %v2833, %v3325
    %v3327 = vpop.f32.mrf.mxu0
    %3328 = vmatprep.mubr.bf16.mxu0 0
    %3329 = vmatmul.mubr.bf16.gmra.mxu0 %v2945
    %v3330 = vpop.f32.mrf.mxu0
    %v3331 = vadd.f32 %v2833, %v3330
    %v3332 = vpop.f32.mrf.mxu0
    %v3333 = vpop.f32.mrf.mxu0
    %v3334 = vadd.f32 %v2833, %v3333
    %v3335 = vpop.f32.mrf.mxu0
    %3336 = vmatprep.mubr.bf16.mxu0 0
    %3337 = vmatmul.mubr.bf16.gmra.mxu0 %v2948
    %v3338 = vpop.f32.mrf.mxu0
    %v3339 = vadd.f32 %v2833, %v3338
    %v3340 = vpop.f32.mrf.mxu0
    %v3341 = vpop.f32.mrf.mxu0
    %v3342 = vadd.f32 %v2833, %v3341
    %v3343 = vpop.f32.mrf.mxu0
    %3344 = vmatprep.mubr.bf16.mxu0 0
    %3345 = vmatmul.mubr.bf16.gmra.mxu0 %v2951
    %v3346 = vpop.f32.mrf.mxu0
    %v3347 = vadd.f32 %v2833, %v3346
    %v3348 = vpop.f32.mrf.mxu0
    %v3349 = vpop.f32.mrf.mxu0
    %v3350 = vadd.f32 %v2833, %v3349
    %v3351 = vpop.f32.mrf.mxu0
    %3352 = vmatprep.mubr.bf16.mxu0 0
    %3353 = vmatmul.mubr.bf16.gmra.mxu0 %v2954
    %v3354 = vpop.f32.mrf.mxu0
    %v3355 = vadd.f32 %v2833, %v3354
    %v3356 = vpop.f32.mrf.mxu0
    %v3357 = vpop.f32.mrf.mxu0
    %v3358 = vadd.f32 %v2833, %v3357
    %v3359 = vpop.f32.mrf.mxu0
    %3360 = vmatprep.mubr.bf16.mxu0 0
    %3361 = vmatmul.mubr.bf16.gmra.mxu0 %v2957
    %v3362 = vpop.f32.mrf.mxu0
    %v3363 = vadd.f32 %v2833, %v3362
    %v3364 = vpop.f32.mrf.mxu0
    %v3365 = vpop.f32.mrf.mxu0
    %v3366 = vadd.f32 %v2833, %v3365
    %v3367 = vpop.f32.mrf.mxu0
    %3368 = vmatprep.mubr.bf16.mxu0 0
    %3369 = vmatmul.mubr.bf16.gmra.mxu0 %v2960
    %v3370 = vpop.f32.mrf.mxu0
    %v3371 = vadd.f32 %v2833, %v3370
    %v3372 = vpop.f32.mrf.mxu0
    %v3373 = vpop.f32.mrf.mxu0
    %v3374 = vadd.f32 %v2833, %v3373
    %v3375 = vpop.f32.mrf.mxu0
    %3376 = vmatprep.mubr.bf16.mxu0 0
    %3377 = vmatmul.mubr.bf16.gmra.mxu0 %v2963
    %v3378 = vpop.f32.mrf.mxu0
    %v3379 = vadd.f32 %v2833, %v3378
    %v3380 = vpop.f32.mrf.mxu0
    %v3381 = vpop.f32.mrf.mxu0
    %v3382 = vadd.f32 %v2833, %v3381
    %v3383 = vpop.f32.mrf.mxu0
    %3384 = vmatprep.mubr.bf16.mxu0 0
    %3385 = vmatmul.mubr.bf16.gmra.mxu0 %v2966
    %v3386 = vpop.f32.mrf.mxu0
    %v3387 = vadd.f32 %v2833, %v3386
    %v3388 = vpop.f32.mrf.mxu0
    %v3389 = vpop.f32.mrf.mxu0
    %v3390 = vadd.f32 %v2833, %v3389
    %v3391 = vpop.f32.mrf.mxu0
    %3392 = vmatprep.mubr.bf16.mxu0 0
    %3393 = vmatmul.mubr.bf16.gmra.mxu0 %v2969
    %v3394 = vpop.f32.mrf.mxu0
    %v3395 = vadd.f32 %v2833, %v3394
    %v3396 = vpop.f32.mrf.mxu0
    %v3397 = vpop.f32.mrf.mxu0
    %v3398 = vadd.f32 %v2833, %v3397
    %v3399 = vpop.f32.mrf.mxu0
    %3400 = vmatprep.mubr.bf16.mxu0 0
    %3401 = vmatmul.mubr.bf16.gmra.mxu0 %v2972
    %v3402 = vpop.f32.mrf.mxu0
    %v3403 = vadd.f32 %v2833, %v3402
    %v3404 = vpop.f32.mrf.mxu0
    %v3405 = vpop.f32.mrf.mxu0
    %v3406 = vadd.f32 %v2833, %v3405
    %v3407 = vpop.f32.mrf.mxu0
    %3408 = vmatprep.mubr.bf16.mxu0 0
    %3409 = vmatmul.mubr.bf16.gmra.mxu0 %v2975
    %v3410 = vpop.f32.mrf.mxu0
    %v3411 = vadd.f32 %v2833, %v3410
    %v3412 = vpop.f32.mrf.mxu0
    %v3413 = vpop.f32.mrf.mxu0
    %v3414 = vadd.f32 %v2833, %v3413
    %v3415 = vpop.f32.mrf.mxu0
    %3416 = vmatprep.mubr.bf16.mxu0 0
    %3417 = vmatmul.mubr.bf16.gmra.mxu0 %v2978
    %v3418 = vpop.f32.mrf.mxu0
    %v3419 = vadd.f32 %v2833, %v3418
    %v3420 = vpop.f32.mrf.mxu0
    %v3421 = vpop.f32.mrf.mxu0
    %v3422 = vadd.f32 %v2833, %v3421
    %v3423 = vpop.f32.mrf.mxu0
    %3424 = vmatprep.mubr.bf16.mxu0 0
    %3425 = vmatmul.mubr.bf16.gmra.mxu0 %v2981
    %v3426 = vpop.f32.mrf.mxu0
    %v3427 = vadd.f32 %v2833, %v3426
    %v3428 = vpop.f32.mrf.mxu0
    %v3429 = vpop.f32.mrf.mxu0
    %v3430 = vadd.f32 %v2833, %v3429
    %v3431 = vpop.f32.mrf.mxu0
    %3432 = vmatprep.mubr.bf16.mxu0 0
    %3433 = vmatmul.mubr.bf16.gmra.mxu0 %v2984
    %v3434 = vpop.f32.mrf.mxu0
    %v3435 = vadd.f32 %v2833, %v3434
    %v3436 = vpop.f32.mrf.mxu0
    %v3437 = vpop.f32.mrf.mxu0
    %v3438 = vadd.f32 %v2833, %v3437
    %v3439 = vpop.f32.mrf.mxu0
    %3440 = vmatprep.mubr.bf16.mxu0 0
    %3441 = vmatmul.mubr.bf16.gmra.mxu0 %v2987
    %v3442 = vpop.f32.mrf.mxu0
    %v3443 = vadd.f32 %v2833, %v3442
    %v3444 = vpop.f32.mrf.mxu0
    %v3445 = vpop.f32.mrf.mxu0
    %v3446 = vadd.f32 %v2833, %v3445
    %v3447 = vpop.f32.mrf.mxu0
    %3448 = vmatprep.mubr.bf16.mxu0 0
    %3449 = vmatmul.mubr.bf16.gmra.mxu0 %v2990
    %v3450 = vpop.f32.mrf.mxu0
    %v3451 = vadd.f32 %v2833, %v3450
    %v3452 = vpop.f32.mrf.mxu0
    %v3453 = vpop.f32.mrf.mxu0
    %v3454 = vadd.f32 %v2833, %v3453
    %v3455 = vpop.f32.mrf.mxu0
    %3456 = vmatprep.mubr.bf16.mxu0 0
    %3457 = vmatmul.mubr.bf16.gmra.mxu0 %v2993
    %v3458 = vpop.f32.mrf.mxu0
    %v3459 = vadd.f32 %v2833, %v3458
    %v3460 = vpop.f32.mrf.mxu0
    %v3461 = vpop.f32.mrf.mxu0
    %v3462 = vadd.f32 %v2833, %v3461
    %v3463 = vpop.f32.mrf.mxu0
    %3464 = vmatprep.mubr.bf16.mxu0 0
    %3465 = vmatmul.mubr.bf16.gmra.mxu0 %v2996
    %v3466 = vpop.f32.mrf.mxu0
    %v3467 = vadd.f32 %v2833, %v3466
    %v3468 = vpop.f32.mrf.mxu0
    %v3469 = vpop.f32.mrf.mxu0
    %v3470 = vadd.f32 %v2833, %v3469
    %v3471 = vpop.f32.mrf.mxu0
    %3472 = vmatprep.mubr.bf16.mxu0 0
    %3473 = vmatmul.mubr.bf16.gmra.mxu0 %v2999
    %v3474 = vpop.f32.mrf.mxu0
    %v3475 = vadd.f32 %v2833, %v3474
    %v3476 = vpop.f32.mrf.mxu0
    %v3477 = vpop.f32.mrf.mxu0
    %v3478 = vadd.f32 %v2833, %v3477
    %v3479 = vpop.f32.mrf.mxu0
    %3480 = vmatprep.mubr.bf16.mxu0 0
    %3481 = vmatmul.mubr.bf16.gmra.mxu0 %v3002
    %v3482 = vpop.f32.mrf.mxu0
    %v3483 = vadd.f32 %v2833, %v3482
    %v3484 = vpop.f32.mrf.mxu0
    %v3485 = vpop.f32.mrf.mxu0
    %v3486 = vadd.f32 %v2833, %v3485
    %v3487 = vpop.f32.mrf.mxu0
    %3488 = vmatprep.mubr.bf16.mxu0 0
    %3489 = vmatmul.mubr.bf16.gmra.mxu0 %v3005
    %v3490 = vpop.f32.mrf.mxu0
    %v3491 = vadd.f32 %v2833, %v3490
    %v3492 = vpop.f32.mrf.mxu0
    %v3493 = vpop.f32.mrf.mxu0
    %v3494 = vadd.f32 %v2833, %v3493
    %v3495 = vpop.f32.mrf.mxu0
    %3496 = vmatprep.mubr.bf16.mxu0 0
    %3497 = vmatmul.mubr.bf16.gmra.mxu0 %v3008
    %v3498 = vpop.f32.mrf.mxu0
    %v3499 = vadd.f32 %v2833, %v3498
    %v3500 = vpop.f32.mrf.mxu0
    %v3501 = vpop.f32.mrf.mxu0
    %v3502 = vadd.f32 %v2833, %v3501
    %v3503 = vpop.f32.mrf.mxu0
    %3504 = vmatprep.mubr.bf16.mxu0 0
    %3505 = vmatmul.mubr.bf16.gmra.mxu0 %v3011
    %v3506 = vpop.f32.mrf.mxu0
    %v3507 = vadd.f32 %v2833, %v3506
    %v3508 = vpop.f32.mrf.mxu0
    %v3509 = vpop.f32.mrf.mxu0
    %v3510 = vadd.f32 %v2833, %v3509
    %v3511 = vpop.f32.mrf.mxu0
    %3512 = vmatprep.mubr.bf16.mxu0 0
    %3513 = vmatmul.mubr.bf16.gmra.mxu0 %v3014
    %v3514 = vpop.f32.mrf.mxu0
    %v3515 = vadd.f32 %v2833, %v3514
    %v3516 = vpop.f32.mrf.mxu0
    %v3517 = vpop.f32.mrf.mxu0
    %v3518 = vadd.f32 %v2833, %v3517
    %v3519 = vpop.f32.mrf.mxu0
    %3520 = vmatprep.mubr.bf16.mxu0 0
    %3521 = vmatmul.mubr.bf16.gmra.mxu0 %v3017
    %v3522 = vpop.f32.mrf.mxu0
    %v3523 = vadd.f32 %v2833, %v3522
    %v3524 = vpop.f32.mrf.mxu0
    %v3525 = vpop.f32.mrf.mxu0
    %v3526 = vadd.f32 %v2833, %v3525
    %v3527 = vpop.f32.mrf.mxu0
    %3528 = vmatprep.mubr.bf16.mxu0 0
    %3529 = vmatmul.mubr.bf16.gmra.mxu0 %v3020
    %v3530 = vpop.f32.mrf.mxu0
    %v3531 = vadd.f32 %v2833, %v3530
    %v3532 = vpop.f32.mrf.mxu0
    %v3533 = vpop.f32.mrf.mxu0
    %v3534 = vadd.f32 %v2833, %v3533
    %v3535 = vpop.f32.mrf.mxu0
    %3536 = vmatprep.mubr.bf16.mxu0 0
    %3537 = vmatmul.mubr.bf16.gmra.mxu0 %v3023
    %v3538 = vpop.f32.mrf.mxu0
    %v3539 = vadd.f32 %v2833, %v3538
    %v3540 = vpop.f32.mrf.mxu0
    %v3541 = vpop.f32.mrf.mxu0
    %v3542 = vadd.f32 %v2833, %v3541
    %v3543 = vpop.f32.mrf.mxu0
    %3544 = vmatprep.mubr.bf16.mxu0 0
    %3545 = vmatmul.mubr.bf16.gmra.mxu0 %v3026
    %v3546 = vpop.f32.mrf.mxu0
    %v3547 = vadd.f32 %v2833, %v3546
    %v3548 = vpop.f32.mrf.mxu0
    %v3549 = vpop.f32.mrf.mxu0
    %v3550 = vadd.f32 %v2833, %v3549
    %v3551 = vpop.f32.mrf.mxu0
    %3552 = vmatprep.mubr.bf16.mxu0 0
    %3553 = vmatmul.mubr.bf16.gmra.mxu0 %v3029
    %v3554 = vpop.f32.mrf.mxu0
    %v3555 = vadd.f32 %v2833, %v3554
    %v3556 = vpop.f32.mrf.mxu0
    %v3557 = vpop.f32.mrf.mxu0
    %v3558 = vadd.f32 %v2833, %v3557
    %v3559 = vpop.f32.mrf.mxu0
    %3560 = vmatprep.mubr.bf16.mxu0 0
    %3561 = vmatmul.mubr.bf16.gmra.mxu0 %v3032
    %v3562 = vpop.f32.mrf.mxu0
    %v3563 = vadd.f32 %v2833, %v3562
    %v3564 = vpop.f32.mrf.mxu0
    %v3565 = vpop.f32.mrf.mxu0
    %v3566 = vadd.f32 %v2833, %v3565
    %v3567 = vpop.f32.mrf.mxu0
    %3568 = vmatprep.mubr.bf16.mxu0 0
    %3569 = vmatmul.mubr.bf16.gmra.mxu0 %v3035
    %v3570 = vpop.f32.mrf.mxu0
    %v3571 = vadd.f32 %v2833, %v3570
    %v3572 = vpop.f32.mrf.mxu0
    %v3573 = vpop.f32.mrf.mxu0
    %v3574 = vadd.f32 %v2833, %v3573
    %v3575 = vpop.f32.mrf.mxu0
    %3576 = vmatprep.mubr.bf16.mxu0 0
    %3577 = vmatmul.mubr.bf16.gmra.mxu0 %v3038
    %v3578 = vpop.f32.mrf.mxu0
    %v3579 = vadd.f32 %v2833, %v3578
    %v3580 = vpop.f32.mrf.mxu0
    %v3581 = vpop.f32.mrf.mxu0
    %v3582 = vadd.f32 %v2833, %v3581
    %v3583 = vpop.f32.mrf.mxu0
    %3584 = vdwg.mxu0
    %v3585 = vmax.f32 %v3075, 0.0
    %v3586 = vmax.f32 %v3078, 0.0
    %v3587 = vmax.f32 %v3083, 0.0
    %v3588 = vmax.f32 %v3086, 0.0
    %v3589 = vmax.f32 %v3091, 0.0
    %v3590 = vmax.f32 %v3094, 0.0
    %v3591 = vmax.f32 %v3099, 0.0
    %v3592 = vmax.f32 %v3102, 0.0
    %v3593 = vmax.f32 %v3107, 0.0
    %v3594 = vmax.f32 %v3110, 0.0
    %v3595 = vmax.f32 %v3115, 0.0
    %v3596 = vmax.f32 %v3118, 0.0
    %v3597 = vmax.f32 %v3123, 0.0
    %v3598 = vmax.f32 %v3126, 0.0
    %v3599 = vmax.f32 %v3131, 0.0
    %v3600 = vmax.f32 %v3134, 0.0
    %v3601 = vmax.f32 %v3139, 0.0
    %v3602 = vmax.f32 %v3142, 0.0
    %v3603 = vmax.f32 %v3147, 0.0
    %v3604 = vmax.f32 %v3150, 0.0
    %v3605 = vmax.f32 %v3155, 0.0
    %v3606 = vmax.f32 %v3158, 0.0
    %v3607 = vmax.f32 %v3163, 0.0
    %v3608 = vmax.f32 %v3166, 0.0
    %v3609 = vmax.f32 %v3171, 0.0
    %v3610 = vmax.f32 %v3174, 0.0
    %v3611 = vmax.f32 %v3179, 0.0
    %v3612 = vmax.f32 %v3182, 0.0
    %v3613 = vmax.f32 %v3187, 0.0
    %v3614 = vmax.f32 %v3190, 0.0
    %v3615 = vmax.f32 %v3195, 0.0
    %v3616 = vmax.f32 %v3198, 0.0
    %v3617 = vmax.f32 %v3203, 0.0
    %v3618 = vmax.f32 %v3206, 0.0
    %v3619 = vmax.f32 %v3211, 0.0
    %v3620 = vmax.f32 %v3214, 0.0
    %v3621 = vmax.f32 %v3219, 0.0
    %v3622 = vmax.f32 %v3222, 0.0
    %v3623 = vmax.f32 %v3227, 0.0
    %v3624 = vmax.f32 %v3230, 0.0
    %v3625 = vmax.f32 %v3235, 0.0
    %v3626 = vmax.f32 %v3238, 0.0
    %v3627 = vmax.f32 %v3243, 0.0
    %v3628 = vmax.f32 %v3246, 0.0
    %v3629 = vmax.f32 %v3251, 0.0
    %v3630 = vmax.f32 %v3254, 0.0
    %v3631 = vmax.f32 %v3259, 0.0
    %v3632 = vmax.f32 %v3262, 0.0
    %v3633 = vmax.f32 %v3267, 0.0
    %v3634 = vmax.f32 %v3270, 0.0
    %v3635 = vmax.f32 %v3275, 0.0
    %v3636 = vmax.f32 %v3278, 0.0
    %v3637 = vmax.f32 %v3283, 0.0
    %v3638 = vmax.f32 %v3286, 0.0
    %v3639 = vmax.f32 %v3291, 0.0
    %v3640 = vmax.f32 %v3294, 0.0
    %v3641 = vmax.f32 %v3299, 0.0
    %v3642 = vmax.f32 %v3302, 0.0
    %v3643 = vmax.f32 %v3307, 0.0
    %v3644 = vmax.f32 %v3310, 0.0
    %v3645 = vmax.f32 %v3315, 0.0
    %v3646 = vmax.f32 %v3318, 0.0
    %v3647 = vmax.f32 %v3323, 0.0
    %v3648 = vmax.f32 %v3326, 0.0
    %v3649 = vmax.f32 %v3331, 0.0
    %v3650 = vmax.f32 %v3334, 0.0
    %v3651 = vmax.f32 %v3339, 0.0
    %v3652 = vmax.f32 %v3342, 0.0
    %v3653 = vmax.f32 %v3347, 0.0
    %v3654 = vmax.f32 %v3350, 0.0
    %v3655 = vmax.f32 %v3355, 0.0
    %v3656 = vmax.f32 %v3358, 0.0
    %v3657 = vmax.f32 %v3363, 0.0
    %v3658 = vmax.f32 %v3366, 0.0
    %v3659 = vmax.f32 %v3371, 0.0
    %v3660 = vmax.f32 %v3374, 0.0
    %v3661 = vmax.f32 %v3379, 0.0
    %v3662 = vmax.f32 %v3382, 0.0
    %v3663 = vmax.f32 %v3387, 0.0
    %v3664 = vmax.f32 %v3390, 0.0
    %v3665 = vmax.f32 %v3395, 0.0
    %v3666 = vmax.f32 %v3398, 0.0
    %v3667 = vmax.f32 %v3403, 0.0
    %v3668 = vmax.f32 %v3406, 0.0
    %v3669 = vmax.f32 %v3411, 0.0
    %v3670 = vmax.f32 %v3414, 0.0
    %v3671 = vmax.f32 %v3419, 0.0
    %v3672 = vmax.f32 %v3422, 0.0
    %v3673 = vmax.f32 %v3427, 0.0
    %v3674 = vmax.f32 %v3430, 0.0
    %v3675 = vmax.f32 %v3435, 0.0
    %v3676 = vmax.f32 %v3438, 0.0
    %v3677 = vmax.f32 %v3443, 0.0
    %v3678 = vmax.f32 %v3446, 0.0
    %v3679 = vmax.f32 %v3451, 0.0
    %v3680 = vmax.f32 %v3454, 0.0
    %v3681 = vmax.f32 %v3459, 0.0
    %v3682 = vmax.f32 %v3462, 0.0
    %v3683 = vmax.f32 %v3467, 0.0
    %v3684 = vmax.f32 %v3470, 0.0
    %v3685 = vmax.f32 %v3475, 0.0
    %v3686 = vmax.f32 %v3478, 0.0
    %v3687 = vmax.f32 %v3483, 0.0
    %v3688 = vmax.f32 %v3486, 0.0
    %v3689 = vmax.f32 %v3491, 0.0
    %v3690 = vmax.f32 %v3494, 0.0
    %v3691 = vmax.f32 %v3499, 0.0
    %v3692 = vmax.f32 %v3502, 0.0
    %v3693 = vmax.f32 %v3507, 0.0
    %v3694 = vmax.f32 %v3510, 0.0
    %v3695 = vmax.f32 %v3515, 0.0
    %v3696 = vmax.f32 %v3518, 0.0
    %v3697 = vmax.f32 %v3523, 0.0
    %v3698 = vmax.f32 %v3526, 0.0
    %v3699 = vmax.f32 %v3531, 0.0
    %v3700 = vmax.f32 %v3534, 0.0
    %v3701 = vmax.f32 %v3539, 0.0
    %v3702 = vmax.f32 %v3542, 0.0
    %v3703 = vmax.f32 %v3547, 0.0
    %v3704 = vmax.f32 %v3550, 0.0
    %v3705 = vmax.f32 %v3555, 0.0
    %v3706 = vmax.f32 %v3558, 0.0
    %v3707 = vmax.f32 %v3563, 0.0
    %v3708 = vmax.f32 %v3566, 0.0
    %v3709 = vmax.f32 %v3571, 0.0
    %v3710 = vmax.f32 %v3574, 0.0
    %v3711 = vmax.f32 %v3579, 0.0
    %v3712 = vmax.f32 %v3582, 0.0
    %v3713 = vpack.c.bf16 %v3586, %v3585
    %v3714 = vpack.c.bf16 %v3588, %v3587
    %v3715 = vpack.c.bf16 %v3590, %v3589
    %v3716 = vpack.c.bf16 %v3592, %v3591
    %v3717 = vpack.c.bf16 %v3594, %v3593
    %v3718 = vpack.c.bf16 %v3596, %v3595
    %v3719 = vpack.c.bf16 %v3598, %v3597
    %v3720 = vpack.c.bf16 %v3600, %v3599
    %v3721 = vpack.c.bf16 %v3602, %v3601
    %v3722 = vpack.c.bf16 %v3604, %v3603
    %v3723 = vpack.c.bf16 %v3606, %v3605
    %v3724 = vpack.c.bf16 %v3608, %v3607
    %v3725 = vpack.c.bf16 %v3610, %v3609
    %v3726 = vpack.c.bf16 %v3612, %v3611
    %v3727 = vpack.c.bf16 %v3614, %v3613
    %v3728 = vpack.c.bf16 %v3616, %v3615
    %v3729 = vpack.c.bf16 %v3618, %v3617
    %v3730 = vpack.c.bf16 %v3620, %v3619
    %v3731 = vpack.c.bf16 %v3622, %v3621
    %v3732 = vpack.c.bf16 %v3624, %v3623
    %v3733 = vpack.c.bf16 %v3626, %v3625
    %v3734 = vpack.c.bf16 %v3628, %v3627
    %v3735 = vpack.c.bf16 %v3630, %v3629
    %v3736 = vpack.c.bf16 %v3632, %v3631
    %v3737 = vpack.c.bf16 %v3634, %v3633
    %v3738 = vpack.c.bf16 %v3636, %v3635
    %v3739 = vpack.c.bf16 %v3638, %v3637
    %v3740 = vpack.c.bf16 %v3640, %v3639
    %v3741 = vpack.c.bf16 %v3642, %v3641
    %v3742 = vpack.c.bf16 %v3644, %v3643
    %v3743 = vpack.c.bf16 %v3646, %v3645
    %v3744 = vpack.c.bf16 %v3648, %v3647
    %v3745 = vpack.c.bf16 %v3650, %v3649
    %v3746 = vpack.c.bf16 %v3652, %v3651
    %v3747 = vpack.c.bf16 %v3654, %v3653
    %v3748 = vpack.c.bf16 %v3656, %v3655
    %v3749 = vpack.c.bf16 %v3658, %v3657
    %v3750 = vpack.c.bf16 %v3660, %v3659
    %v3751 = vpack.c.bf16 %v3662, %v3661
    %v3752 = vpack.c.bf16 %v3664, %v3663
    %v3753 = vpack.c.bf16 %v3666, %v3665
    %v3754 = vpack.c.bf16 %v3668, %v3667
    %v3755 = vpack.c.bf16 %v3670, %v3669
    %v3756 = vpack.c.bf16 %v3672, %v3671
    %v3757 = vpack.c.bf16 %v3674, %v3673
    %v3758 = vpack.c.bf16 %v3676, %v3675
    %v3759 = vpack.c.bf16 %v3678, %v3677
    %v3760 = vpack.c.bf16 %v3680, %v3679
    %v3761 = vpack.c.bf16 %v3682, %v3681
    %v3762 = vpack.c.bf16 %v3684, %v3683
    %v3763 = vpack.c.bf16 %v3686, %v3685
    %v3764 = vpack.c.bf16 %v3688, %v3687
    %v3765 = vpack.c.bf16 %v3690, %v3689
    %v3766 = vpack.c.bf16 %v3692, %v3691
    %v3767 = vpack.c.bf16 %v3694, %v3693
    %v3768 = vpack.c.bf16 %v3696, %v3695
    %v3769 = vpack.c.bf16 %v3698, %v3697
    %v3770 = vpack.c.bf16 %v3700, %v3699
    %v3771 = vpack.c.bf16 %v3702, %v3701
    %v3772 = vpack.c.bf16 %v3704, %v3703
    %v3773 = vpack.c.bf16 %v3706, %v3705
    %v3774 = vpack.c.bf16 %v3708, %v3707
    %v3775 = vpack.c.bf16 %v3710, %v3709
    %v3776 = vpack.c.bf16 %v3712, %v3711
    %v3777 = vld [vmem:[%s9] sm:$0xf]
    %v3778 = vld [vmem:[%s9 + $0x4] sm:$0xf]
    %v3779 = vld [vmem:[%s9 + $0x8] sm:$0xf]
    %v3780 = vld [vmem:[%s9 + $0xc] sm:$0xf]
    %v3781 = vld [vmem:[%s9 + $0x10] sm:$0xf]
    %v3782 = vld [vmem:[%s9 + $0x14] sm:$0xf]
    %v3783 = vld [vmem:[%s9 + $0x18] sm:$0xf]
    %v3784 = vld [vmem:[%s9 + $0x1c] sm:$0xf]
    %v3785 = vld [vmem:[%s10] sm:$0x1]
    %v3787 = vlaneseq
    %v3788 = vshrl.u32 %v3787, 7
    %v3789 = vsub.s32 0, %v3788
    %v3790 = vrot.slane %v3785, %v3789
    %v3800 = vunpack.c.l.b16 %v3777
    %v3801 = vunpack.c.l.b16 %v3778
    %v3802 = vunpack.c.l.b16 %v3779
    %v3803 = vunpack.c.l.b16 %v3780
    %v3804 = vunpack.c.l.b16 %v3781
    %v3805 = vunpack.c.l.b16 %v3782
    %v3806 = vunpack.c.l.b16 %v3783
    %v3807 = vunpack.c.l.b16 %v3784
    %v3808 = vpack.c.b16 %v3801, %v3800
    %v3809 = vpack.c.b16 %v3803, %v3802
    %v3810 = vpack.c.b16 %v3805, %v3804
    %v3811 = vpack.c.b16 %v3807, %v3806
    %v3817 = vsel %vm1894, %v3713, 0
    %v3820 = vsel %vm1894, %v3714, 0
    %v3823 = vsel %vm1894, %v3715, 0
    %v3826 = vsel %vm1894, %v3716, 0
    %v3829 = vsel %vm1894, %v3717, 0
    %v3832 = vsel %vm1894, %v3718, 0
    %v3835 = vsel %vm1894, %v3719, 0
    %v3838 = vsel %vm1894, %v3720, 0
    %v3841 = vsel %vm1894, %v3721, 0
    %v3844 = vsel %vm1894, %v3722, 0
    %v3847 = vsel %vm1894, %v3723, 0
    %v3850 = vsel %vm1894, %v3724, 0
    %v3853 = vsel %vm1894, %v3725, 0
    %v3856 = vsel %vm1894, %v3726, 0
    %v3859 = vsel %vm1894, %v3727, 0
    %v3862 = vsel %vm1894, %v3728, 0
    %v3865 = vsel %vm1894, %v3729, 0
    %v3868 = vsel %vm1894, %v3730, 0
    %v3871 = vsel %vm1894, %v3731, 0
    %v3874 = vsel %vm1894, %v3732, 0
    %v3877 = vsel %vm1894, %v3733, 0
    %v3880 = vsel %vm1894, %v3734, 0
    %v3883 = vsel %vm1894, %v3735, 0
    %v3886 = vsel %vm1894, %v3736, 0
    %v3889 = vsel %vm1894, %v3737, 0
    %v3892 = vsel %vm1894, %v3738, 0
    %v3895 = vsel %vm1894, %v3739, 0
    %v3898 = vsel %vm1894, %v3740, 0
    %v3901 = vsel %vm1894, %v3741, 0
    %v3904 = vsel %vm1894, %v3742, 0
    %v3907 = vsel %vm1894, %v3743, 0
    %v3910 = vsel %vm1894, %v3744, 0
    %v3913 = vsel %vm1894, %v3745, 0
    %v3916 = vsel %vm1894, %v3746, 0
    %v3919 = vsel %vm1894, %v3747, 0
    %v3922 = vsel %vm1894, %v3748, 0
    %v3925 = vsel %vm1894, %v3749, 0
    %v3928 = vsel %vm1894, %v3750, 0
    %v3931 = vsel %vm1894, %v3751, 0
    %v3934 = vsel %vm1894, %v3752, 0
    %v3937 = vsel %vm1894, %v3753, 0
    %v3940 = vsel %vm1894, %v3754, 0
    %v3943 = vsel %vm1894, %v3755, 0
    %v3946 = vsel %vm1894, %v3756, 0
    %v3949 = vsel %vm1894, %v3757, 0
    %v3952 = vsel %vm1894, %v3758, 0
    %v3955 = vsel %vm1894, %v3759, 0
    %v3958 = vsel %vm1894, %v3760, 0
    %v3961 = vsel %vm1894, %v3761, 0
    %v3964 = vsel %vm1894, %v3762, 0
    %v3967 = vsel %vm1894, %v3763, 0
    %v3970 = vsel %vm1894, %v3764, 0
    %v3973 = vsel %vm1894, %v3765, 0
    %v3976 = vsel %vm1894, %v3766, 0
    %v3979 = vsel %vm1894, %v3767, 0
    %v3982 = vsel %vm1894, %v3768, 0
    %v3985 = vsel %vm1894, %v3769, 0
    %v3988 = vsel %vm1894, %v3770, 0
    %v3991 = vsel %vm1894, %v3771, 0
    %v3994 = vsel %vm1894, %v3772, 0
    %v3997 = vsel %vm1894, %v3773, 0
    %v4000 = vsel %vm1894, %v3774, 0
    %v4003 = vsel %vm1894, %v3775, 0
    %v4006 = vsel %vm1894, %v3776, 0
    %4008 = vmatprep.subr.bf16.mxu0 0
    %4009 = vmatpush1.bf16.msra.mxu0 0
    %4010 = vmatprep.subr.bf16.mxu0 0
    %4011 = vmatpush1.bf16.msra.mxu0 0
    %4012 = vmatprep.subr.bf16.mxu0 0
    %4013 = vmatpush1.bf16.msra.mxu0 0
    %4014 = vmatprep.subr.bf16.mxu0 0
    %4015 = vmatpush1.bf16.msra.mxu0 0
    %4016 = vmatprep.subr.bf16.mxu0 0
    %4017 = vmatpush1.bf16.msra.mxu0 %v3811
    %4018 = vmatprep.subr.bf16.mxu0 0
    %4019 = vmatpush1.bf16.msra.mxu0 %v3810
    %4020 = vmatprep.subr.bf16.mxu0 0
    %4021 = vmatpush1.bf16.msra.mxu0 %v3809
    %4022 = vmatprep.subr.bf16.mxu0 0
    %4023 = vmatpush1.bf16.msra.mxu0 %v3808
    %4024 = vmatprep.subr.bf16.mxu0 0
    %4025 = vmatpush2.bf16.msra.mxu0 0
    %4026 = vmatprep.subr.bf16.mxu0 0
    %4027 = vmatpush2.bf16.msra.mxu0 0
    %4028 = vmatprep.subr.bf16.mxu0 0
    %4029 = vmatpush2.bf16.msra.mxu0 0
    %4030 = vmatprep.subr.bf16.mxu0 0
    %4031 = vmatpush2.bf16.msra.mxu0 0
    %4032 = vmatprep.subr.bf16.mxu0 0
    %4033 = vmatpush2.bf16.msra.mxu0 0
    %4034 = vmatprep.subr.bf16.mxu0 0
    %4035 = vmatpush2.bf16.msra.mxu0 0
    %4036 = vmatprep.subr.bf16.mxu0 0
    %4037 = vmatpush2.bf16.msra.mxu0 0
    %4038 = vmatprep.subr.bf16.mxu0 0
    %4039 = vmatpush2.bf16.msra.mxu0 0
    %4040 = vmatprep.mubr.bf16.mxu0 0
    %4041 = vmatmul.mubr.bf16.gmra.mxu0 %v3817
    %v4042 = vpop.f32.mrf.mxu0
    %v4043 = vadd.f32 %v3790, %v4042
    %v4044 = vpop.f32.mrf.mxu0
    %v4045 = vpop.f32.mrf.mxu0
    %v4046 = vadd.f32 %v3790, %v4045
    %v4047 = vpop.f32.mrf.mxu0
    %4048 = vmatprep.mubr.bf16.mxu0 0
    %4049 = vmatmul.mubr.bf16.gmra.mxu0 %v3820
    %v4050 = vpop.f32.mrf.mxu0
    %v4051 = vadd.f32 %v3790, %v4050
    %v4052 = vpop.f32.mrf.mxu0
    %v4053 = vpop.f32.mrf.mxu0
    %v4054 = vadd.f32 %v3790, %v4053
    %v4055 = vpop.f32.mrf.mxu0
    %4056 = vmatprep.mubr.bf16.mxu0 0
    %4057 = vmatmul.mubr.bf16.gmra.mxu0 %v3823
    %v4058 = vpop.f32.mrf.mxu0
    %v4059 = vadd.f32 %v3790, %v4058
    %v4060 = vpop.f32.mrf.mxu0
    %v4061 = vpop.f32.mrf.mxu0
    %v4062 = vadd.f32 %v3790, %v4061
    %v4063 = vpop.f32.mrf.mxu0
    %4064 = vmatprep.mubr.bf16.mxu0 0
    %4065 = vmatmul.mubr.bf16.gmra.mxu0 %v3826
    %v4066 = vpop.f32.mrf.mxu0
    %v4067 = vadd.f32 %v3790, %v4066
    %v4068 = vpop.f32.mrf.mxu0
    %v4069 = vpop.f32.mrf.mxu0
    %v4070 = vadd.f32 %v3790, %v4069
    %v4071 = vpop.f32.mrf.mxu0
    %4072 = vmatprep.mubr.bf16.mxu0 0
    %4073 = vmatmul.mubr.bf16.gmra.mxu0 %v3829
    %v4074 = vpop.f32.mrf.mxu0
    %v4075 = vadd.f32 %v3790, %v4074
    %v4076 = vpop.f32.mrf.mxu0
    %v4077 = vpop.f32.mrf.mxu0
    %v4078 = vadd.f32 %v3790, %v4077
    %v4079 = vpop.f32.mrf.mxu0
    %4080 = vmatprep.mubr.bf16.mxu0 0
    %4081 = vmatmul.mubr.bf16.gmra.mxu0 %v3832
    %v4082 = vpop.f32.mrf.mxu0
    %v4083 = vadd.f32 %v3790, %v4082
    %v4084 = vpop.f32.mrf.mxu0
    %v4085 = vpop.f32.mrf.mxu0
    %v4086 = vadd.f32 %v3790, %v4085
    %v4087 = vpop.f32.mrf.mxu0
    %4088 = vmatprep.mubr.bf16.mxu0 0
    %4089 = vmatmul.mubr.bf16.gmra.mxu0 %v3835
    %v4090 = vpop.f32.mrf.mxu0
    %v4091 = vadd.f32 %v3790, %v4090
    %v4092 = vpop.f32.mrf.mxu0
    %v4093 = vpop.f32.mrf.mxu0
    %v4094 = vadd.f32 %v3790, %v4093
    %v4095 = vpop.f32.mrf.mxu0
    %4096 = vmatprep.mubr.bf16.mxu0 0
    %4097 = vmatmul.mubr.bf16.gmra.mxu0 %v3838
    %v4098 = vpop.f32.mrf.mxu0
    %v4099 = vadd.f32 %v3790, %v4098
    %v4100 = vpop.f32.mrf.mxu0
    %v4101 = vpop.f32.mrf.mxu0
    %v4102 = vadd.f32 %v3790, %v4101
    %v4103 = vpop.f32.mrf.mxu0
    %4104 = vmatprep.mubr.bf16.mxu0 0
    %4105 = vmatmul.mubr.bf16.gmra.mxu0 %v3841
    %v4106 = vpop.f32.mrf.mxu0
    %v4107 = vadd.f32 %v3790, %v4106
    %v4108 = vpop.f32.mrf.mxu0
    %v4109 = vpop.f32.mrf.mxu0
    %v4110 = vadd.f32 %v3790, %v4109
    %v4111 = vpop.f32.mrf.mxu0
    %4112 = vmatprep.mubr.bf16.mxu0 0
    %4113 = vmatmul.mubr.bf16.gmra.mxu0 %v3844
    %v4114 = vpop.f32.mrf.mxu0
    %v4115 = vadd.f32 %v3790, %v4114
    %v4116 = vpop.f32.mrf.mxu0
    %v4117 = vpop.f32.mrf.mxu0
    %v4118 = vadd.f32 %v3790, %v4117
    %v4119 = vpop.f32.mrf.mxu0
    %4120 = vmatprep.mubr.bf16.mxu0 0
    %4121 = vmatmul.mubr.bf16.gmra.mxu0 %v3847
    %v4122 = vpop.f32.mrf.mxu0
    %v4123 = vadd.f32 %v3790, %v4122
    %v4124 = vpop.f32.mrf.mxu0
    %v4125 = vpop.f32.mrf.mxu0
    %v4126 = vadd.f32 %v3790, %v4125
    %v4127 = vpop.f32.mrf.mxu0
    %4128 = vmatprep.mubr.bf16.mxu0 0
    %4129 = vmatmul.mubr.bf16.gmra.mxu0 %v3850
    %v4130 = vpop.f32.mrf.mxu0
    %v4131 = vadd.f32 %v3790, %v4130
    %v4132 = vpop.f32.mrf.mxu0
    %v4133 = vpop.f32.mrf.mxu0
    %v4134 = vadd.f32 %v3790, %v4133
    %v4135 = vpop.f32.mrf.mxu0
    %4136 = vmatprep.mubr.bf16.mxu0 0
    %4137 = vmatmul.mubr.bf16.gmra.mxu0 %v3853
    %v4138 = vpop.f32.mrf.mxu0
    %v4139 = vadd.f32 %v3790, %v4138
    %v4140 = vpop.f32.mrf.mxu0
    %v4141 = vpop.f32.mrf.mxu0
    %v4142 = vadd.f32 %v3790, %v4141
    %v4143 = vpop.f32.mrf.mxu0
    %4144 = vmatprep.mubr.bf16.mxu0 0
    %4145 = vmatmul.mubr.bf16.gmra.mxu0 %v3856
    %v4146 = vpop.f32.mrf.mxu0
    %v4147 = vadd.f32 %v3790, %v4146
    %v4148 = vpop.f32.mrf.mxu0
    %v4149 = vpop.f32.mrf.mxu0
    %v4150 = vadd.f32 %v3790, %v4149
    %v4151 = vpop.f32.mrf.mxu0
    %4152 = vmatprep.mubr.bf16.mxu0 0
    %4153 = vmatmul.mubr.bf16.gmra.mxu0 %v3859
    %v4154 = vpop.f32.mrf.mxu0
    %v4155 = vadd.f32 %v3790, %v4154
    %v4156 = vpop.f32.mrf.mxu0
    %v4157 = vpop.f32.mrf.mxu0
    %v4158 = vadd.f32 %v3790, %v4157
    %v4159 = vpop.f32.mrf.mxu0
    %4160 = vmatprep.mubr.bf16.mxu0 0
    %4161 = vmatmul.mubr.bf16.gmra.mxu0 %v3862
    %v4162 = vpop.f32.mrf.mxu0
    %v4163 = vadd.f32 %v3790, %v4162
    %v4164 = vpop.f32.mrf.mxu0
    %v4165 = vpop.f32.mrf.mxu0
    %v4166 = vadd.f32 %v3790, %v4165
    %v4167 = vpop.f32.mrf.mxu0
    %4168 = vmatprep.mubr.bf16.mxu0 0
    %4169 = vmatmul.mubr.bf16.gmra.mxu0 %v3865
    %v4170 = vpop.f32.mrf.mxu0
    %v4171 = vadd.f32 %v3790, %v4170
    %v4172 = vpop.f32.mrf.mxu0
    %v4173 = vpop.f32.mrf.mxu0
    %v4174 = vadd.f32 %v3790, %v4173
    %v4175 = vpop.f32.mrf.mxu0
    %4176 = vmatprep.mubr.bf16.mxu0 0
    %4177 = vmatmul.mubr.bf16.gmra.mxu0 %v3868
    %v4178 = vpop.f32.mrf.mxu0
    %v4179 = vadd.f32 %v3790, %v4178
    %v4180 = vpop.f32.mrf.mxu0
    %v4181 = vpop.f32.mrf.mxu0
    %v4182 = vadd.f32 %v3790, %v4181
    %v4183 = vpop.f32.mrf.mxu0
    %4184 = vmatprep.mubr.bf16.mxu0 0
    %4185 = vmatmul.mubr.bf16.gmra.mxu0 %v3871
    %v4186 = vpop.f32.mrf.mxu0
    %v4187 = vadd.f32 %v3790, %v4186
    %v4188 = vpop.f32.mrf.mxu0
    %v4189 = vpop.f32.mrf.mxu0
    %v4190 = vadd.f32 %v3790, %v4189
    %v4191 = vpop.f32.mrf.mxu0
    %4192 = vmatprep.mubr.bf16.mxu0 0
    %4193 = vmatmul.mubr.bf16.gmra.mxu0 %v3874
    %v4194 = vpop.f32.mrf.mxu0
    %v4195 = vadd.f32 %v3790, %v4194
    %v4196 = vpop.f32.mrf.mxu0
    %v4197 = vpop.f32.mrf.mxu0
    %v4198 = vadd.f32 %v3790, %v4197
    %v4199 = vpop.f32.mrf.mxu0
    %4200 = vmatprep.mubr.bf16.mxu0 0
    %4201 = vmatmul.mubr.bf16.gmra.mxu0 %v3877
    %v4202 = vpop.f32.mrf.mxu0
    %v4203 = vadd.f32 %v3790, %v4202
    %v4204 = vpop.f32.mrf.mxu0
    %v4205 = vpop.f32.mrf.mxu0
    %v4206 = vadd.f32 %v3790, %v4205
    %v4207 = vpop.f32.mrf.mxu0
    %4208 = vmatprep.mubr.bf16.mxu0 0
    %4209 = vmatmul.mubr.bf16.gmra.mxu0 %v3880
    %v4210 = vpop.f32.mrf.mxu0
    %v4211 = vadd.f32 %v3790, %v4210
    %v4212 = vpop.f32.mrf.mxu0
    %v4213 = vpop.f32.mrf.mxu0
    %v4214 = vadd.f32 %v3790, %v4213
    %v4215 = vpop.f32.mrf.mxu0
    %4216 = vmatprep.mubr.bf16.mxu0 0
    %4217 = vmatmul.mubr.bf16.gmra.mxu0 %v3883
    %v4218 = vpop.f32.mrf.mxu0
    %v4219 = vadd.f32 %v3790, %v4218
    %v4220 = vpop.f32.mrf.mxu0
    %v4221 = vpop.f32.mrf.mxu0
    %v4222 = vadd.f32 %v3790, %v4221
    %v4223 = vpop.f32.mrf.mxu0
    %4224 = vmatprep.mubr.bf16.mxu0 0
    %4225 = vmatmul.mubr.bf16.gmra.mxu0 %v3886
    %v4226 = vpop.f32.mrf.mxu0
    %v4227 = vadd.f32 %v3790, %v4226
    %v4228 = vpop.f32.mrf.mxu0
    %v4229 = vpop.f32.mrf.mxu0
    %v4230 = vadd.f32 %v3790, %v4229
    %v4231 = vpop.f32.mrf.mxu0
    %4232 = vmatprep.mubr.bf16.mxu0 0
    %4233 = vmatmul.mubr.bf16.gmra.mxu0 %v3889
    %v4234 = vpop.f32.mrf.mxu0
    %v4235 = vadd.f32 %v3790, %v4234
    %v4236 = vpop.f32.mrf.mxu0
    %v4237 = vpop.f32.mrf.mxu0
    %v4238 = vadd.f32 %v3790, %v4237
    %v4239 = vpop.f32.mrf.mxu0
    %4240 = vmatprep.mubr.bf16.mxu0 0
    %4241 = vmatmul.mubr.bf16.gmra.mxu0 %v3892
    %v4242 = vpop.f32.mrf.mxu0
    %v4243 = vadd.f32 %v3790, %v4242
    %v4244 = vpop.f32.mrf.mxu0
    %v4245 = vpop.f32.mrf.mxu0
    %v4246 = vadd.f32 %v3790, %v4245
    %v4247 = vpop.f32.mrf.mxu0
    %4248 = vmatprep.mubr.bf16.mxu0 0
    %4249 = vmatmul.mubr.bf16.gmra.mxu0 %v3895
    %v4250 = vpop.f32.mrf.mxu0
    %v4251 = vadd.f32 %v3790, %v4250
    %v4252 = vpop.f32.mrf.mxu0
    %v4253 = vpop.f32.mrf.mxu0
    %v4254 = vadd.f32 %v3790, %v4253
    %v4255 = vpop.f32.mrf.mxu0
    %4256 = vmatprep.mubr.bf16.mxu0 0
    %4257 = vmatmul.mubr.bf16.gmra.mxu0 %v3898
    %v4258 = vpop.f32.mrf.mxu0
    %v4259 = vadd.f32 %v3790, %v4258
    %v4260 = vpop.f32.mrf.mxu0
    %v4261 = vpop.f32.mrf.mxu0
    %v4262 = vadd.f32 %v3790, %v4261
    %v4263 = vpop.f32.mrf.mxu0
    %4264 = vmatprep.mubr.bf16.mxu0 0
    %4265 = vmatmul.mubr.bf16.gmra.mxu0 %v3901
    %v4266 = vpop.f32.mrf.mxu0
    %v4267 = vadd.f32 %v3790, %v4266
    %v4268 = vpop.f32.mrf.mxu0
    %v4269 = vpop.f32.mrf.mxu0
    %v4270 = vadd.f32 %v3790, %v4269
    %v4271 = vpop.f32.mrf.mxu0
    %4272 = vmatprep.mubr.bf16.mxu0 0
    %4273 = vmatmul.mubr.bf16.gmra.mxu0 %v3904
    %v4274 = vpop.f32.mrf.mxu0
    %v4275 = vadd.f32 %v3790, %v4274
    %v4276 = vpop.f32.mrf.mxu0
    %v4277 = vpop.f32.mrf.mxu0
    %v4278 = vadd.f32 %v3790, %v4277
    %v4279 = vpop.f32.mrf.mxu0
    %4280 = vmatprep.mubr.bf16.mxu0 0
    %4281 = vmatmul.mubr.bf16.gmra.mxu0 %v3907
    %v4282 = vpop.f32.mrf.mxu0
    %v4283 = vadd.f32 %v3790, %v4282
    %v4284 = vpop.f32.mrf.mxu0
    %v4285 = vpop.f32.mrf.mxu0
    %v4286 = vadd.f32 %v3790, %v4285
    %v4287 = vpop.f32.mrf.mxu0
    %4288 = vmatprep.mubr.bf16.mxu0 0
    %4289 = vmatmul.mubr.bf16.gmra.mxu0 %v3910
    %v4290 = vpop.f32.mrf.mxu0
    %v4291 = vadd.f32 %v3790, %v4290
    %v4292 = vpop.f32.mrf.mxu0
    %v4293 = vpop.f32.mrf.mxu0
    %v4294 = vadd.f32 %v3790, %v4293
    %v4295 = vpop.f32.mrf.mxu0
    %4296 = vmatprep.mubr.bf16.mxu0 0
    %4297 = vmatmul.mubr.bf16.gmra.mxu0 %v3913
    %v4298 = vpop.f32.mrf.mxu0
    %v4299 = vadd.f32 %v3790, %v4298
    %v4300 = vpop.f32.mrf.mxu0
    %v4301 = vpop.f32.mrf.mxu0
    %v4302 = vadd.f32 %v3790, %v4301
    %v4303 = vpop.f32.mrf.mxu0
    %4304 = vmatprep.mubr.bf16.mxu0 0
    %4305 = vmatmul.mubr.bf16.gmra.mxu0 %v3916
    %v4306 = vpop.f32.mrf.mxu0
    %v4307 = vadd.f32 %v3790, %v4306
    %v4308 = vpop.f32.mrf.mxu0
    %v4309 = vpop.f32.mrf.mxu0
    %v4310 = vadd.f32 %v3790, %v4309
    %v4311 = vpop.f32.mrf.mxu0
    %4312 = vmatprep.mubr.bf16.mxu0 0
    %4313 = vmatmul.mubr.bf16.gmra.mxu0 %v3919
    %v4314 = vpop.f32.mrf.mxu0
    %v4315 = vadd.f32 %v3790, %v4314
    %v4316 = vpop.f32.mrf.mxu0
    %v4317 = vpop.f32.mrf.mxu0
    %v4318 = vadd.f32 %v3790, %v4317
    %v4319 = vpop.f32.mrf.mxu0
    %4320 = vmatprep.mubr.bf16.mxu0 0
    %4321 = vmatmul.mubr.bf16.gmra.mxu0 %v3922
    %v4322 = vpop.f32.mrf.mxu0
    %v4323 = vadd.f32 %v3790, %v4322
    %v4324 = vpop.f32.mrf.mxu0
    %v4325 = vpop.f32.mrf.mxu0
    %v4326 = vadd.f32 %v3790, %v4325
    %v4327 = vpop.f32.mrf.mxu0
    %4328 = vmatprep.mubr.bf16.mxu0 0
    %4329 = vmatmul.mubr.bf16.gmra.mxu0 %v3925
    %v4330 = vpop.f32.mrf.mxu0
    %v4331 = vadd.f32 %v3790, %v4330
    %v4332 = vpop.f32.mrf.mxu0
    %v4333 = vpop.f32.mrf.mxu0
    %v4334 = vadd.f32 %v3790, %v4333
    %v4335 = vpop.f32.mrf.mxu0
    %4336 = vmatprep.mubr.bf16.mxu0 0
    %4337 = vmatmul.mubr.bf16.gmra.mxu0 %v3928
    %v4338 = vpop.f32.mrf.mxu0
    %v4339 = vadd.f32 %v3790, %v4338
    %v4340 = vpop.f32.mrf.mxu0
    %v4341 = vpop.f32.mrf.mxu0
    %v4342 = vadd.f32 %v3790, %v4341
    %v4343 = vpop.f32.mrf.mxu0
    %4344 = vmatprep.mubr.bf16.mxu0 0
    %4345 = vmatmul.mubr.bf16.gmra.mxu0 %v3931
    %v4346 = vpop.f32.mrf.mxu0
    %v4347 = vadd.f32 %v3790, %v4346
    %v4348 = vpop.f32.mrf.mxu0
    %v4349 = vpop.f32.mrf.mxu0
    %v4350 = vadd.f32 %v3790, %v4349
    %v4351 = vpop.f32.mrf.mxu0
    %4352 = vmatprep.mubr.bf16.mxu0 0
    %4353 = vmatmul.mubr.bf16.gmra.mxu0 %v3934
    %v4354 = vpop.f32.mrf.mxu0
    %v4355 = vadd.f32 %v3790, %v4354
    %v4356 = vpop.f32.mrf.mxu0
    %v4357 = vpop.f32.mrf.mxu0
    %v4358 = vadd.f32 %v3790, %v4357
    %v4359 = vpop.f32.mrf.mxu0
    %4360 = vmatprep.mubr.bf16.mxu0 0
    %4361 = vmatmul.mubr.bf16.gmra.mxu0 %v3937
    %v4362 = vpop.f32.mrf.mxu0
    %v4363 = vadd.f32 %v3790, %v4362
    %v4364 = vpop.f32.mrf.mxu0
    %v4365 = vpop.f32.mrf.mxu0
    %v4366 = vadd.f32 %v3790, %v4365
    %v4367 = vpop.f32.mrf.mxu0
    %4368 = vmatprep.mubr.bf16.mxu0 0
    %4369 = vmatmul.mubr.bf16.gmra.mxu0 %v3940
    %v4370 = vpop.f32.mrf.mxu0
    %v4371 = vadd.f32 %v3790, %v4370
    %v4372 = vpop.f32.mrf.mxu0
    %v4373 = vpop.f32.mrf.mxu0
    %v4374 = vadd.f32 %v3790, %v4373
    %v4375 = vpop.f32.mrf.mxu0
    %4376 = vmatprep.mubr.bf16.mxu0 0
    %4377 = vmatmul.mubr.bf16.gmra.mxu0 %v3943
    %v4378 = vpop.f32.mrf.mxu0
    %v4379 = vadd.f32 %v3790, %v4378
    %v4380 = vpop.f32.mrf.mxu0
    %v4381 = vpop.f32.mrf.mxu0
    %v4382 = vadd.f32 %v3790, %v4381
    %v4383 = vpop.f32.mrf.mxu0
    %4384 = vmatprep.mubr.bf16.mxu0 0
    %4385 = vmatmul.mubr.bf16.gmra.mxu0 %v3946
    %v4386 = vpop.f32.mrf.mxu0
    %v4387 = vadd.f32 %v3790, %v4386
    %v4388 = vpop.f32.mrf.mxu0
    %v4389 = vpop.f32.mrf.mxu0
    %v4390 = vadd.f32 %v3790, %v4389
    %v4391 = vpop.f32.mrf.mxu0
    %4392 = vmatprep.mubr.bf16.mxu0 0
    %4393 = vmatmul.mubr.bf16.gmra.mxu0 %v3949
    %v4394 = vpop.f32.mrf.mxu0
    %v4395 = vadd.f32 %v3790, %v4394
    %v4396 = vpop.f32.mrf.mxu0
    %v4397 = vpop.f32.mrf.mxu0
    %v4398 = vadd.f32 %v3790, %v4397
    %v4399 = vpop.f32.mrf.mxu0
    %4400 = vmatprep.mubr.bf16.mxu0 0
    %4401 = vmatmul.mubr.bf16.gmra.mxu0 %v3952
    %v4402 = vpop.f32.mrf.mxu0
    %v4403 = vadd.f32 %v3790, %v4402
    %v4404 = vpop.f32.mrf.mxu0
    %v4405 = vpop.f32.mrf.mxu0
    %v4406 = vadd.f32 %v3790, %v4405
    %v4407 = vpop.f32.mrf.mxu0
    %4408 = vmatprep.mubr.bf16.mxu0 0
    %4409 = vmatmul.mubr.bf16.gmra.mxu0 %v3955
    %v4410 = vpop.f32.mrf.mxu0
    %v4411 = vadd.f32 %v3790, %v4410
    %v4412 = vpop.f32.mrf.mxu0
    %v4413 = vpop.f32.mrf.mxu0
    %v4414 = vadd.f32 %v3790, %v4413
    %v4415 = vpop.f32.mrf.mxu0
    %4416 = vmatprep.mubr.bf16.mxu0 0
    %4417 = vmatmul.mubr.bf16.gmra.mxu0 %v3958
    %v4418 = vpop.f32.mrf.mxu0
    %v4419 = vadd.f32 %v3790, %v4418
    %v4420 = vpop.f32.mrf.mxu0
    %v4421 = vpop.f32.mrf.mxu0
    %v4422 = vadd.f32 %v3790, %v4421
    %v4423 = vpop.f32.mrf.mxu0
    %4424 = vmatprep.mubr.bf16.mxu0 0
    %4425 = vmatmul.mubr.bf16.gmra.mxu0 %v3961
    %v4426 = vpop.f32.mrf.mxu0
    %v4427 = vadd.f32 %v3790, %v4426
    %v4428 = vpop.f32.mrf.mxu0
    %v4429 = vpop.f32.mrf.mxu0
    %v4430 = vadd.f32 %v3790, %v4429
    %v4431 = vpop.f32.mrf.mxu0
    %4432 = vmatprep.mubr.bf16.mxu0 0
    %4433 = vmatmul.mubr.bf16.gmra.mxu0 %v3964
    %v4434 = vpop.f32.mrf.mxu0
    %v4435 = vadd.f32 %v3790, %v4434
    %v4436 = vpop.f32.mrf.mxu0
    %v4437 = vpop.f32.mrf.mxu0
    %v4438 = vadd.f32 %v3790, %v4437
    %v4439 = vpop.f32.mrf.mxu0
    %4440 = vmatprep.mubr.bf16.mxu0 0
    %4441 = vmatmul.mubr.bf16.gmra.mxu0 %v3967
    %v4442 = vpop.f32.mrf.mxu0
    %v4443 = vadd.f32 %v3790, %v4442
    %v4444 = vpop.f32.mrf.mxu0
    %v4445 = vpop.f32.mrf.mxu0
    %v4446 = vadd.f32 %v3790, %v4445
    %v4447 = vpop.f32.mrf.mxu0
    %4448 = vmatprep.mubr.bf16.mxu0 0
    %4449 = vmatmul.mubr.bf16.gmra.mxu0 %v3970
    %v4450 = vpop.f32.mrf.mxu0
    %v4451 = vadd.f32 %v3790, %v4450
    %v4452 = vpop.f32.mrf.mxu0
    %v4453 = vpop.f32.mrf.mxu0
    %v4454 = vadd.f32 %v3790, %v4453
    %v4455 = vpop.f32.mrf.mxu0
    %4456 = vmatprep.mubr.bf16.mxu0 0
    %4457 = vmatmul.mubr.bf16.gmra.mxu0 %v3973
    %v4458 = vpop.f32.mrf.mxu0
    %v4459 = vadd.f32 %v3790, %v4458
    %v4460 = vpop.f32.mrf.mxu0
    %v4461 = vpop.f32.mrf.mxu0
    %v4462 = vadd.f32 %v3790, %v4461
    %v4463 = vpop.f32.mrf.mxu0
    %4464 = vmatprep.mubr.bf16.mxu0 0
    %4465 = vmatmul.mubr.bf16.gmra.mxu0 %v3976
    %v4466 = vpop.f32.mrf.mxu0
    %v4467 = vadd.f32 %v3790, %v4466
    %v4468 = vpop.f32.mrf.mxu0
    %v4469 = vpop.f32.mrf.mxu0
    %v4470 = vadd.f32 %v3790, %v4469
    %v4471 = vpop.f32.mrf.mxu0
    %4472 = vmatprep.mubr.bf16.mxu0 0
    %4473 = vmatmul.mubr.bf16.gmra.mxu0 %v3979
    %v4474 = vpop.f32.mrf.mxu0
    %v4475 = vadd.f32 %v3790, %v4474
    %v4476 = vpop.f32.mrf.mxu0
    %v4477 = vpop.f32.mrf.mxu0
    %v4478 = vadd.f32 %v3790, %v4477
    %v4479 = vpop.f32.mrf.mxu0
    %4480 = vmatprep.mubr.bf16.mxu0 0
    %4481 = vmatmul.mubr.bf16.gmra.mxu0 %v3982
    %v4482 = vpop.f32.mrf.mxu0
    %v4483 = vadd.f32 %v3790, %v4482
    %v4484 = vpop.f32.mrf.mxu0
    %v4485 = vpop.f32.mrf.mxu0
    %v4486 = vadd.f32 %v3790, %v4485
    %v4487 = vpop.f32.mrf.mxu0
    %4488 = vmatprep.mubr.bf16.mxu0 0
    %4489 = vmatmul.mubr.bf16.gmra.mxu0 %v3985
    %v4490 = vpop.f32.mrf.mxu0
    %v4491 = vadd.f32 %v3790, %v4490
    %v4492 = vpop.f32.mrf.mxu0
    %v4493 = vpop.f32.mrf.mxu0
    %v4494 = vadd.f32 %v3790, %v4493
    %v4495 = vpop.f32.mrf.mxu0
    %4496 = vmatprep.mubr.bf16.mxu0 0
    %4497 = vmatmul.mubr.bf16.gmra.mxu0 %v3988
    %v4498 = vpop.f32.mrf.mxu0
    %v4499 = vadd.f32 %v3790, %v4498
    %v4500 = vpop.f32.mrf.mxu0
    %v4501 = vpop.f32.mrf.mxu0
    %v4502 = vadd.f32 %v3790, %v4501
    %v4503 = vpop.f32.mrf.mxu0
    %4504 = vmatprep.mubr.bf16.mxu0 0
    %4505 = vmatmul.mubr.bf16.gmra.mxu0 %v3991
    %v4506 = vpop.f32.mrf.mxu0
    %v4507 = vadd.f32 %v3790, %v4506
    %v4508 = vpop.f32.mrf.mxu0
    %v4509 = vpop.f32.mrf.mxu0
    %v4510 = vadd.f32 %v3790, %v4509
    %v4511 = vpop.f32.mrf.mxu0
    %4512 = vmatprep.mubr.bf16.mxu0 0
    %4513 = vmatmul.mubr.bf16.gmra.mxu0 %v3994
    %v4514 = vpop.f32.mrf.mxu0
    %v4515 = vadd.f32 %v3790, %v4514
    %v4516 = vpop.f32.mrf.mxu0
    %v4517 = vpop.f32.mrf.mxu0
    %v4518 = vadd.f32 %v3790, %v4517
    %v4519 = vpop.f32.mrf.mxu0
    %4520 = vmatprep.mubr.bf16.mxu0 0
    %4521 = vmatmul.mubr.bf16.gmra.mxu0 %v3997
    %v4522 = vpop.f32.mrf.mxu0
    %v4523 = vadd.f32 %v3790, %v4522
    %v4524 = vpop.f32.mrf.mxu0
    %v4525 = vpop.f32.mrf.mxu0
    %v4526 = vadd.f32 %v3790, %v4525
    %v4527 = vpop.f32.mrf.mxu0
    %4528 = vmatprep.mubr.bf16.mxu0 0
    %4529 = vmatmul.mubr.bf16.gmra.mxu0 %v4000
    %v4530 = vpop.f32.mrf.mxu0
    %v4531 = vadd.f32 %v3790, %v4530
    %v4532 = vpop.f32.mrf.mxu0
    %v4533 = vpop.f32.mrf.mxu0
    %v4534 = vadd.f32 %v3790, %v4533
    %v4535 = vpop.f32.mrf.mxu0
    %4536 = vmatprep.mubr.bf16.mxu0 0
    %4537 = vmatmul.mubr.bf16.gmra.mxu0 %v4003
    %v4538 = vpop.f32.mrf.mxu0
    %v4539 = vadd.f32 %v3790, %v4538
    %v4540 = vpop.f32.mrf.mxu0
    %v4541 = vpop.f32.mrf.mxu0
    %v4542 = vadd.f32 %v3790, %v4541
    %v4543 = vpop.f32.mrf.mxu0
    %4544 = vmatprep.mubr.bf16.mxu0 0
    %4545 = vmatmul.mubr.bf16.gmra.mxu0 %v4006
    %v4546 = vpop.f32.mrf.mxu0
    %v4547 = vadd.f32 %v3790, %v4546
    %v4548 = vpop.f32.mrf.mxu0
    %v4549 = vpop.f32.mrf.mxu0
    %v4550 = vadd.f32 %v3790, %v4549
    %v4551 = vpop.f32.mrf.mxu0
    %4552 = vdwg.mxu0
    %v4553 = vmax.f32 %v4043, 0.0
    %v4554 = vmax.f32 %v4046, 0.0
    %v4555 = vmax.f32 %v4051, 0.0
    %v4556 = vmax.f32 %v4054, 0.0
    %v4557 = vmax.f32 %v4059, 0.0
    %v4558 = vmax.f32 %v4062, 0.0
    %v4559 = vmax.f32 %v4067, 0.0
    %v4560 = vmax.f32 %v4070, 0.0
    %v4561 = vmax.f32 %v4075, 0.0
    %v4562 = vmax.f32 %v4078, 0.0
    %v4563 = vmax.f32 %v4083, 0.0
    %v4564 = vmax.f32 %v4086, 0.0
    %v4565 = vmax.f32 %v4091, 0.0
    %v4566 = vmax.f32 %v4094, 0.0
    %v4567 = vmax.f32 %v4099, 0.0
    %v4568 = vmax.f32 %v4102, 0.0
    %v4569 = vmax.f32 %v4107, 0.0
    %v4570 = vmax.f32 %v4110, 0.0
    %v4571 = vmax.f32 %v4115, 0.0
    %v4572 = vmax.f32 %v4118, 0.0
    %v4573 = vmax.f32 %v4123, 0.0
    %v4574 = vmax.f32 %v4126, 0.0
    %v4575 = vmax.f32 %v4131, 0.0
    %v4576 = vmax.f32 %v4134, 0.0
    %v4577 = vmax.f32 %v4139, 0.0
    %v4578 = vmax.f32 %v4142, 0.0
    %v4579 = vmax.f32 %v4147, 0.0
    %v4580 = vmax.f32 %v4150, 0.0
    %v4581 = vmax.f32 %v4155, 0.0
    %v4582 = vmax.f32 %v4158, 0.0
    %v4583 = vmax.f32 %v4163, 0.0
    %v4584 = vmax.f32 %v4166, 0.0
    %v4585 = vmax.f32 %v4171, 0.0
    %v4586 = vmax.f32 %v4174, 0.0
    %v4587 = vmax.f32 %v4179, 0.0
    %v4588 = vmax.f32 %v4182, 0.0
    %v4589 = vmax.f32 %v4187, 0.0
    %v4590 = vmax.f32 %v4190, 0.0
    %v4591 = vmax.f32 %v4195, 0.0
    %v4592 = vmax.f32 %v4198, 0.0
    %v4593 = vmax.f32 %v4203, 0.0
    %v4594 = vmax.f32 %v4206, 0.0
    %v4595 = vmax.f32 %v4211, 0.0
    %v4596 = vmax.f32 %v4214, 0.0
    %v4597 = vmax.f32 %v4219, 0.0
    %v4598 = vmax.f32 %v4222, 0.0
    %v4599 = vmax.f32 %v4227, 0.0
    %v4600 = vmax.f32 %v4230, 0.0
    %v4601 = vmax.f32 %v4235, 0.0
    %v4602 = vmax.f32 %v4238, 0.0
    %v4603 = vmax.f32 %v4243, 0.0
    %v4604 = vmax.f32 %v4246, 0.0
    %v4605 = vmax.f32 %v4251, 0.0
    %v4606 = vmax.f32 %v4254, 0.0
    %v4607 = vmax.f32 %v4259, 0.0
    %v4608 = vmax.f32 %v4262, 0.0
    %v4609 = vmax.f32 %v4267, 0.0
    %v4610 = vmax.f32 %v4270, 0.0
    %v4611 = vmax.f32 %v4275, 0.0
    %v4612 = vmax.f32 %v4278, 0.0
    %v4613 = vmax.f32 %v4283, 0.0
    %v4614 = vmax.f32 %v4286, 0.0
    %v4615 = vmax.f32 %v4291, 0.0
    %v4616 = vmax.f32 %v4294, 0.0
    %v4617 = vmax.f32 %v4299, 0.0
    %v4618 = vmax.f32 %v4302, 0.0
    %v4619 = vmax.f32 %v4307, 0.0
    %v4620 = vmax.f32 %v4310, 0.0
    %v4621 = vmax.f32 %v4315, 0.0
    %v4622 = vmax.f32 %v4318, 0.0
    %v4623 = vmax.f32 %v4323, 0.0
    %v4624 = vmax.f32 %v4326, 0.0
    %v4625 = vmax.f32 %v4331, 0.0
    %v4626 = vmax.f32 %v4334, 0.0
    %v4627 = vmax.f32 %v4339, 0.0
    %v4628 = vmax.f32 %v4342, 0.0
    %v4629 = vmax.f32 %v4347, 0.0
    %v4630 = vmax.f32 %v4350, 0.0
    %v4631 = vmax.f32 %v4355, 0.0
    %v4632 = vmax.f32 %v4358, 0.0
    %v4633 = vmax.f32 %v4363, 0.0
    %v4634 = vmax.f32 %v4366, 0.0
    %v4635 = vmax.f32 %v4371, 0.0
    %v4636 = vmax.f32 %v4374, 0.0
    %v4637 = vmax.f32 %v4379, 0.0
    %v4638 = vmax.f32 %v4382, 0.0
    %v4639 = vmax.f32 %v4387, 0.0
    %v4640 = vmax.f32 %v4390, 0.0
    %v4641 = vmax.f32 %v4395, 0.0
    %v4642 = vmax.f32 %v4398, 0.0
    %v4643 = vmax.f32 %v4403, 0.0
    %v4644 = vmax.f32 %v4406, 0.0
    %v4645 = vmax.f32 %v4411, 0.0
    %v4646 = vmax.f32 %v4414, 0.0
    %v4647 = vmax.f32 %v4419, 0.0
    %v4648 = vmax.f32 %v4422, 0.0
    %v4649 = vmax.f32 %v4427, 0.0
    %v4650 = vmax.f32 %v4430, 0.0
    %v4651 = vmax.f32 %v4435, 0.0
    %v4652 = vmax.f32 %v4438, 0.0
    %v4653 = vmax.f32 %v4443, 0.0
    %v4654 = vmax.f32 %v4446, 0.0
    %v4655 = vmax.f32 %v4451, 0.0
    %v4656 = vmax.f32 %v4454, 0.0
    %v4657 = vmax.f32 %v4459, 0.0
    %v4658 = vmax.f32 %v4462, 0.0
    %v4659 = vmax.f32 %v4467, 0.0
    %v4660 = vmax.f32 %v4470, 0.0
    %v4661 = vmax.f32 %v4475, 0.0
    %v4662 = vmax.f32 %v4478, 0.0
    %v4663 = vmax.f32 %v4483, 0.0
    %v4664 = vmax.f32 %v4486, 0.0
    %v4665 = vmax.f32 %v4491, 0.0
    %v4666 = vmax.f32 %v4494, 0.0
    %v4667 = vmax.f32 %v4499, 0.0
    %v4668 = vmax.f32 %v4502, 0.0
    %v4669 = vmax.f32 %v4507, 0.0
    %v4670 = vmax.f32 %v4510, 0.0
    %v4671 = vmax.f32 %v4515, 0.0
    %v4672 = vmax.f32 %v4518, 0.0
    %v4673 = vmax.f32 %v4523, 0.0
    %v4674 = vmax.f32 %v4526, 0.0
    %v4675 = vmax.f32 %v4531, 0.0
    %v4676 = vmax.f32 %v4534, 0.0
    %v4677 = vmax.f32 %v4539, 0.0
    %v4678 = vmax.f32 %v4542, 0.0
    %v4679 = vmax.f32 %v4547, 0.0
    %v4680 = vmax.f32 %v4550, 0.0
    %v4681 = vld [vmem:[%s11] sm:$0x1]
    %v4683 = vlaneseq
    %v4684 = vshrl.u32 %v4683, 7
    %v4685 = vsub.s32 0, %v4684
    %v4686 = vrot.slane %v4681, %v4685
    %v4688 = vmul.f32 %v4553, %v4686
    %v4689 = vmul.f32 %v4554, %v4686
    %v4690 = vmul.f32 %v4555, %v4686
    %v4691 = vmul.f32 %v4556, %v4686
    %v4692 = vmul.f32 %v4557, %v4686
    %v4693 = vmul.f32 %v4558, %v4686
    %v4694 = vmul.f32 %v4559, %v4686
    %v4695 = vmul.f32 %v4560, %v4686
    %v4696 = vmul.f32 %v4561, %v4686
    %v4697 = vmul.f32 %v4562, %v4686
    %v4698 = vmul.f32 %v4563, %v4686
    %v4699 = vmul.f32 %v4564, %v4686
    %v4700 = vmul.f32 %v4565, %v4686
    %v4701 = vmul.f32 %v4566, %v4686
    %v4702 = vmul.f32 %v4567, %v4686
    %v4703 = vmul.f32 %v4568, %v4686
    %v4704 = vmul.f32 %v4569, %v4686
    %v4705 = vmul.f32 %v4570, %v4686
    %v4706 = vmul.f32 %v4571, %v4686
    %v4707 = vmul.f32 %v4572, %v4686
    %v4708 = vmul.f32 %v4573, %v4686
    %v4709 = vmul.f32 %v4574, %v4686
    %v4710 = vmul.f32 %v4575, %v4686
    %v4711 = vmul.f32 %v4576, %v4686
    %v4712 = vmul.f32 %v4577, %v4686
    %v4713 = vmul.f32 %v4578, %v4686
    %v4714 = vmul.f32 %v4579, %v4686
    %v4715 = vmul.f32 %v4580, %v4686
    %v4716 = vmul.f32 %v4581, %v4686
    %v4717 = vmul.f32 %v4582, %v4686
    %v4718 = vmul.f32 %v4583, %v4686
    %v4719 = vmul.f32 %v4584, %v4686
    %v4720 = vmul.f32 %v4585, %v4686
    %v4721 = vmul.f32 %v4586, %v4686
    %v4722 = vmul.f32 %v4587, %v4686
    %v4723 = vmul.f32 %v4588, %v4686
    %v4724 = vmul.f32 %v4589, %v4686
    %v4725 = vmul.f32 %v4590, %v4686
    %v4726 = vmul.f32 %v4591, %v4686
    %v4727 = vmul.f32 %v4592, %v4686
    %v4728 = vmul.f32 %v4593, %v4686
    %v4729 = vmul.f32 %v4594, %v4686
    %v4730 = vmul.f32 %v4595, %v4686
    %v4731 = vmul.f32 %v4596, %v4686
    %v4732 = vmul.f32 %v4597, %v4686
    %v4733 = vmul.f32 %v4598, %v4686
    %v4734 = vmul.f32 %v4599, %v4686
    %v4735 = vmul.f32 %v4600, %v4686
    %v4736 = vmul.f32 %v4601, %v4686
    %v4737 = vmul.f32 %v4602, %v4686
    %v4738 = vmul.f32 %v4603, %v4686
    %v4739 = vmul.f32 %v4604, %v4686
    %v4740 = vmul.f32 %v4605, %v4686
    %v4741 = vmul.f32 %v4606, %v4686
    %v4742 = vmul.f32 %v4607, %v4686
    %v4743 = vmul.f32 %v4608, %v4686
    %v4744 = vmul.f32 %v4609, %v4686
    %v4745 = vmul.f32 %v4610, %v4686
    %v4746 = vmul.f32 %v4611, %v4686
    %v4747 = vmul.f32 %v4612, %v4686
    %v4748 = vmul.f32 %v4613, %v4686
    %v4749 = vmul.f32 %v4614, %v4686
    %v4750 = vmul.f32 %v4615, %v4686
    %v4751 = vmul.f32 %v4616, %v4686
    %v4752 = vmul.f32 %v4617, %v4686
    %v4753 = vmul.f32 %v4618, %v4686
    %v4754 = vmul.f32 %v4619, %v4686
    %v4755 = vmul.f32 %v4620, %v4686
    %v4756 = vmul.f32 %v4621, %v4686
    %v4757 = vmul.f32 %v4622, %v4686
    %v4758 = vmul.f32 %v4623, %v4686
    %v4759 = vmul.f32 %v4624, %v4686
    %v4760 = vmul.f32 %v4625, %v4686
    %v4761 = vmul.f32 %v4626, %v4686
    %v4762 = vmul.f32 %v4627, %v4686
    %v4763 = vmul.f32 %v4628, %v4686
    %v4764 = vmul.f32 %v4629, %v4686
    %v4765 = vmul.f32 %v4630, %v4686
    %v4766 = vmul.f32 %v4631, %v4686
    %v4767 = vmul.f32 %v4632, %v4686
    %v4768 = vmul.f32 %v4633, %v4686
    %v4769 = vmul.f32 %v4634, %v4686
    %v4770 = vmul.f32 %v4635, %v4686
    %v4771 = vmul.f32 %v4636, %v4686
    %v4772 = vmul.f32 %v4637, %v4686
    %v4773 = vmul.f32 %v4638, %v4686
    %v4774 = vmul.f32 %v4639, %v4686
    %v4775 = vmul.f32 %v4640, %v4686
    %v4776 = vmul.f32 %v4641, %v4686
    %v4777 = vmul.f32 %v4642, %v4686
    %v4778 = vmul.f32 %v4643, %v4686
    %v4779 = vmul.f32 %v4644, %v4686
    %v4780 = vmul.f32 %v4645, %v4686
    %v4781 = vmul.f32 %v4646, %v4686
    %v4782 = vmul.f32 %v4647, %v4686
    %v4783 = vmul.f32 %v4648, %v4686
    %v4784 = vmul.f32 %v4649, %v4686
    %v4785 = vmul.f32 %v4650, %v4686
    %v4786 = vmul.f32 %v4651, %v4686
    %v4787 = vmul.f32 %v4652, %v4686
    %v4788 = vmul.f32 %v4653, %v4686
    %v4789 = vmul.f32 %v4654, %v4686
    %v4790 = vmul.f32 %v4655, %v4686
    %v4791 = vmul.f32 %v4656, %v4686
    %v4792 = vmul.f32 %v4657, %v4686
    %v4793 = vmul.f32 %v4658, %v4686
    %v4794 = vmul.f32 %v4659, %v4686
    %v4795 = vmul.f32 %v4660, %v4686
    %v4796 = vmul.f32 %v4661, %v4686
    %v4797 = vmul.f32 %v4662, %v4686
    %v4798 = vmul.f32 %v4663, %v4686
    %v4799 = vmul.f32 %v4664, %v4686
    %v4800 = vmul.f32 %v4665, %v4686
    %v4801 = vmul.f32 %v4666, %v4686
    %v4802 = vmul.f32 %v4667, %v4686
    %v4803 = vmul.f32 %v4668, %v4686
    %v4804 = vmul.f32 %v4669, %v4686
    %v4805 = vmul.f32 %v4670, %v4686
    %v4806 = vmul.f32 %v4671, %v4686
    %v4807 = vmul.f32 %v4672, %v4686
    %v4808 = vmul.f32 %v4673, %v4686
    %v4809 = vmul.f32 %v4674, %v4686
    %v4810 = vmul.f32 %v4675, %v4686
    %v4811 = vmul.f32 %v4676, %v4686
    %v4812 = vmul.f32 %v4677, %v4686
    %v4813 = vmul.f32 %v4678, %v4686
    %v4814 = vmul.f32 %v4679, %v4686
    %v4815 = vmul.f32 %v4680, %v4686
    %4816 = vadd.xlane.f32.xlu0 %v4688
    %v4817 = vpop.xlane.xlu0 %4816
    %4818 = vadd.xlane.f32.xlu0 %v4689
    %v4819 = vpop.xlane.xlu0 %4818
    %4820 = vadd.xlane.f32.xlu0 %v4690
    %v4821 = vpop.xlane.xlu0 %4820
    %4822 = vadd.xlane.f32.xlu0 %v4691
    %v4823 = vpop.xlane.xlu0 %4822
    %4824 = vadd.xlane.f32.xlu0 %v4692
    %v4825 = vpop.xlane.xlu0 %4824
    %4826 = vadd.xlane.f32.xlu0 %v4693
    %v4827 = vpop.xlane.xlu0 %4826
    %4828 = vadd.xlane.f32.xlu0 %v4694
    %v4829 = vpop.xlane.xlu0 %4828
    %4830 = vadd.xlane.f32.xlu0 %v4695
    %v4831 = vpop.xlane.xlu0 %4830
    %4832 = vadd.xlane.f32.xlu0 %v4696
    %v4833 = vpop.xlane.xlu0 %4832
    %4834 = vadd.xlane.f32.xlu0 %v4697
    %v4835 = vpop.xlane.xlu0 %4834
    %4836 = vadd.xlane.f32.xlu0 %v4698
    %v4837 = vpop.xlane.xlu0 %4836
    %4838 = vadd.xlane.f32.xlu0 %v4699
    %v4839 = vpop.xlane.xlu0 %4838
    %4840 = vadd.xlane.f32.xlu0 %v4700
    %v4841 = vpop.xlane.xlu0 %4840
    %4842 = vadd.xlane.f32.xlu0 %v4701
    %v4843 = vpop.xlane.xlu0 %4842
    %4844 = vadd.xlane.f32.xlu0 %v4702
    %v4845 = vpop.xlane.xlu0 %4844
    %4846 = vadd.xlane.f32.xlu0 %v4703
    %v4847 = vpop.xlane.xlu0 %4846
    %4848 = vadd.xlane.f32.xlu0 %v4704
    %v4849 = vpop.xlane.xlu0 %4848
    %4850 = vadd.xlane.f32.xlu0 %v4705
    %v4851 = vpop.xlane.xlu0 %4850
    %4852 = vadd.xlane.f32.xlu0 %v4706
    %v4853 = vpop.xlane.xlu0 %4852
    %4854 = vadd.xlane.f32.xlu0 %v4707
    %v4855 = vpop.xlane.xlu0 %4854
    %4856 = vadd.xlane.f32.xlu0 %v4708
    %v4857 = vpop.xlane.xlu0 %4856
    %4858 = vadd.xlane.f32.xlu0 %v4709
    %v4859 = vpop.xlane.xlu0 %4858
    %4860 = vadd.xlane.f32.xlu0 %v4710
    %v4861 = vpop.xlane.xlu0 %4860
    %4862 = vadd.xlane.f32.xlu0 %v4711
    %v4863 = vpop.xlane.xlu0 %4862
    %4864 = vadd.xlane.f32.xlu0 %v4712
    %v4865 = vpop.xlane.xlu0 %4864
    %4866 = vadd.xlane.f32.xlu0 %v4713
    %v4867 = vpop.xlane.xlu0 %4866
    %4868 = vadd.xlane.f32.xlu0 %v4714
    %v4869 = vpop.xlane.xlu0 %4868
    %4870 = vadd.xlane.f32.xlu0 %v4715
    %v4871 = vpop.xlane.xlu0 %4870
    %4872 = vadd.xlane.f32.xlu0 %v4716
    %v4873 = vpop.xlane.xlu0 %4872
    %4874 = vadd.xlane.f32.xlu0 %v4717
    %v4875 = vpop.xlane.xlu0 %4874
    %4876 = vadd.xlane.f32.xlu0 %v4718
    %v4877 = vpop.xlane.xlu0 %4876
    %4878 = vadd.xlane.f32.xlu0 %v4719
    %v4879 = vpop.xlane.xlu0 %4878
    %4880 = vadd.xlane.f32.xlu0 %v4720
    %v4881 = vpop.xlane.xlu0 %4880
    %4882 = vadd.xlane.f32.xlu0 %v4721
    %v4883 = vpop.xlane.xlu0 %4882
    %4884 = vadd.xlane.f32.xlu0 %v4722
    %v4885 = vpop.xlane.xlu0 %4884
    %4886 = vadd.xlane.f32.xlu0 %v4723
    %v4887 = vpop.xlane.xlu0 %4886
    %4888 = vadd.xlane.f32.xlu0 %v4724
    %v4889 = vpop.xlane.xlu0 %4888
    %4890 = vadd.xlane.f32.xlu0 %v4725
    %v4891 = vpop.xlane.xlu0 %4890
    %4892 = vadd.xlane.f32.xlu0 %v4726
    %v4893 = vpop.xlane.xlu0 %4892
    %4894 = vadd.xlane.f32.xlu0 %v4727
    %v4895 = vpop.xlane.xlu0 %4894
    %4896 = vadd.xlane.f32.xlu0 %v4728
    %v4897 = vpop.xlane.xlu0 %4896
    %4898 = vadd.xlane.f32.xlu0 %v4729
    %v4899 = vpop.xlane.xlu0 %4898
    %4900 = vadd.xlane.f32.xlu0 %v4730
    %v4901 = vpop.xlane.xlu0 %4900
    %4902 = vadd.xlane.f32.xlu0 %v4731
    %v4903 = vpop.xlane.xlu0 %4902
    %4904 = vadd.xlane.f32.xlu0 %v4732
    %v4905 = vpop.xlane.xlu0 %4904
    %4906 = vadd.xlane.f32.xlu0 %v4733
    %v4907 = vpop.xlane.xlu0 %4906
    %4908 = vadd.xlane.f32.xlu0 %v4734
    %v4909 = vpop.xlane.xlu0 %4908
    %4910 = vadd.xlane.f32.xlu0 %v4735
    %v4911 = vpop.xlane.xlu0 %4910
    %4912 = vadd.xlane.f32.xlu0 %v4736
    %v4913 = vpop.xlane.xlu0 %4912
    %4914 = vadd.xlane.f32.xlu0 %v4737
    %v4915 = vpop.xlane.xlu0 %4914
    %4916 = vadd.xlane.f32.xlu0 %v4738
    %v4917 = vpop.xlane.xlu0 %4916
    %4918 = vadd.xlane.f32.xlu0 %v4739
    %v4919 = vpop.xlane.xlu0 %4918
    %4920 = vadd.xlane.f32.xlu0 %v4740
    %v4921 = vpop.xlane.xlu0 %4920
    %4922 = vadd.xlane.f32.xlu0 %v4741
    %v4923 = vpop.xlane.xlu0 %4922
    %4924 = vadd.xlane.f32.xlu0 %v4742
    %v4925 = vpop.xlane.xlu0 %4924
    %4926 = vadd.xlane.f32.xlu0 %v4743
    %v4927 = vpop.xlane.xlu0 %4926
    %4928 = vadd.xlane.f32.xlu0 %v4744
    %v4929 = vpop.xlane.xlu0 %4928
    %4930 = vadd.xlane.f32.xlu0 %v4745
    %v4931 = vpop.xlane.xlu0 %4930
    %4932 = vadd.xlane.f32.xlu0 %v4746
    %v4933 = vpop.xlane.xlu0 %4932
    %4934 = vadd.xlane.f32.xlu0 %v4747
    %v4935 = vpop.xlane.xlu0 %4934
    %4936 = vadd.xlane.f32.xlu0 %v4748
    %v4937 = vpop.xlane.xlu0 %4936
    %4938 = vadd.xlane.f32.xlu0 %v4749
    %v4939 = vpop.xlane.xlu0 %4938
    %4940 = vadd.xlane.f32.xlu0 %v4750
    %v4941 = vpop.xlane.xlu0 %4940
    %4942 = vadd.xlane.f32.xlu0 %v4751
    %v4943 = vpop.xlane.xlu0 %4942
    %4944 = vadd.xlane.f32.xlu0 %v4752
    %v4945 = vpop.xlane.xlu0 %4944
    %4946 = vadd.xlane.f32.xlu0 %v4753
    %v4947 = vpop.xlane.xlu0 %4946
    %4948 = vadd.xlane.f32.xlu0 %v4754
    %v4949 = vpop.xlane.xlu0 %4948
    %4950 = vadd.xlane.f32.xlu0 %v4755
    %v4951 = vpop.xlane.xlu0 %4950
    %4952 = vadd.xlane.f32.xlu0 %v4756
    %v4953 = vpop.xlane.xlu0 %4952
    %4954 = vadd.xlane.f32.xlu0 %v4757
    %v4955 = vpop.xlane.xlu0 %4954
    %4956 = vadd.xlane.f32.xlu0 %v4758
    %v4957 = vpop.xlane.xlu0 %4956
    %4958 = vadd.xlane.f32.xlu0 %v4759
    %v4959 = vpop.xlane.xlu0 %4958
    %4960 = vadd.xlane.f32.xlu0 %v4760
    %v4961 = vpop.xlane.xlu0 %4960
    %4962 = vadd.xlane.f32.xlu0 %v4761
    %v4963 = vpop.xlane.xlu0 %4962
    %4964 = vadd.xlane.f32.xlu0 %v4762
    %v4965 = vpop.xlane.xlu0 %4964
    %4966 = vadd.xlane.f32.xlu0 %v4763
    %v4967 = vpop.xlane.xlu0 %4966
    %4968 = vadd.xlane.f32.xlu0 %v4764
    %v4969 = vpop.xlane.xlu0 %4968
    %4970 = vadd.xlane.f32.xlu0 %v4765
    %v4971 = vpop.xlane.xlu0 %4970
    %4972 = vadd.xlane.f32.xlu0 %v4766
    %v4973 = vpop.xlane.xlu0 %4972
    %4974 = vadd.xlane.f32.xlu0 %v4767
    %v4975 = vpop.xlane.xlu0 %4974
    %4976 = vadd.xlane.f32.xlu0 %v4768
    %v4977 = vpop.xlane.xlu0 %4976
    %4978 = vadd.xlane.f32.xlu0 %v4769
    %v4979 = vpop.xlane.xlu0 %4978
    %4980 = vadd.xlane.f32.xlu0 %v4770
    %v4981 = vpop.xlane.xlu0 %4980
    %4982 = vadd.xlane.f32.xlu0 %v4771
    %v4983 = vpop.xlane.xlu0 %4982
    %4984 = vadd.xlane.f32.xlu0 %v4772
    %v4985 = vpop.xlane.xlu0 %4984
    %4986 = vadd.xlane.f32.xlu0 %v4773
    %v4987 = vpop.xlane.xlu0 %4986
    %4988 = vadd.xlane.f32.xlu0 %v4774
    %v4989 = vpop.xlane.xlu0 %4988
    %4990 = vadd.xlane.f32.xlu0 %v4775
    %v4991 = vpop.xlane.xlu0 %4990
    %4992 = vadd.xlane.f32.xlu0 %v4776
    %v4993 = vpop.xlane.xlu0 %4992
    %4994 = vadd.xlane.f32.xlu0 %v4777
    %v4995 = vpop.xlane.xlu0 %4994
    %4996 = vadd.xlane.f32.xlu0 %v4778
    %v4997 = vpop.xlane.xlu0 %4996
    %4998 = vadd.xlane.f32.xlu0 %v4779
    %v4999 = vpop.xlane.xlu0 %4998
    %5000 = vadd.xlane.f32.xlu0 %v4780
    %v5001 = vpop.xlane.xlu0 %5000
    %5002 = vadd.xlane.f32.xlu0 %v4781
    %v5003 = vpop.xlane.xlu0 %5002
    %5004 = vadd.xlane.f32.xlu0 %v4782
    %v5005 = vpop.xlane.xlu0 %5004
    %5006 = vadd.xlane.f32.xlu0 %v4783
    %v5007 = vpop.xlane.xlu0 %5006
    %5008 = vadd.xlane.f32.xlu0 %v4784
    %v5009 = vpop.xlane.xlu0 %5008
    %5010 = vadd.xlane.f32.xlu0 %v4785
    %v5011 = vpop.xlane.xlu0 %5010
    %5012 = vadd.xlane.f32.xlu0 %v4786
    %v5013 = vpop.xlane.xlu0 %5012
    %5014 = vadd.xlane.f32.xlu0 %v4787
    %v5015 = vpop.xlane.xlu0 %5014
    %5016 = vadd.xlane.f32.xlu0 %v4788
    %v5017 = vpop.xlane.xlu0 %5016
    %5018 = vadd.xlane.f32.xlu0 %v4789
    %v5019 = vpop.xlane.xlu0 %5018
    %5020 = vadd.xlane.f32.xlu0 %v4790
    %v5021 = vpop.xlane.xlu0 %5020
    %5022 = vadd.xlane.f32.xlu0 %v4791
    %v5023 = vpop.xlane.xlu0 %5022
    %5024 = vadd.xlane.f32.xlu0 %v4792
    %v5025 = vpop.xlane.xlu0 %5024
    %5026 = vadd.xlane.f32.xlu0 %v4793
    %v5027 = vpop.xlane.xlu0 %5026
    %5028 = vadd.xlane.f32.xlu0 %v4794
    %v5029 = vpop.xlane.xlu0 %5028
    %5030 = vadd.xlane.f32.xlu0 %v4795
    %v5031 = vpop.xlane.xlu0 %5030
    %5032 = vadd.xlane.f32.xlu0 %v4796
    %v5033 = vpop.xlane.xlu0 %5032
    %5034 = vadd.xlane.f32.xlu0 %v4797
    %v5035 = vpop.xlane.xlu0 %5034
    %5036 = vadd.xlane.f32.xlu0 %v4798
    %v5037 = vpop.xlane.xlu0 %5036
    %5038 = vadd.xlane.f32.xlu0 %v4799
    %v5039 = vpop.xlane.xlu0 %5038
    %5040 = vadd.xlane.f32.xlu0 %v4800
    %v5041 = vpop.xlane.xlu0 %5040
    %5042 = vadd.xlane.f32.xlu0 %v4801
    %v5043 = vpop.xlane.xlu0 %5042
    %5044 = vadd.xlane.f32.xlu0 %v4802
    %v5045 = vpop.xlane.xlu0 %5044
    %5046 = vadd.xlane.f32.xlu0 %v4803
    %v5047 = vpop.xlane.xlu0 %5046
    %5048 = vadd.xlane.f32.xlu0 %v4804
    %v5049 = vpop.xlane.xlu0 %5048
    %5050 = vadd.xlane.f32.xlu0 %v4805
    %v5051 = vpop.xlane.xlu0 %5050
    %5052 = vadd.xlane.f32.xlu0 %v4806
    %v5053 = vpop.xlane.xlu0 %5052
    %5054 = vadd.xlane.f32.xlu0 %v4807
    %v5055 = vpop.xlane.xlu0 %5054
    %5056 = vadd.xlane.f32.xlu0 %v4808
    %v5057 = vpop.xlane.xlu0 %5056
    %5058 = vadd.xlane.f32.xlu0 %v4809
    %v5059 = vpop.xlane.xlu0 %5058
    %5060 = vadd.xlane.f32.xlu0 %v4810
    %v5061 = vpop.xlane.xlu0 %5060
    %5062 = vadd.xlane.f32.xlu0 %v4811
    %v5063 = vpop.xlane.xlu0 %5062
    %5064 = vadd.xlane.f32.xlu0 %v4812
    %v5065 = vpop.xlane.xlu0 %5064
    %5066 = vadd.xlane.f32.xlu0 %v4813
    %v5067 = vpop.xlane.xlu0 %5066
    %5068 = vadd.xlane.f32.xlu0 %v4814
    %v5069 = vpop.xlane.xlu0 %5068
    %5070 = vadd.xlane.f32.xlu0 %v4815
    %v5071 = vpop.xlane.xlu0 %5070
    %v5072 = vld [vmem:[#allocation2] sm:$0x1]
    %v5074 = vlaneseq
    %v5075 = vshrl.u32 %v5074, 7
    %v5076 = vsub.s32 0, %v5075
    %v5077 = vrot.slane %v5072, %v5076
    %5078 = vset.pattern.permute.xlu0 0
    %5079 = vperm.xlu0 %5078, %v5077
    %v5080 = vpop.permute.xlu0 %5079
    %v5082 = vadd.f32 %v4817, %v5080
    %v5083 = vadd.f32 %v4819, %v5080
    %v5084 = vadd.f32 %v4821, %v5080
    %v5085 = vadd.f32 %v4823, %v5080
    %v5086 = vadd.f32 %v4825, %v5080
    %v5087 = vadd.f32 %v4827, %v5080
    %v5088 = vadd.f32 %v4829, %v5080
    %v5089 = vadd.f32 %v4831, %v5080
    %v5090 = vadd.f32 %v4833, %v5080
    %v5091 = vadd.f32 %v4835, %v5080
    %v5092 = vadd.f32 %v4837, %v5080
    %v5093 = vadd.f32 %v4839, %v5080
    %v5094 = vadd.f32 %v4841, %v5080
    %v5095 = vadd.f32 %v4843, %v5080
    %v5096 = vadd.f32 %v4845, %v5080
    %v5097 = vadd.f32 %v4847, %v5080
    %v5098 = vadd.f32 %v4849, %v5080
    %v5099 = vadd.f32 %v4851, %v5080
    %v5100 = vadd.f32 %v4853, %v5080
    %v5101 = vadd.f32 %v4855, %v5080
    %v5102 = vadd.f32 %v4857, %v5080
    %v5103 = vadd.f32 %v4859, %v5080
    %v5104 = vadd.f32 %v4861, %v5080
    %v5105 = vadd.f32 %v4863, %v5080
    %v5106 = vadd.f32 %v4865, %v5080
    %v5107 = vadd.f32 %v4867, %v5080
    %v5108 = vadd.f32 %v4869, %v5080
    %v5109 = vadd.f32 %v4871, %v5080
    %v5110 = vadd.f32 %v4873, %v5080
    %v5111 = vadd.f32 %v4875, %v5080
    %v5112 = vadd.f32 %v4877, %v5080
    %v5113 = vadd.f32 %v4879, %v5080
    %v5114 = vadd.f32 %v4881, %v5080
    %v5115 = vadd.f32 %v4883, %v5080
    %v5116 = vadd.f32 %v4885, %v5080
    %v5117 = vadd.f32 %v4887, %v5080
    %v5118 = vadd.f32 %v4889, %v5080
    %v5119 = vadd.f32 %v4891, %v5080
    %v5120 = vadd.f32 %v4893, %v5080
    %v5121 = vadd.f32 %v4895, %v5080
    %v5122 = vadd.f32 %v4897, %v5080
    %v5123 = vadd.f32 %v4899, %v5080
    %v5124 = vadd.f32 %v4901, %v5080
    %v5125 = vadd.f32 %v4903, %v5080
    %v5126 = vadd.f32 %v4905, %v5080
    %v5127 = vadd.f32 %v4907, %v5080
    %v5128 = vadd.f32 %v4909, %v5080
    %v5129 = vadd.f32 %v4911, %v5080
    %v5130 = vadd.f32 %v4913, %v5080
    %v5131 = vadd.f32 %v4915, %v5080
    %v5132 = vadd.f32 %v4917, %v5080
    %v5133 = vadd.f32 %v4919, %v5080
    %v5134 = vadd.f32 %v4921, %v5080
    %v5135 = vadd.f32 %v4923, %v5080
    %v5136 = vadd.f32 %v4925, %v5080
    %v5137 = vadd.f32 %v4927, %v5080
    %v5138 = vadd.f32 %v4929, %v5080
    %v5139 = vadd.f32 %v4931, %v5080
    %v5140 = vadd.f32 %v4933, %v5080
    %v5141 = vadd.f32 %v4935, %v5080
    %v5142 = vadd.f32 %v4937, %v5080
    %v5143 = vadd.f32 %v4939, %v5080
    %v5144 = vadd.f32 %v4941, %v5080
    %v5145 = vadd.f32 %v4943, %v5080
    %v5146 = vadd.f32 %v4945, %v5080
    %v5147 = vadd.f32 %v4947, %v5080
    %v5148 = vadd.f32 %v4949, %v5080
    %v5149 = vadd.f32 %v4951, %v5080
    %v5150 = vadd.f32 %v4953, %v5080
    %v5151 = vadd.f32 %v4955, %v5080
    %v5152 = vadd.f32 %v4957, %v5080
    %v5153 = vadd.f32 %v4959, %v5080
    %v5154 = vadd.f32 %v4961, %v5080
    %v5155 = vadd.f32 %v4963, %v5080
    %v5156 = vadd.f32 %v4965, %v5080
    %v5157 = vadd.f32 %v4967, %v5080
    %v5158 = vadd.f32 %v4969, %v5080
    %v5159 = vadd.f32 %v4971, %v5080
    %v5160 = vadd.f32 %v4973, %v5080
    %v5161 = vadd.f32 %v4975, %v5080
    %v5162 = vadd.f32 %v4977, %v5080
    %v5163 = vadd.f32 %v4979, %v5080
    %v5164 = vadd.f32 %v4981, %v5080
    %v5165 = vadd.f32 %v4983, %v5080
    %v5166 = vadd.f32 %v4985, %v5080
    %v5167 = vadd.f32 %v4987, %v5080
    %v5168 = vadd.f32 %v4989, %v5080
    %v5169 = vadd.f32 %v4991, %v5080
    %v5170 = vadd.f32 %v4993, %v5080
    %v5171 = vadd.f32 %v4995, %v5080
    %v5172 = vadd.f32 %v4997, %v5080
    %v5173 = vadd.f32 %v4999, %v5080
    %v5174 = vadd.f32 %v5001, %v5080
    %v5175 = vadd.f32 %v5003, %v5080
    %v5176 = vadd.f32 %v5005, %v5080
    %v5177 = vadd.f32 %v5007, %v5080
    %v5178 = vadd.f32 %v5009, %v5080
    %v5179 = vadd.f32 %v5011, %v5080
    %v5180 = vadd.f32 %v5013, %v5080
    %v5181 = vadd.f32 %v5015, %v5080
    %v5182 = vadd.f32 %v5017, %v5080
    %v5183 = vadd.f32 %v5019, %v5080
    %v5184 = vadd.f32 %v5021, %v5080
    %v5185 = vadd.f32 %v5023, %v5080
    %v5186 = vadd.f32 %v5025, %v5080
    %v5187 = vadd.f32 %v5027, %v5080
    %v5188 = vadd.f32 %v5029, %v5080
    %v5189 = vadd.f32 %v5031, %v5080
    %v5190 = vadd.f32 %v5033, %v5080
    %v5191 = vadd.f32 %v5035, %v5080
    %v5192 = vadd.f32 %v5037, %v5080
    %v5193 = vadd.f32 %v5039, %v5080
    %v5194 = vadd.f32 %v5041, %v5080
    %v5195 = vadd.f32 %v5043, %v5080
    %v5196 = vadd.f32 %v5045, %v5080
    %v5197 = vadd.f32 %v5047, %v5080
    %v5198 = vadd.f32 %v5049, %v5080
    %v5199 = vadd.f32 %v5051, %v5080
    %v5200 = vadd.f32 %v5053, %v5080
    %v5201 = vadd.f32 %v5055, %v5080
    %v5202 = vadd.f32 %v5057, %v5080
    %v5203 = vadd.f32 %v5059, %v5080
    %v5204 = vadd.f32 %v5061, %v5080
    %v5205 = vadd.f32 %v5063, %v5080
    %v5206 = vadd.f32 %v5065, %v5080
    %v5207 = vadd.f32 %v5067, %v5080
    %v5208 = vadd.f32 %v5069, %v5080
    %v5209 = vadd.f32 %v5071, %v5080
    %v5210 = vmul.f32 %v5082, 0.5
    %v5211 = vmul.f32 %v5083, 0.5
    %v5212 = vmul.f32 %v5084, 0.5
    %v5213 = vmul.f32 %v5085, 0.5
    %v5214 = vmul.f32 %v5086, 0.5
    %v5215 = vmul.f32 %v5087, 0.5
    %v5216 = vmul.f32 %v5088, 0.5
    %v5217 = vmul.f32 %v5089, 0.5
    %v5218 = vmul.f32 %v5090, 0.5
    %v5219 = vmul.f32 %v5091, 0.5
    %v5220 = vmul.f32 %v5092, 0.5
    %v5221 = vmul.f32 %v5093, 0.5
    %v5222 = vmul.f32 %v5094, 0.5
    %v5223 = vmul.f32 %v5095, 0.5
    %v5224 = vmul.f32 %v5096, 0.5
    %v5225 = vmul.f32 %v5097, 0.5
    %v5226 = vmul.f32 %v5098, 0.5
    %v5227 = vmul.f32 %v5099, 0.5
    %v5228 = vmul.f32 %v5100, 0.5
    %v5229 = vmul.f32 %v5101, 0.5
    %v5230 = vmul.f32 %v5102, 0.5
    %v5231 = vmul.f32 %v5103, 0.5
    %v5232 = vmul.f32 %v5104, 0.5
    %v5233 = vmul.f32 %v5105, 0.5
    %v5234 = vmul.f32 %v5106, 0.5
    %v5235 = vmul.f32 %v5107, 0.5
    %v5236 = vmul.f32 %v5108, 0.5
    %v5237 = vmul.f32 %v5109, 0.5
    %v5238 = vmul.f32 %v5110, 0.5
    %v5239 = vmul.f32 %v5111, 0.5
    %v5240 = vmul.f32 %v5112, 0.5
    %v5241 = vmul.f32 %v5113, 0.5
    %v5242 = vmul.f32 %v5114, 0.5
    %v5243 = vmul.f32 %v5115, 0.5
    %v5244 = vmul.f32 %v5116, 0.5
    %v5245 = vmul.f32 %v5117, 0.5
    %v5246 = vmul.f32 %v5118, 0.5
    %v5247 = vmul.f32 %v5119, 0.5
    %v5248 = vmul.f32 %v5120, 0.5
    %v5249 = vmul.f32 %v5121, 0.5
    %v5250 = vmul.f32 %v5122, 0.5
    %v5251 = vmul.f32 %v5123, 0.5
    %v5252 = vmul.f32 %v5124, 0.5
    %v5253 = vmul.f32 %v5125, 0.5
    %v5254 = vmul.f32 %v5126, 0.5
    %v5255 = vmul.f32 %v5127, 0.5
    %v5256 = vmul.f32 %v5128, 0.5
    %v5257 = vmul.f32 %v5129, 0.5
    %v5258 = vmul.f32 %v5130, 0.5
    %v5259 = vmul.f32 %v5131, 0.5
    %v5260 = vmul.f32 %v5132, 0.5
    %v5261 = vmul.f32 %v5133, 0.5
    %v5262 = vmul.f32 %v5134, 0.5
    %v5263 = vmul.f32 %v5135, 0.5
    %v5264 = vmul.f32 %v5136, 0.5
    %v5265 = vmul.f32 %v5137, 0.5
    %v5266 = vmul.f32 %v5138, 0.5
    %v5267 = vmul.f32 %v5139, 0.5
    %v5268 = vmul.f32 %v5140, 0.5
    %v5269 = vmul.f32 %v5141, 0.5
    %v5270 = vmul.f32 %v5142, 0.5
    %v5271 = vmul.f32 %v5143, 0.5
    %v5272 = vmul.f32 %v5144, 0.5
    %v5273 = vmul.f32 %v5145, 0.5
    %v5274 = vmul.f32 %v5146, 0.5
    %v5275 = vmul.f32 %v5147, 0.5
    %v5276 = vmul.f32 %v5148, 0.5
    %v5277 = vmul.f32 %v5149, 0.5
    %v5278 = vmul.f32 %v5150, 0.5
    %v5279 = vmul.f32 %v5151, 0.5
    %v5280 = vmul.f32 %v5152, 0.5
    %v5281 = vmul.f32 %v5153, 0.5
    %v5282 = vmul.f32 %v5154, 0.5
    %v5283 = vmul.f32 %v5155, 0.5
    %v5284 = vmul.f32 %v5156, 0.5
    %v5285 = vmul.f32 %v5157, 0.5
    %v5286 = vmul.f32 %v5158, 0.5
    %v5287 = vmul.f32 %v5159, 0.5
    %v5288 = vmul.f32 %v5160, 0.5
    %v5289 = vmul.f32 %v5161, 0.5
    %v5290 = vmul.f32 %v5162, 0.5
    %v5291 = vmul.f32 %v5163, 0.5
    %v5292 = vmul.f32 %v5164, 0.5
    %v5293 = vmul.f32 %v5165, 0.5
    %v5294 = vmul.f32 %v5166, 0.5
    %v5295 = vmul.f32 %v5167, 0.5
    %v5296 = vmul.f32 %v5168, 0.5
    %v5297 = vmul.f32 %v5169, 0.5
    %v5298 = vmul.f32 %v5170, 0.5
    %v5299 = vmul.f32 %v5171, 0.5
    %v5300 = vmul.f32 %v5172, 0.5
    %v5301 = vmul.f32 %v5173, 0.5
    %v5302 = vmul.f32 %v5174, 0.5
    %v5303 = vmul.f32 %v5175, 0.5
    %v5304 = vmul.f32 %v5176, 0.5
    %v5305 = vmul.f32 %v5177, 0.5
    %v5306 = vmul.f32 %v5178, 0.5
    %v5307 = vmul.f32 %v5179, 0.5
    %v5308 = vmul.f32 %v5180, 0.5
    %v5309 = vmul.f32 %v5181, 0.5
    %v5310 = vmul.f32 %v5182, 0.5
    %v5311 = vmul.f32 %v5183, 0.5
    %v5312 = vmul.f32 %v5184, 0.5
    %v5313 = vmul.f32 %v5185, 0.5
    %v5314 = vmul.f32 %v5186, 0.5
    %v5315 = vmul.f32 %v5187, 0.5
    %v5316 = vmul.f32 %v5188, 0.5
    %v5317 = vmul.f32 %v5189, 0.5
    %v5318 = vmul.f32 %v5190, 0.5
    %v5319 = vmul.f32 %v5191, 0.5
    %v5320 = vmul.f32 %v5192, 0.5
    %v5321 = vmul.f32 %v5193, 0.5
    %v5322 = vmul.f32 %v5194, 0.5
    %v5323 = vmul.f32 %v5195, 0.5
    %v5324 = vmul.f32 %v5196, 0.5
    %v5325 = vmul.f32 %v5197, 0.5
    %v5326 = vmul.f32 %v5198, 0.5
    %v5327 = vmul.f32 %v5199, 0.5
    %v5328 = vmul.f32 %v5200, 0.5
    %v5329 = vmul.f32 %v5201, 0.5
    %v5330 = vmul.f32 %v5202, 0.5
    %v5331 = vmul.f32 %v5203, 0.5
    %v5332 = vmul.f32 %v5204, 0.5
    %v5333 = vmul.f32 %v5205, 0.5
    %v5334 = vmul.f32 %v5206, 0.5
    %v5335 = vmul.f32 %v5207, 0.5
    %v5336 = vmul.f32 %v5208, 0.5
    %v5337 = vmul.f32 %v5209, 0.5
    %v5338 = vtanh.pop %v5210
    %v5339 = vtanh.pop %v5211
    %v5340 = vtanh.pop %v5212
    %v5341 = vtanh.pop %v5213
    %v5342 = vtanh.pop %v5214
    %v5343 = vtanh.pop %v5215
    %v5344 = vtanh.pop %v5216
    %v5345 = vtanh.pop %v5217
    %v5346 = vtanh.pop %v5218
    %v5347 = vtanh.pop %v5219
    %v5348 = vtanh.pop %v5220
    %v5349 = vtanh.pop %v5221
    %v5350 = vtanh.pop %v5222
    %v5351 = vtanh.pop %v5223
    %v5352 = vtanh.pop %v5224
    %v5353 = vtanh.pop %v5225
    %v5354 = vtanh.pop %v5226
    %v5355 = vtanh.pop %v5227
    %v5356 = vtanh.pop %v5228
    %v5357 = vtanh.pop %v5229
    %v5358 = vtanh.pop %v5230
    %v5359 = vtanh.pop %v5231
    %v5360 = vtanh.pop %v5232
    %v5361 = vtanh.pop %v5233
    %v5362 = vtanh.pop %v5234
    %v5363 = vtanh.pop %v5235
    %v5364 = vtanh.pop %v5236
    %v5365 = vtanh.pop %v5237
    %v5366 = vtanh.pop %v5238
    %v5367 = vtanh.pop %v5239
    %v5368 = vtanh.pop %v5240
    %v5369 = vtanh.pop %v5241
    %v5370 = vtanh.pop %v5242
    %v5371 = vtanh.pop %v5243
    %v5372 = vtanh.pop %v5244
    %v5373 = vtanh.pop %v5245
    %v5374 = vtanh.pop %v5246
    %v5375 = vtanh.pop %v5247
    %v5376 = vtanh.pop %v5248
    %v5377 = vtanh.pop %v5249
    %v5378 = vtanh.pop %v5250
    %v5379 = vtanh.pop %v5251
    %v5380 = vtanh.pop %v5252
    %v5381 = vtanh.pop %v5253
    %v5382 = vtanh.pop %v5254
    %v5383 = vtanh.pop %v5255
    %v5384 = vtanh.pop %v5256
    %v5385 = vtanh.pop %v5257
    %v5386 = vtanh.pop %v5258
    %v5387 = vtanh.pop %v5259
    %v5388 = vtanh.pop %v5260
    %v5389 = vtanh.pop %v5261
    %v5390 = vtanh.pop %v5262
    %v5391 = vtanh.pop %v5263
    %v5392 = vtanh.pop %v5264
    %v5393 = vtanh.pop %v5265
    %v5394 = vtanh.pop %v5266
    %v5395 = vtanh.pop %v5267
    %v5396 = vtanh.pop %v5268
    %v5397 = vtanh.pop %v5269
    %v5398 = vtanh.pop %v5270
    %v5399 = vtanh.pop %v5271
    %v5400 = vtanh.pop %v5272
    %v5401 = vtanh.pop %v5273
    %v5402 = vtanh.pop %v5274
    %v5403 = vtanh.pop %v5275
    %v5404 = vtanh.pop %v5276
    %v5405 = vtanh.pop %v5277
    %v5406 = vtanh.pop %v5278
    %v5407 = vtanh.pop %v5279
    %v5408 = vtanh.pop %v5280
    %v5409 = vtanh.pop %v5281
    %v5410 = vtanh.pop %v5282
    %v5411 = vtanh.pop %v5283
    %v5412 = vtanh.pop %v5284
    %v5413 = vtanh.pop %v5285
    %v5414 = vtanh.pop %v5286
    %v5415 = vtanh.pop %v5287
    %v5416 = vtanh.pop %v5288
    %v5417 = vtanh.pop %v5289
    %v5418 = vtanh.pop %v5290
    %v5419 = vtanh.pop %v5291
    %v5420 = vtanh.pop %v5292
    %v5421 = vtanh.pop %v5293
    %v5422 = vtanh.pop %v5294
    %v5423 = vtanh.pop %v5295
    %v5424 = vtanh.pop %v5296
    %v5425 = vtanh.pop %v5297
    %v5426 = vtanh.pop %v5298
    %v5427 = vtanh.pop %v5299
    %v5428 = vtanh.pop %v5300
    %v5429 = vtanh.pop %v5301
    %v5430 = vtanh.pop %v5302
    %v5431 = vtanh.pop %v5303
    %v5432 = vtanh.pop %v5304
    %v5433 = vtanh.pop %v5305
    %v5434 = vtanh.pop %v5306
    %v5435 = vtanh.pop %v5307
    %v5436 = vtanh.pop %v5308
    %v5437 = vtanh.pop %v5309
    %v5438 = vtanh.pop %v5310
    %v5439 = vtanh.pop %v5311
    %v5440 = vtanh.pop %v5312
    %v5441 = vtanh.pop %v5313
    %v5442 = vtanh.pop %v5314
    %v5443 = vtanh.pop %v5315
    %v5444 = vtanh.pop %v5316
    %v5445 = vtanh.pop %v5317
    %v5446 = vtanh.pop %v5318
    %v5447 = vtanh.pop %v5319
    %v5448 = vtanh.pop %v5320
    %v5449 = vtanh.pop %v5321
    %v5450 = vtanh.pop %v5322
    %v5451 = vtanh.pop %v5323
    %v5452 = vtanh.pop %v5324
    %v5453 = vtanh.pop %v5325
    %v5454 = vtanh.pop %v5326
    %v5455 = vtanh.pop %v5327
    %v5456 = vtanh.pop %v5328
    %v5457 = vtanh.pop %v5329
    %v5458 = vtanh.pop %v5330
    %v5459 = vtanh.pop %v5331
    %v5460 = vtanh.pop %v5332
    %v5461 = vtanh.pop %v5333
    %v5462 = vtanh.pop %v5334
    %v5463 = vtanh.pop %v5335
    %v5464 = vtanh.pop %v5336
    %v5465 = vtanh.pop %v5337
    %v5466 = vmul.f32 %v5338, 0.5
    %v5467 = vmul.f32 %v5339, 0.5
    %v5468 = vmul.f32 %v5340, 0.5
    %v5469 = vmul.f32 %v5341, 0.5
    %v5470 = vmul.f32 %v5342, 0.5
    %v5471 = vmul.f32 %v5343, 0.5
    %v5472 = vmul.f32 %v5344, 0.5
    %v5473 = vmul.f32 %v5345, 0.5
    %v5474 = vmul.f32 %v5346, 0.5
    %v5475 = vmul.f32 %v5347, 0.5
    %v5476 = vmul.f32 %v5348, 0.5
    %v5477 = vmul.f32 %v5349, 0.5
    %v5478 = vmul.f32 %v5350, 0.5
    %v5479 = vmul.f32 %v5351, 0.5
    %v5480 = vmul.f32 %v5352, 0.5
    %v5481 = vmul.f32 %v5353, 0.5
    %v5482 = vmul.f32 %v5354, 0.5
    %v5483 = vmul.f32 %v5355, 0.5
    %v5484 = vmul.f32 %v5356, 0.5
    %v5485 = vmul.f32 %v5357, 0.5
    %v5486 = vmul.f32 %v5358, 0.5
    %v5487 = vmul.f32 %v5359, 0.5
    %v5488 = vmul.f32 %v5360, 0.5
    %v5489 = vmul.f32 %v5361, 0.5
    %v5490 = vmul.f32 %v5362, 0.5
    %v5491 = vmul.f32 %v5363, 0.5
    %v5492 = vmul.f32 %v5364, 0.5
    %v5493 = vmul.f32 %v5365, 0.5
    %v5494 = vmul.f32 %v5366, 0.5
    %v5495 = vmul.f32 %v5367, 0.5
    %v5496 = vmul.f32 %v5368, 0.5
    %v5497 = vmul.f32 %v5369, 0.5
    %v5498 = vmul.f32 %v5370, 0.5
    %v5499 = vmul.f32 %v5371, 0.5
    %v5500 = vmul.f32 %v5372, 0.5
    %v5501 = vmul.f32 %v5373, 0.5
    %v5502 = vmul.f32 %v5374, 0.5
    %v5503 = vmul.f32 %v5375, 0.5
    %v5504 = vmul.f32 %v5376, 0.5
    %v5505 = vmul.f32 %v5377, 0.5
    %v5506 = vmul.f32 %v5378, 0.5
    %v5507 = vmul.f32 %v5379, 0.5
    %v5508 = vmul.f32 %v5380, 0.5
    %v5509 = vmul.f32 %v5381, 0.5
    %v5510 = vmul.f32 %v5382, 0.5
    %v5511 = vmul.f32 %v5383, 0.5
    %v5512 = vmul.f32 %v5384, 0.5
    %v5513 = vmul.f32 %v5385, 0.5
    %v5514 = vmul.f32 %v5386, 0.5
    %v5515 = vmul.f32 %v5387, 0.5
    %v5516 = vmul.f32 %v5388, 0.5
    %v5517 = vmul.f32 %v5389, 0.5
    %v5518 = vmul.f32 %v5390, 0.5
    %v5519 = vmul.f32 %v5391, 0.5
    %v5520 = vmul.f32 %v5392, 0.5
    %v5521 = vmul.f32 %v5393, 0.5
    %v5522 = vmul.f32 %v5394, 0.5
    %v5523 = vmul.f32 %v5395, 0.5
    %v5524 = vmul.f32 %v5396, 0.5
    %v5525 = vmul.f32 %v5397, 0.5
    %v5526 = vmul.f32 %v5398, 0.5
    %v5527 = vmul.f32 %v5399, 0.5
    %v5528 = vmul.f32 %v5400, 0.5
    %v5529 = vmul.f32 %v5401, 0.5
    %v5530 = vmul.f32 %v5402, 0.5
    %v5531 = vmul.f32 %v5403, 0.5
    %v5532 = vmul.f32 %v5404, 0.5
    %v5533 = vmul.f32 %v5405, 0.5
    %v5534 = vmul.f32 %v5406, 0.5
    %v5535 = vmul.f32 %v5407, 0.5
    %v5536 = vmul.f32 %v5408, 0.5
    %v5537 = vmul.f32 %v5409, 0.5
    %v5538 = vmul.f32 %v5410, 0.5
    %v5539 = vmul.f32 %v5411, 0.5
    %v5540 = vmul.f32 %v5412, 0.5
    %v5541 = vmul.f32 %v5413, 0.5
    %v5542 = vmul.f32 %v5414, 0.5
    %v5543 = vmul.f32 %v5415, 0.5
    %v5544 = vmul.f32 %v5416, 0.5
    %v5545 = vmul.f32 %v5417, 0.5
    %v5546 = vmul.f32 %v5418, 0.5
    %v5547 = vmul.f32 %v5419, 0.5
    %v5548 = vmul.f32 %v5420, 0.5
    %v5549 = vmul.f32 %v5421, 0.5
    %v5550 = vmul.f32 %v5422, 0.5
    %v5551 = vmul.f32 %v5423, 0.5
    %v5552 = vmul.f32 %v5424, 0.5
    %v5553 = vmul.f32 %v5425, 0.5
    %v5554 = vmul.f32 %v5426, 0.5
    %v5555 = vmul.f32 %v5427, 0.5
    %v5556 = vmul.f32 %v5428, 0.5
    %v5557 = vmul.f32 %v5429, 0.5
    %v5558 = vmul.f32 %v5430, 0.5
    %v5559 = vmul.f32 %v5431, 0.5
    %v5560 = vmul.f32 %v5432, 0.5
    %v5561 = vmul.f32 %v5433, 0.5
    %v5562 = vmul.f32 %v5434, 0.5
    %v5563 = vmul.f32 %v5435, 0.5
    %v5564 = vmul.f32 %v5436, 0.5
    %v5565 = vmul.f32 %v5437, 0.5
    %v5566 = vmul.f32 %v5438, 0.5
    %v5567 = vmul.f32 %v5439, 0.5
    %v5568 = vmul.f32 %v5440, 0.5
    %v5569 = vmul.f32 %v5441, 0.5
    %v5570 = vmul.f32 %v5442, 0.5
    %v5571 = vmul.f32 %v5443, 0.5
    %v5572 = vmul.f32 %v5444, 0.5
    %v5573 = vmul.f32 %v5445, 0.5
    %v5574 = vmul.f32 %v5446, 0.5
    %v5575 = vmul.f32 %v5447, 0.5
    %v5576 = vmul.f32 %v5448, 0.5
    %v5577 = vmul.f32 %v5449, 0.5
    %v5578 = vmul.f32 %v5450, 0.5
    %v5579 = vmul.f32 %v5451, 0.5
    %v5580 = vmul.f32 %v5452, 0.5
    %v5581 = vmul.f32 %v5453, 0.5
    %v5582 = vmul.f32 %v5454, 0.5
    %v5583 = vmul.f32 %v5455, 0.5
    %v5584 = vmul.f32 %v5456, 0.5
    %v5585 = vmul.f32 %v5457, 0.5
    %v5586 = vmul.f32 %v5458, 0.5
    %v5587 = vmul.f32 %v5459, 0.5
    %v5588 = vmul.f32 %v5460, 0.5
    %v5589 = vmul.f32 %v5461, 0.5
    %v5590 = vmul.f32 %v5462, 0.5
    %v5591 = vmul.f32 %v5463, 0.5
    %v5592 = vmul.f32 %v5464, 0.5
    %v5593 = vmul.f32 %v5465, 0.5
    %v5594 = vadd.f32 %v5466, 0.5
    %v5595 = vadd.f32 %v5467, 0.5
    %v5596 = vadd.f32 %v5468, 0.5
    %v5597 = vadd.f32 %v5469, 0.5
    %v5598 = vadd.f32 %v5470, 0.5
    %v5599 = vadd.f32 %v5471, 0.5
    %v5600 = vadd.f32 %v5472, 0.5
    %v5601 = vadd.f32 %v5473, 0.5
    %v5602 = vadd.f32 %v5474, 0.5
    %v5603 = vadd.f32 %v5475, 0.5
    %v5604 = vadd.f32 %v5476, 0.5
    %v5605 = vadd.f32 %v5477, 0.5
    %v5606 = vadd.f32 %v5478, 0.5
    %v5607 = vadd.f32 %v5479, 0.5
    %v5608 = vadd.f32 %v5480, 0.5
    %v5609 = vadd.f32 %v5481, 0.5
    %v5610 = vadd.f32 %v5482, 0.5
    %v5611 = vadd.f32 %v5483, 0.5
    %v5612 = vadd.f32 %v5484, 0.5
    %v5613 = vadd.f32 %v5485, 0.5
    %v5614 = vadd.f32 %v5486, 0.5
    %v5615 = vadd.f32 %v5487, 0.5
    %v5616 = vadd.f32 %v5488, 0.5
    %v5617 = vadd.f32 %v5489, 0.5
    %v5618 = vadd.f32 %v5490, 0.5
    %v5619 = vadd.f32 %v5491, 0.5
    %v5620 = vadd.f32 %v5492, 0.5
    %v5621 = vadd.f32 %v5493, 0.5
    %v5622 = vadd.f32 %v5494, 0.5
    %v5623 = vadd.f32 %v5495, 0.5
    %v5624 = vadd.f32 %v5496, 0.5
    %v5625 = vadd.f32 %v5497, 0.5
    %v5626 = vadd.f32 %v5498, 0.5
    %v5627 = vadd.f32 %v5499, 0.5
    %v5628 = vadd.f32 %v5500, 0.5
    %v5629 = vadd.f32 %v5501, 0.5
    %v5630 = vadd.f32 %v5502, 0.5
    %v5631 = vadd.f32 %v5503, 0.5
    %v5632 = vadd.f32 %v5504, 0.5
    %v5633 = vadd.f32 %v5505, 0.5
    %v5634 = vadd.f32 %v5506, 0.5
    %v5635 = vadd.f32 %v5507, 0.5
    %v5636 = vadd.f32 %v5508, 0.5
    %v5637 = vadd.f32 %v5509, 0.5
    %v5638 = vadd.f32 %v5510, 0.5
    %v5639 = vadd.f32 %v5511, 0.5
    %v5640 = vadd.f32 %v5512, 0.5
    %v5641 = vadd.f32 %v5513, 0.5
    %v5642 = vadd.f32 %v5514, 0.5
    %v5643 = vadd.f32 %v5515, 0.5
    %v5644 = vadd.f32 %v5516, 0.5
    %v5645 = vadd.f32 %v5517, 0.5
    %v5646 = vadd.f32 %v5518, 0.5
    %v5647 = vadd.f32 %v5519, 0.5
    %v5648 = vadd.f32 %v5520, 0.5
    %v5649 = vadd.f32 %v5521, 0.5
    %v5650 = vadd.f32 %v5522, 0.5
    %v5651 = vadd.f32 %v5523, 0.5
    %v5652 = vadd.f32 %v5524, 0.5
    %v5653 = vadd.f32 %v5525, 0.5
    %v5654 = vadd.f32 %v5526, 0.5
    %v5655 = vadd.f32 %v5527, 0.5
    %v5656 = vadd.f32 %v5528, 0.5
    %v5657 = vadd.f32 %v5529, 0.5
    %v5658 = vadd.f32 %v5530, 0.5
    %v5659 = vadd.f32 %v5531, 0.5
    %v5660 = vadd.f32 %v5532, 0.5
    %v5661 = vadd.f32 %v5533, 0.5
    %v5662 = vadd.f32 %v5534, 0.5
    %v5663 = vadd.f32 %v5535, 0.5
    %v5664 = vadd.f32 %v5536, 0.5
    %v5665 = vadd.f32 %v5537, 0.5
    %v5666 = vadd.f32 %v5538, 0.5
    %v5667 = vadd.f32 %v5539, 0.5
    %v5668 = vadd.f32 %v5540, 0.5
    %v5669 = vadd.f32 %v5541, 0.5
    %v5670 = vadd.f32 %v5542, 0.5
    %v5671 = vadd.f32 %v5543, 0.5
    %v5672 = vadd.f32 %v5544, 0.5
    %v5673 = vadd.f32 %v5545, 0.5
    %v5674 = vadd.f32 %v5546, 0.5
    %v5675 = vadd.f32 %v5547, 0.5
    %v5676 = vadd.f32 %v5548, 0.5
    %v5677 = vadd.f32 %v5549, 0.5
    %v5678 = vadd.f32 %v5550, 0.5
    %v5679 = vadd.f32 %v5551, 0.5
    %v5680 = vadd.f32 %v5552, 0.5
    %v5681 = vadd.f32 %v5553, 0.5
    %v5682 = vadd.f32 %v5554, 0.5
    %v5683 = vadd.f32 %v5555, 0.5
    %v5684 = vadd.f32 %v5556, 0.5
    %v5685 = vadd.f32 %v5557, 0.5
    %v5686 = vadd.f32 %v5558, 0.5
    %v5687 = vadd.f32 %v5559, 0.5
    %v5688 = vadd.f32 %v5560, 0.5
    %v5689 = vadd.f32 %v5561, 0.5
    %v5690 = vadd.f32 %v5562, 0.5
    %v5691 = vadd.f32 %v5563, 0.5
    %v5692 = vadd.f32 %v5564, 0.5
    %v5693 = vadd.f32 %v5565, 0.5
    %v5694 = vadd.f32 %v5566, 0.5
    %v5695 = vadd.f32 %v5567, 0.5
    %v5696 = vadd.f32 %v5568, 0.5
    %v5697 = vadd.f32 %v5569, 0.5
    %v5698 = vadd.f32 %v5570, 0.5
    %v5699 = vadd.f32 %v5571, 0.5
    %v5700 = vadd.f32 %v5572, 0.5
    %v5701 = vadd.f32 %v5573, 0.5
    %v5702 = vadd.f32 %v5574, 0.5
    %v5703 = vadd.f32 %v5575, 0.5
    %v5704 = vadd.f32 %v5576, 0.5
    %v5705 = vadd.f32 %v5577, 0.5
    %v5706 = vadd.f32 %v5578, 0.5
    %v5707 = vadd.f32 %v5579, 0.5
    %v5708 = vadd.f32 %v5580, 0.5
    %v5709 = vadd.f32 %v5581, 0.5
    %v5710 = vadd.f32 %v5582, 0.5
    %v5711 = vadd.f32 %v5583, 0.5
    %v5712 = vadd.f32 %v5584, 0.5
    %v5713 = vadd.f32 %v5585, 0.5
    %v5714 = vadd.f32 %v5586, 0.5
    %v5715 = vadd.f32 %v5587, 0.5
    %v5716 = vadd.f32 %v5588, 0.5
    %v5717 = vadd.f32 %v5589, 0.5
    %v5718 = vadd.f32 %v5590, 0.5
    %v5719 = vadd.f32 %v5591, 0.5
    %v5720 = vadd.f32 %v5592, 0.5
    %v5721 = vadd.f32 %v5593, 0.5
    %v5850 = vlaneseq
    %v5851 = vand.u32 %v5850, 127
    %v5852 = vlaneseq
    %v5853 = vshrl.u32 %v5852, 7
    %v5854 = vsub.s32 %v5851, %v5853
    %v5855 = vrot.slane %v5594, %v5854
    %v5856 = vadd.s32 %v5851, 4294967288
    %v5857 = vlaneseq
    %v5858 = vshrl.u32 %v5857, 7
    %v5859 = vsub.s32 %v5856, %v5858
    %v5860 = vrot.slane %v5595, %v5859
    %vm5861 = vcmask 130112
    %v5862 = vsel %vm5861, %v5860, %v5855
    %v5863 = vadd.s32 %v5851, 4294967280
    %v5864 = vlaneseq
    %v5865 = vshrl.u32 %v5864, 7
    %v5866 = vsub.s32 %v5863, %v5865
    %v5867 = vrot.slane %v5596, %v5866
    %vm5868 = vcmask 195712
    %v5869 = vsel %vm5868, %v5867, %v5862
    %v5870 = vadd.s32 %v5851, 4294967272
    %v5871 = vlaneseq
    %v5872 = vshrl.u32 %v5871, 7
    %v5873 = vsub.s32 %v5870, %v5872
    %v5874 = vrot.slane %v5597, %v5873
    %vm5875 = vcmask 261312
    %v5876 = vsel %vm5875, %v5874, %v5869
    %v5877 = vadd.s32 %v5851, 4294967264
    %v5878 = vlaneseq
    %v5879 = vshrl.u32 %v5878, 7
    %v5880 = vsub.s32 %v5877, %v5879
    %v5881 = vrot.slane %v5598, %v5880
    %vm5882 = vcmask 326912
    %v5883 = vsel %vm5882, %v5881, %v5876
    %v5884 = vadd.s32 %v5851, 4294967256
    %v5885 = vlaneseq
    %v5886 = vshrl.u32 %v5885, 7
    %v5887 = vsub.s32 %v5884, %v5886
    %v5888 = vrot.slane %v5599, %v5887
    %vm5889 = vcmask 392512
    %v5890 = vsel %vm5889, %v5888, %v5883
    %v5891 = vadd.s32 %v5851, 4294967248
    %v5892 = vlaneseq
    %v5893 = vshrl.u32 %v5892, 7
    %v5894 = vsub.s32 %v5891, %v5893
    %v5895 = vrot.slane %v5600, %v5894
    %vm5896 = vcmask 458112
    %v5897 = vsel %vm5896, %v5895, %v5890
    %v5898 = vadd.s32 %v5851, 4294967240
    %v5899 = vlaneseq
    %v5900 = vshrl.u32 %v5899, 7
    %v5901 = vsub.s32 %v5898, %v5900
    %v5902 = vrot.slane %v5601, %v5901
    %vm5903 = vcmask 523712
    %v5904 = vsel %vm5903, %v5902, %v5897
    %v5905 = vadd.s32 %v5851, 4294967232
    %v5906 = vlaneseq
    %v5907 = vshrl.u32 %v5906, 7
    %v5908 = vsub.s32 %v5905, %v5907
    %v5909 = vrot.slane %v5602, %v5908
    %vm5910 = vcmask 589312
    %v5911 = vsel %vm5910, %v5909, %v5904
    %v5912 = vadd.s32 %v5851, 4294967224
    %v5913 = vlaneseq
    %v5914 = vshrl.u32 %v5913, 7
    %v5915 = vsub.s32 %v5912, %v5914
    %v5916 = vrot.slane %v5603, %v5915
    %vm5917 = vcmask 654912
    %v5918 = vsel %vm5917, %v5916, %v5911
    %v5919 = vadd.s32 %v5851, 4294967216
    %v5920 = vlaneseq
    %v5921 = vshrl.u32 %v5920, 7
    %v5922 = vsub.s32 %v5919, %v5921
    %v5923 = vrot.slane %v5604, %v5922
    %vm5924 = vcmask 720512
    %v5925 = vsel %vm5924, %v5923, %v5918
    %v5926 = vadd.s32 %v5851, 4294967208
    %v5927 = vlaneseq
    %v5928 = vshrl.u32 %v5927, 7
    %v5929 = vsub.s32 %v5926, %v5928
    %v5930 = vrot.slane %v5605, %v5929
    %vm5931 = vcmask 786112
    %v5932 = vsel %vm5931, %v5930, %v5925
    %v5933 = vadd.s32 %v5851, 4294967200
    %v5934 = vlaneseq
    %v5935 = vshrl.u32 %v5934, 7
    %v5936 = vsub.s32 %v5933, %v5935
    %v5937 = vrot.slane %v5606, %v5936
    %vm5938 = vcmask 851712
    %v5939 = vsel %vm5938, %v5937, %v5932
    %v5940 = vadd.s32 %v5851, 4294967192
    %v5941 = vlaneseq
    %v5942 = vshrl.u32 %v5941, 7
    %v5943 = vsub.s32 %v5940, %v5942
    %v5944 = vrot.slane %v5607, %v5943
    %vm5945 = vcmask 917312
    %v5946 = vsel %vm5945, %v5944, %v5939
    %v5947 = vadd.s32 %v5851, 4294967184
    %v5948 = vlaneseq
    %v5949 = vshrl.u32 %v5948, 7
    %v5950 = vsub.s32 %v5947, %v5949
    %v5951 = vrot.slane %v5608, %v5950
    %vm5952 = vcmask 982912
    %v5953 = vsel %vm5952, %v5951, %v5946
    %v5954 = vadd.s32 %v5851, 4294967176
    %v5955 = vlaneseq
    %v5956 = vshrl.u32 %v5955, 7
    %v5957 = vsub.s32 %v5954, %v5956
    %v5958 = vrot.slane %v5609, %v5957
    %vm5959 = vcmask 1048512
    %v5960 = vsel %vm5959, %v5958, %v5953
    %v5961 = vlaneseq
    %v5962 = vshrl.u32 %v5961, 7
    %v5963 = vsub.s32 %v5851, %v5962
    %v5964 = vrot.slane %v5610, %v5963
    %v5965 = vlaneseq
    %v5966 = vshrl.u32 %v5965, 7
    %v5967 = vsub.s32 %v5856, %v5966
    %v5968 = vrot.slane %v5611, %v5967
    %v5969 = vsel %vm5861, %v5968, %v5964
    %v5970 = vlaneseq
    %v5971 = vshrl.u32 %v5970, 7
    %v5972 = vsub.s32 %v5863, %v5971
    %v5973 = vrot.slane %v5612, %v5972
    %v5974 = vsel %vm5868, %v5973, %v5969
    %v5975 = vlaneseq
    %v5976 = vshrl.u32 %v5975, 7
    %v5977 = vsub.s32 %v5870, %v5976
    %v5978 = vrot.slane %v5613, %v5977
    %v5979 = vsel %vm5875, %v5978, %v5974
    %v5980 = vlaneseq
    %v5981 = vshrl.u32 %v5980, 7
    %v5982 = vsub.s32 %v5877, %v5981
    %v5983 = vrot.slane %v5614, %v5982
    %v5984 = vsel %vm5882, %v5983, %v5979
    %v5985 = vlaneseq
    %v5986 = vshrl.u32 %v5985, 7
    %v5987 = vsub.s32 %v5884, %v5986
    %v5988 = vrot.slane %v5615, %v5987
    %v5989 = vsel %vm5889, %v5988, %v5984
    %v5990 = vlaneseq
    %v5991 = vshrl.u32 %v5990, 7
    %v5992 = vsub.s32 %v5891, %v5991
    %v5993 = vrot.slane %v5616, %v5992
    %v5994 = vsel %vm5896, %v5993, %v5989
    %v5995 = vlaneseq
    %v5996 = vshrl.u32 %v5995, 7
    %v5997 = vsub.s32 %v5898, %v5996
    %v5998 = vrot.slane %v5617, %v5997
    %v5999 = vsel %vm5903, %v5998, %v5994
    %v6000 = vlaneseq
    %v6001 = vshrl.u32 %v6000, 7
    %v6002 = vsub.s32 %v5905, %v6001
    %v6003 = vrot.slane %v5618, %v6002
    %v6004 = vsel %vm5910, %v6003, %v5999
    %v6005 = vlaneseq
    %v6006 = vshrl.u32 %v6005, 7
    %v6007 = vsub.s32 %v5912, %v6006
    %v6008 = vrot.slane %v5619, %v6007
    %v6009 = vsel %vm5917, %v6008, %v6004
    %v6010 = vlaneseq
    %v6011 = vshrl.u32 %v6010, 7
    %v6012 = vsub.s32 %v5919, %v6011
    %v6013 = vrot.slane %v5620, %v6012
    %v6014 = vsel %vm5924, %v6013, %v6009
    %v6015 = vlaneseq
    %v6016 = vshrl.u32 %v6015, 7
    %v6017 = vsub.s32 %v5926, %v6016
    %v6018 = vrot.slane %v5621, %v6017
    %v6019 = vsel %vm5931, %v6018, %v6014
    %v6020 = vlaneseq
    %v6021 = vshrl.u32 %v6020, 7
    %v6022 = vsub.s32 %v5933, %v6021
    %v6023 = vrot.slane %v5622, %v6022
    %v6024 = vsel %vm5938, %v6023, %v6019
    %v6025 = vlaneseq
    %v6026 = vshrl.u32 %v6025, 7
    %v6027 = vsub.s32 %v5940, %v6026
    %v6028 = vrot.slane %v5623, %v6027
    %v6029 = vsel %vm5945, %v6028, %v6024
    %v6030 = vlaneseq
    %v6031 = vshrl.u32 %v6030, 7
    %v6032 = vsub.s32 %v5947, %v6031
    %v6033 = vrot.slane %v5624, %v6032
    %v6034 = vsel %vm5952, %v6033, %v6029
    %v6035 = vlaneseq
    %v6036 = vshrl.u32 %v6035, 7
    %v6037 = vsub.s32 %v5954, %v6036
    %v6038 = vrot.slane %v5625, %v6037
    %v6039 = vsel %vm5959, %v6038, %v6034
    %v6040 = vlaneseq
    %v6041 = vshrl.u32 %v6040, 7
    %v6042 = vsub.s32 %v5851, %v6041
    %v6043 = vrot.slane %v5626, %v6042
    %v6044 = vlaneseq
    %v6045 = vshrl.u32 %v6044, 7
    %v6046 = vsub.s32 %v5856, %v6045
    %v6047 = vrot.slane %v5627, %v6046
    %v6048 = vsel %vm5861, %v6047, %v6043
    %v6049 = vlaneseq
    %v6050 = vshrl.u32 %v6049, 7
    %v6051 = vsub.s32 %v5863, %v6050
    %v6052 = vrot.slane %v5628, %v6051
    %v6053 = vsel %vm5868, %v6052, %v6048
    %v6054 = vlaneseq
    %v6055 = vshrl.u32 %v6054, 7
    %v6056 = vsub.s32 %v5870, %v6055
    %v6057 = vrot.slane %v5629, %v6056
    %v6058 = vsel %vm5875, %v6057, %v6053
    %v6059 = vlaneseq
    %v6060 = vshrl.u32 %v6059, 7
    %v6061 = vsub.s32 %v5877, %v6060
    %v6062 = vrot.slane %v5630, %v6061
    %v6063 = vsel %vm5882, %v6062, %v6058
    %v6064 = vlaneseq
    %v6065 = vshrl.u32 %v6064, 7
    %v6066 = vsub.s32 %v5884, %v6065
    %v6067 = vrot.slane %v5631, %v6066
    %v6068 = vsel %vm5889, %v6067, %v6063
    %v6069 = vlaneseq
    %v6070 = vshrl.u32 %v6069, 7
    %v6071 = vsub.s32 %v5891, %v6070
    %v6072 = vrot.slane %v5632, %v6071
    %v6073 = vsel %vm5896, %v6072, %v6068
    %v6074 = vlaneseq
    %v6075 = vshrl.u32 %v6074, 7
    %v6076 = vsub.s32 %v5898, %v6075
    %v6077 = vrot.slane %v5633, %v6076
    %v6078 = vsel %vm5903, %v6077, %v6073
    %v6079 = vlaneseq
    %v6080 = vshrl.u32 %v6079, 7
    %v6081 = vsub.s32 %v5905, %v6080
    %v6082 = vrot.slane %v5634, %v6081
    %v6083 = vsel %vm5910, %v6082, %v6078
    %v6084 = vlaneseq
    %v6085 = vshrl.u32 %v6084, 7
    %v6086 = vsub.s32 %v5912, %v6085
    %v6087 = vrot.slane %v5635, %v6086
    %v6088 = vsel %vm5917, %v6087, %v6083
    %v6089 = vlaneseq
    %v6090 = vshrl.u32 %v6089, 7
    %v6091 = vsub.s32 %v5919, %v6090
    %v6092 = vrot.slane %v5636, %v6091
    %v6093 = vsel %vm5924, %v6092, %v6088
    %v6094 = vlaneseq
    %v6095 = vshrl.u32 %v6094, 7
    %v6096 = vsub.s32 %v5926, %v6095
    %v6097 = vrot.slane %v5637, %v6096
    %v6098 = vsel %vm5931, %v6097, %v6093
    %v6099 = vlaneseq
    %v6100 = vshrl.u32 %v6099, 7
    %v6101 = vsub.s32 %v5933, %v6100
    %v6102 = vrot.slane %v5638, %v6101
    %v6103 = vsel %vm5938, %v6102, %v6098
    %v6104 = vlaneseq
    %v6105 = vshrl.u32 %v6104, 7
    %v6106 = vsub.s32 %v5940, %v6105
    %v6107 = vrot.slane %v5639, %v6106
    %v6108 = vsel %vm5945, %v6107, %v6103
    %v6109 = vlaneseq
    %v6110 = vshrl.u32 %v6109, 7
    %v6111 = vsub.s32 %v5947, %v6110
    %v6112 = vrot.slane %v5640, %v6111
    %v6113 = vsel %vm5952, %v6112, %v6108
    %v6114 = vlaneseq
    %v6115 = vshrl.u32 %v6114, 7
    %v6116 = vsub.s32 %v5954, %v6115
    %v6117 = vrot.slane %v5641, %v6116
    %v6118 = vsel %vm5959, %v6117, %v6113
    %v6119 = vlaneseq
    %v6120 = vshrl.u32 %v6119, 7
    %v6121 = vsub.s32 %v5851, %v6120
    %v6122 = vrot.slane %v5642, %v6121
    %v6123 = vlaneseq
    %v6124 = vshrl.u32 %v6123, 7
    %v6125 = vsub.s32 %v5856, %v6124
    %v6126 = vrot.slane %v5643, %v6125
    %v6127 = vsel %vm5861, %v6126, %v6122
    %v6128 = vlaneseq
    %v6129 = vshrl.u32 %v6128, 7
    %v6130 = vsub.s32 %v5863, %v6129
    %v6131 = vrot.slane %v5644, %v6130
    %v6132 = vsel %vm5868, %v6131, %v6127
    %v6133 = vlaneseq
    %v6134 = vshrl.u32 %v6133, 7
    %v6135 = vsub.s32 %v5870, %v6134
    %v6136 = vrot.slane %v5645, %v6135
    %v6137 = vsel %vm5875, %v6136, %v6132
    %v6138 = vlaneseq
    %v6139 = vshrl.u32 %v6138, 7
    %v6140 = vsub.s32 %v5877, %v6139
    %v6141 = vrot.slane %v5646, %v6140
    %v6142 = vsel %vm5882, %v6141, %v6137
    %v6143 = vlaneseq
    %v6144 = vshrl.u32 %v6143, 7
    %v6145 = vsub.s32 %v5884, %v6144
    %v6146 = vrot.slane %v5647, %v6145
    %v6147 = vsel %vm5889, %v6146, %v6142
    %v6148 = vlaneseq
    %v6149 = vshrl.u32 %v6148, 7
    %v6150 = vsub.s32 %v5891, %v6149
    %v6151 = vrot.slane %v5648, %v6150
    %v6152 = vsel %vm5896, %v6151, %v6147
    %v6153 = vlaneseq
    %v6154 = vshrl.u32 %v6153, 7
    %v6155 = vsub.s32 %v5898, %v6154
    %v6156 = vrot.slane %v5649, %v6155
    %v6157 = vsel %vm5903, %v6156, %v6152
    %v6158 = vlaneseq
    %v6159 = vshrl.u32 %v6158, 7
    %v6160 = vsub.s32 %v5905, %v6159
    %v6161 = vrot.slane %v5650, %v6160
    %v6162 = vsel %vm5910, %v6161, %v6157
    %v6163 = vlaneseq
    %v6164 = vshrl.u32 %v6163, 7
    %v6165 = vsub.s32 %v5912, %v6164
    %v6166 = vrot.slane %v5651, %v6165
    %v6167 = vsel %vm5917, %v6166, %v6162
    %v6168 = vlaneseq
    %v6169 = vshrl.u32 %v6168, 7
    %v6170 = vsub.s32 %v5919, %v6169
    %v6171 = vrot.slane %v5652, %v6170
    %v6172 = vsel %vm5924, %v6171, %v6167
    %v6173 = vlaneseq
    %v6174 = vshrl.u32 %v6173, 7
    %v6175 = vsub.s32 %v5926, %v6174
    %v6176 = vrot.slane %v5653, %v6175
    %v6177 = vsel %vm5931, %v6176, %v6172
    %v6178 = vlaneseq
    %v6179 = vshrl.u32 %v6178, 7
    %v6180 = vsub.s32 %v5933, %v6179
    %v6181 = vrot.slane %v5654, %v6180
    %v6182 = vsel %vm5938, %v6181, %v6177
    %v6183 = vlaneseq
    %v6184 = vshrl.u32 %v6183, 7
    %v6185 = vsub.s32 %v5940, %v6184
    %v6186 = vrot.slane %v5655, %v6185
    %v6187 = vsel %vm5945, %v6186, %v6182
    %v6188 = vlaneseq
    %v6189 = vshrl.u32 %v6188, 7
    %v6190 = vsub.s32 %v5947, %v6189
    %v6191 = vrot.slane %v5656, %v6190
    %v6192 = vsel %vm5952, %v6191, %v6187
    %v6193 = vlaneseq
    %v6194 = vshrl.u32 %v6193, 7
    %v6195 = vsub.s32 %v5954, %v6194
    %v6196 = vrot.slane %v5657, %v6195
    %v6197 = vsel %vm5959, %v6196, %v6192
    %v6198 = vlaneseq
    %v6199 = vshrl.u32 %v6198, 7
    %v6200 = vsub.s32 %v5851, %v6199
    %v6201 = vrot.slane %v5658, %v6200
    %v6202 = vlaneseq
    %v6203 = vshrl.u32 %v6202, 7
    %v6204 = vsub.s32 %v5856, %v6203
    %v6205 = vrot.slane %v5659, %v6204
    %v6206 = vsel %vm5861, %v6205, %v6201
    %v6207 = vlaneseq
    %v6208 = vshrl.u32 %v6207, 7
    %v6209 = vsub.s32 %v5863, %v6208
    %v6210 = vrot.slane %v5660, %v6209
    %v6211 = vsel %vm5868, %v6210, %v6206
    %v6212 = vlaneseq
    %v6213 = vshrl.u32 %v6212, 7
    %v6214 = vsub.s32 %v5870, %v6213
    %v6215 = vrot.slane %v5661, %v6214
    %v6216 = vsel %vm5875, %v6215, %v6211
    %v6217 = vlaneseq
    %v6218 = vshrl.u32 %v6217, 7
    %v6219 = vsub.s32 %v5877, %v6218
    %v6220 = vrot.slane %v5662, %v6219
    %v6221 = vsel %vm5882, %v6220, %v6216
    %v6222 = vlaneseq
    %v6223 = vshrl.u32 %v6222, 7
    %v6224 = vsub.s32 %v5884, %v6223
    %v6225 = vrot.slane %v5663, %v6224
    %v6226 = vsel %vm5889, %v6225, %v6221
    %v6227 = vlaneseq
    %v6228 = vshrl.u32 %v6227, 7
    %v6229 = vsub.s32 %v5891, %v6228
    %v6230 = vrot.slane %v5664, %v6229
    %v6231 = vsel %vm5896, %v6230, %v6226
    %v6232 = vlaneseq
    %v6233 = vshrl.u32 %v6232, 7
    %v6234 = vsub.s32 %v5898, %v6233
    %v6235 = vrot.slane %v5665, %v6234
    %v6236 = vsel %vm5903, %v6235, %v6231
    %v6237 = vlaneseq
    %v6238 = vshrl.u32 %v6237, 7
    %v6239 = vsub.s32 %v5905, %v6238
    %v6240 = vrot.slane %v5666, %v6239
    %v6241 = vsel %vm5910, %v6240, %v6236
    %v6242 = vlaneseq
    %v6243 = vshrl.u32 %v6242, 7
    %v6244 = vsub.s32 %v5912, %v6243
    %v6245 = vrot.slane %v5667, %v6244
    %v6246 = vsel %vm5917, %v6245, %v6241
    %v6247 = vlaneseq
    %v6248 = vshrl.u32 %v6247, 7
    %v6249 = vsub.s32 %v5919, %v6248
    %v6250 = vrot.slane %v5668, %v6249
    %v6251 = vsel %vm5924, %v6250, %v6246
    %v6252 = vlaneseq
    %v6253 = vshrl.u32 %v6252, 7
    %v6254 = vsub.s32 %v5926, %v6253
    %v6255 = vrot.slane %v5669, %v6254
    %v6256 = vsel %vm5931, %v6255, %v6251
    %v6257 = vlaneseq
    %v6258 = vshrl.u32 %v6257, 7
    %v6259 = vsub.s32 %v5933, %v6258
    %v6260 = vrot.slane %v5670, %v6259
    %v6261 = vsel %vm5938, %v6260, %v6256
    %v6262 = vlaneseq
    %v6263 = vshrl.u32 %v6262, 7
    %v6264 = vsub.s32 %v5940, %v6263
    %v6265 = vrot.slane %v5671, %v6264
    %v6266 = vsel %vm5945, %v6265, %v6261
    %v6267 = vlaneseq
    %v6268 = vshrl.u32 %v6267, 7
    %v6269 = vsub.s32 %v5947, %v6268
    %v6270 = vrot.slane %v5672, %v6269
    %v6271 = vsel %vm5952, %v6270, %v6266
    %v6272 = vlaneseq
    %v6273 = vshrl.u32 %v6272, 7
    %v6274 = vsub.s32 %v5954, %v6273
    %v6275 = vrot.slane %v5673, %v6274
    %v6276 = vsel %vm5959, %v6275, %v6271
    %v6277 = vlaneseq
    %v6278 = vshrl.u32 %v6277, 7
    %v6279 = vsub.s32 %v5851, %v6278
    %v6280 = vrot.slane %v5674, %v6279
    %v6281 = vlaneseq
    %v6282 = vshrl.u32 %v6281, 7
    %v6283 = vsub.s32 %v5856, %v6282
    %v6284 = vrot.slane %v5675, %v6283
    %v6285 = vsel %vm5861, %v6284, %v6280
    %v6286 = vlaneseq
    %v6287 = vshrl.u32 %v6286, 7
    %v6288 = vsub.s32 %v5863, %v6287
    %v6289 = vrot.slane %v5676, %v6288
    %v6290 = vsel %vm5868, %v6289, %v6285
    %v6291 = vlaneseq
    %v6292 = vshrl.u32 %v6291, 7
    %v6293 = vsub.s32 %v5870, %v6292
    %v6294 = vrot.slane %v5677, %v6293
    %v6295 = vsel %vm5875, %v6294, %v6290
    %v6296 = vlaneseq
    %v6297 = vshrl.u32 %v6296, 7
    %v6298 = vsub.s32 %v5877, %v6297
    %v6299 = vrot.slane %v5678, %v6298
    %v6300 = vsel %vm5882, %v6299, %v6295
    %v6301 = vlaneseq
    %v6302 = vshrl.u32 %v6301, 7
    %v6303 = vsub.s32 %v5884, %v6302
    %v6304 = vrot.slane %v5679, %v6303
    %v6305 = vsel %vm5889, %v6304, %v6300
    %v6306 = vlaneseq
    %v6307 = vshrl.u32 %v6306, 7
    %v6308 = vsub.s32 %v5891, %v6307
    %v6309 = vrot.slane %v5680, %v6308
    %v6310 = vsel %vm5896, %v6309, %v6305
    %v6311 = vlaneseq
    %v6312 = vshrl.u32 %v6311, 7
    %v6313 = vsub.s32 %v5898, %v6312
    %v6314 = vrot.slane %v5681, %v6313
    %v6315 = vsel %vm5903, %v6314, %v6310
    %v6316 = vlaneseq
    %v6317 = vshrl.u32 %v6316, 7
    %v6318 = vsub.s32 %v5905, %v6317
    %v6319 = vrot.slane %v5682, %v6318
    %v6320 = vsel %vm5910, %v6319, %v6315
    %v6321 = vlaneseq
    %v6322 = vshrl.u32 %v6321, 7
    %v6323 = vsub.s32 %v5912, %v6322
    %v6324 = vrot.slane %v5683, %v6323
    %v6325 = vsel %vm5917, %v6324, %v6320
    %v6326 = vlaneseq
    %v6327 = vshrl.u32 %v6326, 7
    %v6328 = vsub.s32 %v5919, %v6327
    %v6329 = vrot.slane %v5684, %v6328
    %v6330 = vsel %vm5924, %v6329, %v6325
    %v6331 = vlaneseq
    %v6332 = vshrl.u32 %v6331, 7
    %v6333 = vsub.s32 %v5926, %v6332
    %v6334 = vrot.slane %v5685, %v6333
    %v6335 = vsel %vm5931, %v6334, %v6330
    %v6336 = vlaneseq
    %v6337 = vshrl.u32 %v6336, 7
    %v6338 = vsub.s32 %v5933, %v6337
    %v6339 = vrot.slane %v5686, %v6338
    %v6340 = vsel %vm5938, %v6339, %v6335
    %v6341 = vlaneseq
    %v6342 = vshrl.u32 %v6341, 7
    %v6343 = vsub.s32 %v5940, %v6342
    %v6344 = vrot.slane %v5687, %v6343
    %v6345 = vsel %vm5945, %v6344, %v6340
    %v6346 = vlaneseq
    %v6347 = vshrl.u32 %v6346, 7
    %v6348 = vsub.s32 %v5947, %v6347
    %v6349 = vrot.slane %v5688, %v6348
    %v6350 = vsel %vm5952, %v6349, %v6345
    %v6351 = vlaneseq
    %v6352 = vshrl.u32 %v6351, 7
    %v6353 = vsub.s32 %v5954, %v6352
    %v6354 = vrot.slane %v5689, %v6353
    %v6355 = vsel %vm5959, %v6354, %v6350
    %v6356 = vlaneseq
    %v6357 = vshrl.u32 %v6356, 7
    %v6358 = vsub.s32 %v5851, %v6357
    %v6359 = vrot.slane %v5690, %v6358
    %v6360 = vlaneseq
    %v6361 = vshrl.u32 %v6360, 7
    %v6362 = vsub.s32 %v5856, %v6361
    %v6363 = vrot.slane %v5691, %v6362
    %v6364 = vsel %vm5861, %v6363, %v6359
    %v6365 = vlaneseq
    %v6366 = vshrl.u32 %v6365, 7
    %v6367 = vsub.s32 %v5863, %v6366
    %v6368 = vrot.slane %v5692, %v6367
    %v6369 = vsel %vm5868, %v6368, %v6364
    %v6370 = vlaneseq
    %v6371 = vshrl.u32 %v6370, 7
    %v6372 = vsub.s32 %v5870, %v6371
    %v6373 = vrot.slane %v5693, %v6372
    %v6374 = vsel %vm5875, %v6373, %v6369
    %v6375 = vlaneseq
    %v6376 = vshrl.u32 %v6375, 7
    %v6377 = vsub.s32 %v5877, %v6376
    %v6378 = vrot.slane %v5694, %v6377
    %v6379 = vsel %vm5882, %v6378, %v6374
    %v6380 = vlaneseq
    %v6381 = vshrl.u32 %v6380, 7
    %v6382 = vsub.s32 %v5884, %v6381
    %v6383 = vrot.slane %v5695, %v6382
    %v6384 = vsel %vm5889, %v6383, %v6379
    %v6385 = vlaneseq
    %v6386 = vshrl.u32 %v6385, 7
    %v6387 = vsub.s32 %v5891, %v6386
    %v6388 = vrot.slane %v5696, %v6387
    %v6389 = vsel %vm5896, %v6388, %v6384
    %v6390 = vlaneseq
    %v6391 = vshrl.u32 %v6390, 7
    %v6392 = vsub.s32 %v5898, %v6391
    %v6393 = vrot.slane %v5697, %v6392
    %v6394 = vsel %vm5903, %v6393, %v6389
    %v6395 = vlaneseq
    %v6396 = vshrl.u32 %v6395, 7
    %v6397 = vsub.s32 %v5905, %v6396
    %v6398 = vrot.slane %v5698, %v6397
    %v6399 = vsel %vm5910, %v6398, %v6394
    %v6400 = vlaneseq
    %v6401 = vshrl.u32 %v6400, 7
    %v6402 = vsub.s32 %v5912, %v6401
    %v6403 = vrot.slane %v5699, %v6402
    %v6404 = vsel %vm5917, %v6403, %v6399
    %v6405 = vlaneseq
    %v6406 = vshrl.u32 %v6405, 7
    %v6407 = vsub.s32 %v5919, %v6406
    %v6408 = vrot.slane %v5700, %v6407
    %v6409 = vsel %vm5924, %v6408, %v6404
    %v6410 = vlaneseq
    %v6411 = vshrl.u32 %v6410, 7
    %v6412 = vsub.s32 %v5926, %v6411
    %v6413 = vrot.slane %v5701, %v6412
    %v6414 = vsel %vm5931, %v6413, %v6409
    %v6415 = vlaneseq
    %v6416 = vshrl.u32 %v6415, 7
    %v6417 = vsub.s32 %v5933, %v6416
    %v6418 = vrot.slane %v5702, %v6417
    %v6419 = vsel %vm5938, %v6418, %v6414
    %v6420 = vlaneseq
    %v6421 = vshrl.u32 %v6420, 7
    %v6422 = vsub.s32 %v5940, %v6421
    %v6423 = vrot.slane %v5703, %v6422
    %v6424 = vsel %vm5945, %v6423, %v6419
    %v6425 = vlaneseq
    %v6426 = vshrl.u32 %v6425, 7
    %v6427 = vsub.s32 %v5947, %v6426
    %v6428 = vrot.slane %v5704, %v6427
    %v6429 = vsel %vm5952, %v6428, %v6424
    %v6430 = vlaneseq
    %v6431 = vshrl.u32 %v6430, 7
    %v6432 = vsub.s32 %v5954, %v6431
    %v6433 = vrot.slane %v5705, %v6432
    %v6434 = vsel %vm5959, %v6433, %v6429
    %v6435 = vlaneseq
    %v6436 = vshrl.u32 %v6435, 7
    %v6437 = vsub.s32 %v5851, %v6436
    %v6438 = vrot.slane %v5706, %v6437
    %v6439 = vlaneseq
    %v6440 = vshrl.u32 %v6439, 7
    %v6441 = vsub.s32 %v5856, %v6440
    %v6442 = vrot.slane %v5707, %v6441
    %v6443 = vsel %vm5861, %v6442, %v6438
    %v6444 = vlaneseq
    %v6445 = vshrl.u32 %v6444, 7
    %v6446 = vsub.s32 %v5863, %v6445
    %v6447 = vrot.slane %v5708, %v6446
    %v6448 = vsel %vm5868, %v6447, %v6443
    %v6449 = vlaneseq
    %v6450 = vshrl.u32 %v6449, 7
    %v6451 = vsub.s32 %v5870, %v6450
    %v6452 = vrot.slane %v5709, %v6451
    %v6453 = vsel %vm5875, %v6452, %v6448
    %v6454 = vlaneseq
    %v6455 = vshrl.u32 %v6454, 7
    %v6456 = vsub.s32 %v5877, %v6455
    %v6457 = vrot.slane %v5710, %v6456
    %v6458 = vsel %vm5882, %v6457, %v6453
    %v6459 = vlaneseq
    %v6460 = vshrl.u32 %v6459, 7
    %v6461 = vsub.s32 %v5884, %v6460
    %v6462 = vrot.slane %v5711, %v6461
    %v6463 = vsel %vm5889, %v6462, %v6458
    %v6464 = vlaneseq
    %v6465 = vshrl.u32 %v6464, 7
    %v6466 = vsub.s32 %v5891, %v6465
    %v6467 = vrot.slane %v5712, %v6466
    %v6468 = vsel %vm5896, %v6467, %v6463
    %v6469 = vlaneseq
    %v6470 = vshrl.u32 %v6469, 7
    %v6471 = vsub.s32 %v5898, %v6470
    %v6472 = vrot.slane %v5713, %v6471
    %v6473 = vsel %vm5903, %v6472, %v6468
    %v6474 = vlaneseq
    %v6475 = vshrl.u32 %v6474, 7
    %v6476 = vsub.s32 %v5905, %v6475
    %v6477 = vrot.slane %v5714, %v6476
    %v6478 = vsel %vm5910, %v6477, %v6473
    %v6479 = vlaneseq
    %v6480 = vshrl.u32 %v6479, 7
    %v6481 = vsub.s32 %v5912, %v6480
    %v6482 = vrot.slane %v5715, %v6481
    %v6483 = vsel %vm5917, %v6482, %v6478
    %v6484 = vlaneseq
    %v6485 = vshrl.u32 %v6484, 7
    %v6486 = vsub.s32 %v5919, %v6485
    %v6487 = vrot.slane %v5716, %v6486
    %v6488 = vsel %vm5924, %v6487, %v6483
    %v6489 = vlaneseq
    %v6490 = vshrl.u32 %v6489, 7
    %v6491 = vsub.s32 %v5926, %v6490
    %v6492 = vrot.slane %v5717, %v6491
    %v6493 = vsel %vm5931, %v6492, %v6488
    %v6494 = vlaneseq
    %v6495 = vshrl.u32 %v6494, 7
    %v6496 = vsub.s32 %v5933, %v6495
    %v6497 = vrot.slane %v5718, %v6496
    %v6498 = vsel %vm5938, %v6497, %v6493
    %v6499 = vlaneseq
    %v6500 = vshrl.u32 %v6499, 7
    %v6501 = vsub.s32 %v5940, %v6500
    %v6502 = vrot.slane %v5719, %v6501
    %v6503 = vsel %vm5945, %v6502, %v6498
    %v6504 = vlaneseq
    %v6505 = vshrl.u32 %v6504, 7
    %v6506 = vsub.s32 %v5947, %v6505
    %v6507 = vrot.slane %v5720, %v6506
    %v6508 = vsel %vm5952, %v6507, %v6503
    %v6509 = vlaneseq
    %v6510 = vshrl.u32 %v6509, 7
    %v6511 = vsub.s32 %v5954, %v6510
    %v6512 = vrot.slane %v5721, %v6511
    %v6513 = vsel %vm5959, %v6512, %v6508
    %vm6514 = vcmask 1041409
    %v6515 = vsel %vm6514, %v6039, %v5960
    %vm6516 = vcmask 1042434
    %v6517 = vsel %vm6516, %v6118, %v6515
    %vm6518 = vcmask 1043459
    %v6519 = vsel %vm6518, %v6197, %v6517
    %vm6520 = vcmask 1044484
    %v6521 = vsel %vm6520, %v6276, %v6519
    %vm6522 = vcmask 1045509
    %v6523 = vsel %vm6522, %v6355, %v6521
    %vm6524 = vcmask 1046534
    %v6525 = vsel %vm6524, %v6434, %v6523
    %vm6526 = vcmask 1047559
    %v6527 = vsel %vm6526, %v6513, %v6525
    %6529 = vst [vmem:[#allocation3] sm:$0xff] %v6527
    // Predicated region
    $region54: #{tpu_custom_call.1} parent=1 // pred_check
      _
    $region55: #{tpu_custom_call.1} parent=1 // pred_check_branch
      %6531 = sbr.rel (0) target = $region57
    $region56: #{tpu_custom_call.1} parent=1 // pred_region
      %s6533 = ssub.s32 128, 128
      %6534 = vsyncadd [#allocation4], %s6533
      %s6536 = sshll.u32 [#allocation3], 4
      %s6537 = int_to_ptr.vmem [resolvable:$true] %s6536
      %6539 = dma.vmem_to_hbm [thread:$0]  %s6537, 128, %s13, [#allocation4]
    $region57: #{tpu_custom_call.1} parent=1 // pred_fallthru
      _
    // Predicated region
    $region58: #{tpu_custom_call.1} parent=1 // pred_check
      _
    $region59: #{tpu_custom_call.1} parent=1 // pred_check_branch
      %6541 = sbr.rel (0) target = $region61
    $region60: #{tpu_custom_call.1} parent=1 // pred_region
      %6542 = dma.done [#allocation4], 128
    $region61: #{tpu_custom_call.1} parent=1 // pred_fallthru
      _
    %6543 = vsyncpa [#allocation4], 1

</llo_original>
